<compile_context>
chip_gen: v6e
topology: v6e:2x2x1
jax: 0.10.0
libtpu: 0.0.40
codegen_flags: <defaults>
</compile_context>

<pallas_src>
import jax
import jax.numpy as jnp
from jax import lax
from jax.experimental import pallas as pl
from jax.experimental.pallas import tpu as pltpu


# ---------------------------------------------------------------------------
# Kernels
# ---------------------------------------------------------------------------
def _linear_kernel_direct(x_ref, w_ref, b_ref, o_ref):
    """f32 output: accumulate straight into the resident output block.

    Blocks: x (tm, tk), w (tn, tk)  [weight kept as (N, K)], b (1, tn),
            o (tm, tn) f32, resident across the K grid axis.
    """
    @pl.when(pl.program_id(2) == 0)
    def _init():
        o_ref[...] = jnp.broadcast_to(b_ref[...], o_ref.shape).astype(o_ref.dtype)

    o_ref[...] += lax.dot_general(
        x_ref[...], w_ref[...],
        dimension_numbers=(((1,), (1,)), ((), ())),   # x @ w.T on VMEM tiles
        preferred_element_type=jnp.float32)


def _linear_kernel_acc(x_ref, w_ref, b_ref, o_ref, acc_ref):
    """Narrow output dtypes: f32 VMEM accumulator, cast on the last K step."""
    @pl.when(pl.program_id(2) == 0)
    def _init():
        acc_ref[...] = jnp.zeros_like(acc_ref)

    acc_ref[...] += lax.dot_general(
        x_ref[...], w_ref[...],
        dimension_numbers=(((1,), (1,)), ((), ())),
        preferred_element_type=jnp.float32)

    @pl.when(pl.program_id(2) == pl.num_programs(2) - 1)
    def _finalize():
        o_ref[...] = (acc_ref[...] + b_ref[...].astype(jnp.float32)).astype(o_ref.dtype)


# ---------------------------------------------------------------------------
# Wrapper
# ---------------------------------------------------------------------------
def _round_up(n: int, m: int) -> int:
    return ((n + m - 1) // m) * m


def linear_head_forward(x, weight, bias, *,
                        tm_max=256, tn_max=512, tk_max=1024,
                        compute_dtype=None,
                        vmem_cap_bytes=32 * 1024 * 1024):
    """Eval-mode LinearHead forward: x @ weight.T + bias (Pallas TPU kernel).

    x: (M, K), weight: (N, K) [torch nn.Linear layout], bias: (N,).
    compute_dtype: optionally cast x/weight tiles (e.g. jnp.bfloat16) to halve
    the HBM weight stream on v6e/v7x; accumulation is always f32.
    """
    M, K = x.shape
    N, K2 = weight.shape
    assert K == K2 and bias.shape == (N,)
    out_dtype = x.dtype

    # Tiny problems: a single, heavily padded grid step is pure pallas_call /
    # DMA overhead — XLA's fused dot is as fast and avoids padding copies.
    if M * K + N * K <= 16384:
        return (x @ weight.T + bias).astype(out_dtype)

    # --- Tile selection -----------------------------------------------------
    # Full-extent blocks when a dim fits in one tile (legal even if not
    # (8,128)-aligned → no pad / no output slice); otherwise lane/sublane
    # aligned tiles with zero-padding (zeros contribute nothing to the matmul).
    if M <= tm_max:
        tm, Mp = M, M
    else:
        tm, Mp = tm_max, _round_up(M, tm_max)          # tm_max multiple of 8
    if N <= tn_max:
        tn, Np = N, N
    else:
        tn, Np = tn_max, _round_up(N, tn_max)          # tn_max multiple of 128
    if K <= tk_max:
        tk, Kp = K, K
    else:
        tk, Kp = tk_max, _round_up(K, tk_max)          # tk_max multiple of 128

    xp = x if (Mp, Kp) == (M, K) else jnp.pad(x, ((0, Mp - M), (0, Kp - K)))
    wp = weight if (Np, Kp) == (N, K) else jnp.pad(weight, ((0, Np - N), (0, Kp - K)))
    b2 = bias.reshape(1, N)
    b2p = b2 if Np == N else jnp.pad(b2, ((0, 0), (0, Np - N)))

    if compute_dtype is not None:
        xp = xp.astype(compute_dtype)
        wp = wp.astype(compute_dtype)

    grid = (Mp // tm, Np // tn, Kp // tk)

    direct = jnp.dtype(out_dtype) == jnp.dtype(jnp.float32)
    kernel = _linear_kernel_direct if direct else _linear_kernel_acc
    scratch_shapes = [] if direct else [pltpu.VMEM((tm, tn), jnp.float32)]

    # VMEM budget: double-buffered inputs + double-buffered output (+ scratch),
    # with headroom, capped so it also fits v7x's smaller scoped VMEM.
    in_itm = jnp.dtype(xp.dtype).itemsize
    out_itm = jnp.dtype(out_dtype).itemsize
    step_bytes = (2 * (tm * tk + tn * tk) * in_itm    # x / W tiles, double-buffered
                  + 2 * tn * 4                        # bias tile
                  + 2 * tm * tn * out_itm             # output tile
                  + (0 if direct else tm * tn * 4))   # f32 accumulator
    vmem_limit = int(min(max(2 * step_bytes, 16 * 1024 * 1024), vmem_cap_bytes))

    cost = pl.CostEstimate(
        flops=2 * M * N * K,
        bytes_accessed=in_itm * (M * K + N * K) + 4 * N + out_itm * M * N,
        transcendentals=0)

    out = pl.pallas_call(
        kernel,
        out_shape=jax.ShapeDtypeStruct((Mp, Np), out_dtype),
        grid=grid,
        in_specs=[
            pl.BlockSpec((tm, tk), lambda i, j, k: (i, k)),   # x        (M, K)
            pl.BlockSpec((tn, tk), lambda i, j, k: (j, k)),   # weight   (N, K), no transpose
            pl.BlockSpec((1, tn), lambda i, j, k: (0, j)),    # bias     (1, N)
        ],
        out_specs=pl.BlockSpec((tm, tn), lambda i, j, k: (i, j)),
        scratch_shapes=scratch_shapes,
        compiler_params=pltpu.CompilerParams(
            dimension_semantics=("parallel", "parallel", "arbitrary"),
            vmem_limit_bytes=vmem_limit),
        cost_estimate=cost,
    )(xp, wp, b2p)

    if (Mp, Np) != (M, N):
        out = out[:M, :N]
    return out


def linear_head_reference(x, weight, bias):
    # Eval-mode reference: dropout is identity, so the mean of 5 identical
    # logits is just classifier(x).  HIGHEST precision → full-f32 reference.
    return jnp.dot(x, weight.T, precision=lax.Precision.HIGHEST) + bias


if __name__ == "__main__":
    key = jax.random.PRNGKey(0)
    kx, kw, kb = jax.random.split(key, 3)

    # Small but lane/MXU-aligned shapes so the Pallas path is exercised with
    # zero padding and a multi-step K reduction (grid = (1, 1, 2)).
    batch, input_dim, output_dim = 256, 2048, 512
    x = jax.random.normal(kx, (batch, input_dim), dtype=jnp.float32)

    # glorot_uniform init of the classifier weight, small uniform bias.
    limit = (6.0 / (input_dim + output_dim)) ** 0.5
    weight = jax.random.uniform(kw, (output_dim, input_dim), jnp.float32,
                                -limit, limit)
    bias = jax.random.uniform(kb, (output_dim,), jnp.float32, -0.1, 0.1)

    out = jax.block_until_ready(linear_head_forward(x, weight, bias))

    ref = linear_head_reference(x, weight, bias)
    assert out.shape == (batch, output_dim)
    # Loose tolerance only to cover possible reduced-precision MXU passes for
    # f32 inputs; observed error is typically << 1e-4.
    assert jnp.allclose(out, ref, atol=2e-2, rtol=2e-2), "mismatch vs reference"

    print("KERNEL_OK")
</pallas_src>

<mosaic_0001>
module attributes {stable_mosaic.version = 11 : i64} {
  func.func @_linear_kernel_direct(%arg0: i32, %arg1: i32, %arg2: i32, %arg3: memref<256x1024xf32, #tpu.memory_space<vmem>>, %arg4: memref<512x1024xf32, #tpu.memory_space<vmem>>, %arg5: memref<1x512xf32, #tpu.memory_space<vmem>>, %arg6: memref<256x512xf32, #tpu.memory_space<vmem>>) attributes {dimension_semantics = [#tpu.dimension_semantics<parallel>, #tpu.dimension_semantics<parallel>, #tpu.dimension_semantics<arbitrary>], iteration_bounds = array<i64: 1, 1, 2>, scalar_prefetch = 0 : i64, scratch_operands = 0 : i64, tpu.core_type = #tpu.core_type<tc>, window_params = [{transform_indices = @transform_0, window_bounds = array<i64: 256, 1024>}, {transform_indices = @transform_1, window_bounds = array<i64: 512, 1024>}, {transform_indices = @transform_2, window_bounds = array<i64: 1, 512>}, {transform_indices = @transform_3, window_bounds = array<i64: 256, 512>}]} {
    %c0_i32 = arith.constant 0 : i32
    %0 = arith.cmpi eq, %arg2, %c0_i32 : i32
    %1 = arith.extui %0 : i1 to i32
    %c0_i32_0 = arith.constant 0 : i32
    %2 = arith.cmpi ne, %1, %c0_i32_0 : i32
    scf.if %2 {
      %c0_8 = arith.constant 0 : index
      %c0_9 = arith.constant 0 : index
      %9 = vector.load %arg5[%c0_8, %c0_9] : memref<1x512xf32, #tpu.memory_space<vmem>>, vector<1x512xf32>
      %10 = vector.shape_cast %9 : vector<1x512xf32> to vector<1x512xf32>
      %11 = vector.broadcast %10 : vector<1x512xf32> to vector<256x512xf32>
      %c0_10 = arith.constant 0 : index
      %c0_11 = arith.constant 0 : index
      %12 = vector.load %arg6[%c0_10, %c0_11] : memref<256x512xf32, #tpu.memory_space<vmem>>, vector<256x512xf32>
      tpu.vector_store %arg6[%c0_10, %c0_11], %11 {strides = array<i32>} : memref<256x512xf32, #tpu.memory_space<vmem>>, vector<256x512xf32>,
    } else {
    }
    %c0 = arith.constant 0 : index
    %c0_1 = arith.constant 0 : index
    %3 = vector.load %arg6[%c0, %c0_1] : memref<256x512xf32, #tpu.memory_space<vmem>>, vector<256x512xf32>
    %c0_2 = arith.constant 0 : index
    %c0_3 = arith.constant 0 : index
    %4 = vector.load %arg3[%c0_2, %c0_3] : memref<256x1024xf32, #tpu.memory_space<vmem>>, vector<256x1024xf32>
    %c0_4 = arith.constant 0 : index
    %c0_5 = arith.constant 0 : index
    %5 = vector.load %arg4[%c0_4, %c0_5] : memref<512x1024xf32, #tpu.memory_space<vmem>>, vector<512x1024xf32>
    %cst = arith.constant dense<0.000000e+00> : vector<256x512xf32>
    %6 = tpu.matmul %4, %5, %cst {dimension_numbers = #tpu.dot_dimension_numbers<[1], [1], [0], [0], [0, 0, 1, 0], [], []>} : vector<256x1024xf32>, vector<512x1024xf32>, vector<256x512xf32> -> vector<256x512xf32>
    %7 = arith.addf %3, %6 : vector<256x512xf32>
    %c0_6 = arith.constant 0 : index
    %c0_7 = arith.constant 0 : index
    %8 = vector.load %arg6[%c0_6, %c0_7] : memref<256x512xf32, #tpu.memory_space<vmem>>, vector<256x512xf32>
    tpu.vector_store %arg6[%c0_6, %c0_7], %7 {strides = array<i32>} : memref<256x512xf32, #tpu.memory_space<vmem>>, vector<256x512xf32>,
    return
  }
  func.func @transform_0(%arg0: i32, %arg1: i32, %arg2: i32) -> (i32, i32) {
    %c0_i32 = arith.constant 0 : i32
    return %arg0, %arg2 : i32, i32
  }
  func.func @transform_1(%arg0: i32, %arg1: i32, %arg2: i32) -> (i32, i32) {
    %c0_i32 = arith.constant 0 : i32
    return %arg1, %arg2 : i32, i32
  }
  func.func @transform_2(%arg0: i32, %arg1: i32, %arg2: i32) -> (i32, i32) {
    %c0_i32 = arith.constant 0 : i32
    %c0_i32_0 = arith.constant 0 : i32
    return %c0_i32, %arg1 : i32, i32
  }
  func.func @transform_3(%arg0: i32, %arg1: i32, %arg2: i32) -> (i32, i32) {
    %c0_i32 = arith.constant 0 : i32
    return %arg0, %arg1 : i32, i32
  }
}

</mosaic_0001>

<llo_original>
// kernel: tpu_custom_call.1
$region0: #{tpu_custom_call.1}
  #allocation0 [shape = 'u32[]', space=smem, size = 0x4, offset = 0x4, fixed_abs, tag = 'smem constant byte address 0x4 - core index']
  #allocation1 [shape = 'u32[144,128]{1,0:T(1,128)}', space=vmem, size = 0x12000, scoped, tag = 'internal scratch']
  %s0 = inlined_call_operand.hbm [shape: f32[256,2048], index: 0, kind: input, shape index: {}]
  %s1 = inlined_call_operand.hbm [shape: f32[512,2048], index: 1, kind: input, shape index: {}]
  %s2 = inlined_call_operand.hbm [shape: f32[1,512], index: 2, kind: input, shape index: {}]
  %s3 = inlined_call_operand.hbm [shape: f32[256,512], index: 3, kind: output, shape index: {}]
  %s4 = sld [smem:[#allocation0]]
  $region61: #{tpu_custom_call.1} parent=0
    _
  %s6 = ssub.s32 1, %s4
  %s7 = scalar_select 0, %s6, %s4
  $region1: #{tpu_custom_call.1} parent=0
    #allocation2 [shape = 'u8[2097152]{0}', space=vmem, size = 0x200000, scoped, tag = 'input window, operand 0']
    #allocation3 [shape = 's32[2]{0}', space=sflag, size = 0x8, scoped, tag = 'scoped memory for tpu_custom_call.1']
    #allocation4 [shape = 's32[2]{0}', space=sflag, size = 0x8, scoped, tag = 'scoped memory for tpu_custom_call.1']
    #allocation5 [shape = 'u8[4194304]{0}', space=vmem, size = 0x400000, scoped, tag = 'input window, operand 1']
    #allocation6 [shape = 's32[2]{0}', space=sflag, size = 0x8, scoped, tag = 'scoped memory for tpu_custom_call.1']
    #allocation7 [shape = 'u8[2048]{0}', space=vmem, size = 0x800, scoped, tag = 'input window, operand 2, single buffered']
    #allocation8 [shape = 'u8[524288]{0}', space=vmem, size = 0x80000, scoped, tag = 'output window, operand 0, single buffered']
    %8 = vsyncpa [#allocation3], 0
    %s9 = scalar_lea.sflag [#allocation3], 1
    %10 = vsyncpa %s9, 0
    %11 = vsyncpa [#allocation6], 0
    %s12 = scalar_lea.sflag [#allocation6], 1
    %13 = vsyncpa %s12, 0
    %14 = vsyncpa [#allocation4], 0
    loop: start=0, step=1, limit=4
    $region2: #{tpu_custom_call.1} parent=1 // loop_pre_header
      _
    $region3: #{tpu_custom_call.1} parent=1 // loop_header
      %s16 = sphi 0, %s20
      %p17 = scmp.ge.s32.totalorder %s16, 4
      %s23 = sphi 0, %s42
      %s24 = sphi 0, %s38
      %s25 = sphi 0, %s34
      %s26 = sphi 0, %s23
      %s27 = sphi 0, %s24
      %s28 = sphi 0, %s25
      %s29 = sphi 0, %s26
      %s30 = sphi 0, %s27
      %s31 = sphi 0, %s28
      %s47 = sphi 0, %s49
      %s50 = sphi 0, %s47
      %s51 = sphi 0, %s50
      %s67 = sphi 0, %s51
      %s75 = sphi 0, %s77
      %s78 = sphi 0, %s75
      %s79 = sphi 0, %s78
      %s95 = sphi 0, %s79
      %s101 = sphi 0, %s103
      %s104 = sphi 0, %s101
      %s105 = sphi 0, %s104
      %s121 = sphi 0, %s105
      %s129 = sphi 0, %s131
      %s132 = sphi 0, %s129
      %s133 = sphi 0, %s132
      %s149 = sphi 0, %s133
    $region4: #{tpu_custom_call.1} parent=1 // loop_header_branch
      %19 = sbr.rel (%p17) target = $region8
    $region5: #{tpu_custom_call.1} parent=1 // loop_body
      %s21 = ssub.s32 %s16, 1
      %s22 = ssub.s32 %s16, 2
      %s32 = sadd.s32 1, %s25
      %p33 = scmp.ge.s32.totalorder %s32, 2
      %s34 = scalar_select %p33, 0, %s32
      %s35 = sadd.s32 1, %s24
      %s36 = scalar_select %p33, %s35, %s24
      %p37 = scmp.ge.s32.totalorder %s36, 1
      %s38 = scalar_select %p37, 0, %s36
      %s39 = sadd.s32 1, %s23
      %s40 = scalar_select %p37, %s39, %s23
      %p41 = scmp.ge.s32.totalorder %s40, 1
      %s42 = scalar_select %p41, 0, %s40
      %s43 = ssub.s32 %s23, %s42
      %s44 = ssub.s32 %s25, %s34
      %s45 = sor.u32 %s43, %s44
      %p46 = scmp.eq.s32.totalorder %s45, 0
      %s48 = sadd.s32 %s47, 1
      %s49 = scalar_select %p46, %s47, %s48
      %p52 = pneg %p46
      %p53 = scmp.eq.s32.totalorder %s16, 1
      %p54 = por %p52, %p53
      %p55 = scmp.ne.s32.totalorder %s47, %s50
      %p56 = scmp.eq.s32.totalorder %s16, 0
      %p57 = por %p55, %p56
      %p58 = scmp.ne.s32.totalorder %s47, %s50
      %p59 = scmp.eq.s32.totalorder %s21, 1
      %p60 = por %p58, %p59
      %p61 = scmp.ne.s32.totalorder %s50, %s51
      %p62 = scmp.eq.s32.totalorder %s21, 0
      %p63 = por %p61, %p62
      %p64 = scmp.ne.s32.totalorder %s50, %s51
      %p65 = scmp.eq.s32.totalorder %s22, 1
      %p66 = por %p64, %p65
      %p68 = scmp.ne.s32.totalorder %s51, %s67
      %p69 = scmp.eq.s32.totalorder %s22, 0
      %p70 = por %p68, %p69
      %s71 = ssub.s32 %s24, %s38
      %s72 = ssub.s32 %s25, %s34
      %s73 = sor.u32 %s71, %s72
      %p74 = scmp.eq.s32.totalorder %s73, 0
      %s76 = sadd.s32 %s75, 1
      %s77 = scalar_select %p74, %s75, %s76
      %p80 = pneg %p74
      %p81 = scmp.eq.s32.totalorder %s16, 1
      %p82 = por %p80, %p81
      %p83 = scmp.ne.s32.totalorder %s75, %s78
      %p84 = scmp.eq.s32.totalorder %s16, 0
      %p85 = por %p83, %p84
      %p86 = scmp.ne.s32.totalorder %s75, %s78
      %p87 = scmp.eq.s32.totalorder %s21, 1
      %p88 = por %p86, %p87
      %p89 = scmp.ne.s32.totalorder %s78, %s79
      %p90 = scmp.eq.s32.totalorder %s21, 0
      %p91 = por %p89, %p90
      %p92 = scmp.ne.s32.totalorder %s78, %s79
      %p93 = scmp.eq.s32.totalorder %s22, 1
      %p94 = por %p92, %p93
      %p96 = scmp.ne.s32.totalorder %s79, %s95
      %p97 = scmp.eq.s32.totalorder %s22, 0
      %p98 = por %p96, %p97
      %s99 = ssub.s32 %s24, %s38
      %p100 = scmp.eq.s32.totalorder %s99, 0
      %s102 = sadd.s32 %s101, 1
      %s103 = scalar_select %p100, %s101, %s102
      %p106 = pneg %p100
      %p107 = scmp.eq.s32.totalorder %s16, 1
      %p108 = por %p106, %p107
      %p109 = scmp.ne.s32.totalorder %s101, %s104
      %p110 = scmp.eq.s32.totalorder %s16, 0
      %p111 = por %p109, %p110
      %p112 = scmp.ne.s32.totalorder %s101, %s104
      %p113 = scmp.eq.s32.totalorder %s21, 1
      %p114 = por %p112, %p113
      %p115 = scmp.ne.s32.totalorder %s104, %s105
      %p116 = scmp.eq.s32.totalorder %s21, 0
      %p117 = por %p115, %p116
      %p118 = scmp.ne.s32.totalorder %s104, %s105
      %p119 = scmp.eq.s32.totalorder %s22, 1
      %p120 = por %p118, %p119
      %p122 = scmp.ne.s32.totalorder %s105, %s121
      %p123 = scmp.eq.s32.totalorder %s22, 0
      %p124 = por %p122, %p123
      %s125 = ssub.s32 %s23, %s42
      %s126 = ssub.s32 %s24, %s38
      %s127 = sor.u32 %s125, %s126
      %p128 = scmp.eq.s32.totalorder %s127, 0
      %s130 = sadd.s32 %s129, 1
      %s131 = scalar_select %p128, %s129, %s130
      %p134 = pneg %p128
      %p135 = scmp.eq.s32.totalorder %s16, 1
      %p136 = por %p134, %p135
      %p137 = scmp.ne.s32.totalorder %s129, %s132
      %p138 = scmp.eq.s32.totalorder %s16, 0
      %p139 = por %p137, %p138
      %p140 = scmp.ne.s32.totalorder %s129, %s132
      %p141 = scmp.eq.s32.totalorder %s21, 1
      %p142 = por %p140, %p141
      %p143 = scmp.ne.s32.totalorder %s132, %s133
      %p144 = scmp.eq.s32.totalorder %s21, 0
      %p145 = por %p143, %p144
      %p146 = scmp.ne.s32.totalorder %s132, %s133
      %p147 = scmp.eq.s32.totalorder %s22, 1
      %p148 = por %p146, %p147
      %p150 = scmp.ne.s32.totalorder %s133, %s149
      %p151 = scmp.eq.s32.totalorder %s22, 0
      %p152 = por %p150, %p151
      %p153 = scmp.le.s32.totalorder 1, %s16
      %p154 = scmp.lt.s32.totalorder %s16, 3
      %p155 = pnand %p153, %p154
      %p156 = pneg %p155
      // Predicated region
      $region9: #{tpu_custom_call.1} parent=5 // pred_check
        _
      $region10: #{tpu_custom_call.1} parent=5 // pred_check_branch
        %158 = sbr.rel (%p155) target = $region12
      $region11: #{tpu_custom_call.1} parent=5 // pred_region
        %s159 = ssub.s32 %s16, 1
        // Predicated region
        $region13: #{tpu_custom_call.1} parent=11 // pred_check
          %p160 = pneg %p117
        $region14: #{tpu_custom_call.1} parent=11 // pred_check_branch
          %162 = sbr.rel (%p160) target = $region16
        $region15: #{tpu_custom_call.1} parent=11 // pred_region
          %s163 = smul.u32 4, %s27
          %s165 = ssub.s32 64, 64
          %166 = vsyncadd [#allocation6], %s165
          %s167 = smul.addr %s163, 16
          %s168 = scalar_lea.hbm %s2, %s167
          %s170 = sshll.u32 [#allocation7], 4
          %s171 = int_to_ptr.vmem [resolvable:$true] %s170
          %173 = dma.hbm_to_vmem [thread:$0]  %s168, 64, %s171, [#allocation6]
        $region16: #{tpu_custom_call.1} parent=11 // pred_fallthru
          _
      $region12: #{tpu_custom_call.1} parent=5 // pred_fallthru
        _
      %p174 = scmp.lt.s32.totalorder %s16, 2
      // Predicated region
      $region17: #{tpu_custom_call.1} parent=5 // pred_check
        %p175 = pneg %p174
      $region18: #{tpu_custom_call.1} parent=5 // pred_check_branch
        %177 = sbr.rel (%p175) target = $region20
      $region19: #{tpu_custom_call.1} parent=5 // pred_region
        // Predicated region
        $region21: #{tpu_custom_call.1} parent=19 // pred_check
          %p178 = pneg %p57
        $region22: #{tpu_custom_call.1} parent=19 // pred_check_branch
          %180 = sbr.rel (%p178) target = $region24
        $region23: #{tpu_custom_call.1} parent=19 // pred_region
          %s181 = sand.u32 %s47, 1
          %s182 = scalar_lea.sflag [#allocation3], %s181
          %s183 = sand.u32 %s47, 1
          %s184 = smul.addr %s183, 2048
          %s185 = scalar_lea.vmem [#allocation2], %s184
          %s186 = smul.u32 32, %s23
          %s187 = smul.u32 8, %s25
          %s189 = ssub.s32 32768, 32768
          %190 = vsyncadd %s182, %s189
          %s191 = smul.addr %s186, 16
          %s192 = sadd.s32 %s187, %s191
          %s193 = smul.addr %s192, 128
          %s194 = scalar_lea.hbm %s0, %s193
          %s195 = sshll.u32 %s185, 4
          %s196 = int_to_ptr.vmem [resolvable:$true] %s195
          %201 = dma.hbm_to_vmem [thread:$0]  %s194, 32768, %s196, %s182, 2048, 1024, 64
        $region24: #{tpu_custom_call.1} parent=19 // pred_fallthru
          _
        // Predicated region
        $region25: #{tpu_custom_call.1} parent=19 // pred_check
          %p202 = pneg %p85
        $region26: #{tpu_custom_call.1} parent=19 // pred_check_branch
          %204 = sbr.rel (%p202) target = $region28
        $region27: #{tpu_custom_call.1} parent=19 // pred_region
          %s205 = sand.u32 %s16, 1
          %s206 = scalar_lea.sflag [#allocation6], %s205
          %s207 = sand.u32 %s75, 1
          %s208 = smul.addr %s207, 4096
          %s209 = scalar_lea.vmem [#allocation5], %s208
          %s210 = smul.u32 64, %s24
          %s211 = smul.u32 8, %s25
          %s213 = ssub.s32 65536, 65536
          %214 = vsyncadd %s206, %s213
          %s215 = smul.addr %s210, 16
          %s216 = sadd.s32 %s211, %s215
          %s217 = smul.addr %s216, 128
          %s218 = scalar_lea.hbm %s1, %s217
          %s219 = sshll.u32 %s209, 4
          %s220 = int_to_ptr.vmem [resolvable:$true] %s219
          %225 = dma.hbm_to_vmem [thread:$0]  %s218, 65536, %s220, %s206, 2048, 1024, 64
        $region28: #{tpu_custom_call.1} parent=19 // pred_fallthru
          _
      $region20: #{tpu_custom_call.1} parent=5 // pred_fallthru
        _
      %p226 = scmp.le.s32.totalorder 1, %s16
      %p227 = scmp.lt.s32.totalorder %s16, 3
      %p228 = pnand %p226, %p227
      %p229 = pneg %p228
      // Predicated region
      $region29: #{tpu_custom_call.1} parent=5 // pred_check
        _
      $region30: #{tpu_custom_call.1} parent=5 // pred_check_branch
        %231 = sbr.rel (%p228) target = $region32
      $region31: #{tpu_custom_call.1} parent=5 // pred_region
        %s232 = ssub.s32 %s16, 1
        %s233 = sand.u32 %s50, 1
        %s234 = scalar_lea.sflag [#allocation3], %s233
        %s235 = sand.u32 %s50, 1
        %s236 = smul.addr %s235, 2048
        %s237 = scalar_lea.vmem [#allocation2], %s236
        // Predicated region
        $region33: #{tpu_custom_call.1} parent=31 // pred_check
          %p238 = pneg %p63
        $region34: #{tpu_custom_call.1} parent=31 // pred_check_branch
          %240 = sbr.rel (%p238) target = $region36
        $region35: #{tpu_custom_call.1} parent=31 // pred_region
          %241 = dma.done %s234, 32768
        $region36: #{tpu_custom_call.1} parent=31 // pred_fallthru
          _
        %s242 = sand.u32 %s21, 1
        %s243 = scalar_lea.sflag [#allocation6], %s242
        %s244 = sand.u32 %s78, 1
        %s245 = smul.addr %s244, 4096
        %s246 = scalar_lea.vmem [#allocation5], %s245
        // Predicated region
        $region37: #{tpu_custom_call.1} parent=31 // pred_check
          %p247 = pneg %p91
        $region38: #{tpu_custom_call.1} parent=31 // pred_check_branch
          %249 = sbr.rel (%p247) target = $region40
        $region39: #{tpu_custom_call.1} parent=31 // pred_region
          %250 = dma.done %s243, 65536
        $region40: #{tpu_custom_call.1} parent=31 // pred_fallthru
          _
        // Predicated region
        $region41: #{tpu_custom_call.1} parent=31 // pred_check
          %p251 = pneg %p117
        $region42: #{tpu_custom_call.1} parent=31 // pred_check_branch
          %253 = sbr.rel (%p251) target = $region44
        $region43: #{tpu_custom_call.1} parent=31 // pred_region
          %254 = dma.done [#allocation6], 64
        $region44: #{tpu_custom_call.1} parent=31 // pred_fallthru
          _
        %s255 = sand.u32 %s50, 1
        %s256 = scalar_lea.sflag [#allocation3], %s255
        %s257 = sand.u32 %s50, 1
        %s258 = smul.addr %s257, 2048
        %s259 = scalar_lea.vmem [#allocation2], %s258
        %p260 = pneg %p63
        %p261 = pneg %p60
        %s262 = sand.u32 %s21, 1
        %s263 = scalar_lea.sflag [#allocation6], %s262
        %s264 = sand.u32 %s78, 1
        %s265 = smul.addr %s264, 4096
        %s266 = scalar_lea.vmem [#allocation5], %s265
        %p267 = pneg %p91
        %p268 = pneg %p88
        %p269 = pneg %p117
        %p270 = pneg %p114
        %p271 = pneg %p145
        %p272 = pneg %p142
        %s273 = smul.u32 32, %s26
        %s274 = smul.u32 8, %s28
        %s275 = smul.u32 64, %s27
        %s276 = smul.u32 8, %s28
        %s277 = smul.u32 4, %s27
        %s278 = smul.u32 32, %s26
        %s279 = smul.u32 4, %s27
        %p280 = scmp.eq.s32.totalorder %s28, 0
        // Predicated region
        $region45: #{tpu_custom_call.1} parent=31 // pred_check
          %p281 = pneg %p280
        $region46: #{tpu_custom_call.1} parent=31 // pred_check_branch
          %283 = sbr.rel (%p281) target = $region48
        $region47: #{tpu_custom_call.1} parent=31 // pred_region
          %v284 = vld [vmem:[#allocation7] sm:$0xf]
          %v286 = vlaneseq
          %v287 = vshrl.u32 %v286, 7
          %v288 = vsub.s32 0, %v287
          %v289 = vrot.slane %v284, %v288
          %v290 = vlaneseq
          %v291 = vshrl.u32 %v290, 7
          %v292 = vsub.s32 1, %v291
          %v293 = vrot.slane %v284, %v292
          %v294 = vlaneseq
          %v295 = vshrl.u32 %v294, 7
          %v296 = vsub.s32 2, %v295
          %v297 = vrot.slane %v284, %v296
          %v298 = vlaneseq
          %v299 = vshrl.u32 %v298, 7
          %v300 = vsub.s32 3, %v299
          %v301 = vrot.slane %v284, %v300
          %306 = vst [vmem:[#allocation8] sm:$0xff] %v289
          %307 = vst [vmem:[#allocation8 + $0x8] sm:$0xff] %v293
          %308 = vst [vmem:[#allocation8 + $0x10] sm:$0xff] %v297
          %309 = vst [vmem:[#allocation8 + $0x18] sm:$0xff] %v301
          %310 = vst [vmem:[#allocation8 + $0x20] sm:$0xff] %v289
          %311 = vst [vmem:[#allocation8 + $0x28] sm:$0xff] %v293
          %312 = vst [vmem:[#allocation8 + $0x30] sm:$0xff] %v297
          %313 = vst [vmem:[#allocation8 + $0x38] sm:$0xff] %v301
          %314 = vst [vmem:[#allocation8 + $0x40] sm:$0xff] %v289
          %315 = vst [vmem:[#allocation8 + $0x48] sm:$0xff] %v293
          %316 = vst [vmem:[#allocation8 + $0x50] sm:$0xff] %v297
          %317 = vst [vmem:[#allocation8 + $0x58] sm:$0xff] %v301
          %318 = vst [vmem:[#allocation8 + $0x60] sm:$0xff] %v289
          %319 = vst [vmem:[#allocation8 + $0x68] sm:$0xff] %v293
          %320 = vst [vmem:[#allocation8 + $0x70] sm:$0xff] %v297
          %321 = vst [vmem:[#allocation8 + $0x78] sm:$0xff] %v301
          %322 = vst [vmem:[#allocation8 + $0x80] sm:$0xff] %v289
          %323 = vst [vmem:[#allocation8 + $0x88] sm:$0xff] %v293
          %324 = vst [vmem:[#allocation8 + $0x90] sm:$0xff] %v297
          %325 = vst [vmem:[#allocation8 + $0x98] sm:$0xff] %v301
          %326 = vst [vmem:[#allocation8 + $0xa0] sm:$0xff] %v289
          %327 = vst [vmem:[#allocation8 + $0xa8] sm:$0xff] %v293
          %328 = vst [vmem:[#allocation8 + $0xb0] sm:$0xff] %v297
          %329 = vst [vmem:[#allocation8 + $0xb8] sm:$0xff] %v301
          %330 = vst [vmem:[#allocation8 + $0xc0] sm:$0xff] %v289
          %331 = vst [vmem:[#allocation8 + $0xc8] sm:$0xff] %v293
          %332 = vst [vmem:[#allocation8 + $0xd0] sm:$0xff] %v297
          %333 = vst [vmem:[#allocation8 + $0xd8] sm:$0xff] %v301
          %334 = vst [vmem:[#allocation8 + $0xe0] sm:$0xff] %v289
          %335 = vst [vmem:[#allocation8 + $0xe8] sm:$0xff] %v293
          %336 = vst [vmem:[#allocation8 + $0xf0] sm:$0xff] %v297
          %337 = vst [vmem:[#allocation8 + $0xf8] sm:$0xff] %v301
          %338 = vst [vmem:[#allocation8 + $0x100] sm:$0xff] %v289
          %339 = vst [vmem:[#allocation8 + $0x108] sm:$0xff] %v293
          %340 = vst [vmem:[#allocation8 + $0x110] sm:$0xff] %v297
          %341 = vst [vmem:[#allocation8 + $0x118] sm:$0xff] %v301
          %342 = vst [vmem:[#allocation8 + $0x120] sm:$0xff] %v289
          %343 = vst [vmem:[#allocation8 + $0x128] sm:$0xff] %v293
          %344 = vst [vmem:[#allocation8 + $0x130] sm:$0xff] %v297
          %345 = vst [vmem:[#allocation8 + $0x138] sm:$0xff] %v301
          %346 = vst [vmem:[#allocation8 + $0x140] sm:$0xff] %v289
          %347 = vst [vmem:[#allocation8 + $0x148] sm:$0xff] %v293
          %348 = vst [vmem:[#allocation8 + $0x150] sm:$0xff] %v297
          %349 = vst [vmem:[#allocation8 + $0x158] sm:$0xff] %v301
          %350 = vst [vmem:[#allocation8 + $0x160] sm:$0xff] %v289
          %351 = vst [vmem:[#allocation8 + $0x168] sm:$0xff] %v293
          %352 = vst [vmem:[#allocation8 + $0x170] sm:$0xff] %v297
          %353 = vst [vmem:[#allocation8 + $0x178] sm:$0xff] %v301
          %354 = vst [vmem:[#allocation8 + $0x180] sm:$0xff] %v289
          %355 = vst [vmem:[#allocation8 + $0x188] sm:$0xff] %v293
          %356 = vst [vmem:[#allocation8 + $0x190] sm:$0xff] %v297
          %357 = vst [vmem:[#allocation8 + $0x198] sm:$0xff] %v301
          %358 = vst [vmem:[#allocation8 + $0x1a0] sm:$0xff] %v289
          %359 = vst [vmem:[#allocation8 + $0x1a8] sm:$0xff] %v293
          %360 = vst [vmem:[#allocation8 + $0x1b0] sm:$0xff] %v297
          %361 = vst [vmem:[#allocation8 + $0x1b8] sm:$0xff] %v301
          %362 = vst [vmem:[#allocation8 + $0x1c0] sm:$0xff] %v289
          %363 = vst [vmem:[#allocation8 + $0x1c8] sm:$0xff] %v293
          %364 = vst [vmem:[#allocation8 + $0x1d0] sm:$0xff] %v297
          %365 = vst [vmem:[#allocation8 + $0x1d8] sm:$0xff] %v301
          %366 = vst [vmem:[#allocation8 + $0x1e0] sm:$0xff] %v289
          %367 = vst [vmem:[#allocation8 + $0x1e8] sm:$0xff] %v293
          %368 = vst [vmem:[#allocation8 + $0x1f0] sm:$0xff] %v297
          %369 = vst [vmem:[#allocation8 + $0x1f8] sm:$0xff] %v301
          %370 = vst [vmem:[#allocation8 + $0x200] sm:$0xff] %v289
          %371 = vst [vmem:[#allocation8 + $0x208] sm:$0xff] %v293
          %372 = vst [vmem:[#allocation8 + $0x210] sm:$0xff] %v297
          %373 = vst [vmem:[#allocation8 + $0x218] sm:$0xff] %v301
          %374 = vst [vmem:[#allocation8 + $0x220] sm:$0xff] %v289
          %375 = vst [vmem:[#allocation8 + $0x228] sm:$0xff] %v293
          %376 = vst [vmem:[#allocation8 + $0x230] sm:$0xff] %v297
          %377 = vst [vmem:[#allocation8 + $0x238] sm:$0xff] %v301
          %378 = vst [vmem:[#allocation8 + $0x240] sm:$0xff] %v289
          %379 = vst [vmem:[#allocation8 + $0x248] sm:$0xff] %v293
          %380 = vst [vmem:[#allocation8 + $0x250] sm:$0xff] %v297
          %381 = vst [vmem:[#allocation8 + $0x258] sm:$0xff] %v301
          %382 = vst [vmem:[#allocation8 + $0x260] sm:$0xff] %v289
          %383 = vst [vmem:[#allocation8 + $0x268] sm:$0xff] %v293
          %384 = vst [vmem:[#allocation8 + $0x270] sm:$0xff] %v297
          %385 = vst [vmem:[#allocation8 + $0x278] sm:$0xff] %v301
          %386 = vst [vmem:[#allocation8 + $0x280] sm:$0xff] %v289
          %387 = vst [vmem:[#allocation8 + $0x288] sm:$0xff] %v293
          %388 = vst [vmem:[#allocation8 + $0x290] sm:$0xff] %v297
          %389 = vst [vmem:[#allocation8 + $0x298] sm:$0xff] %v301
          %390 = vst [vmem:[#allocation8 + $0x2a0] sm:$0xff] %v289
          %391 = vst [vmem:[#allocation8 + $0x2a8] sm:$0xff] %v293
          %392 = vst [vmem:[#allocation8 + $0x2b0] sm:$0xff] %v297
          %393 = vst [vmem:[#allocation8 + $0x2b8] sm:$0xff] %v301
          %394 = vst [vmem:[#allocation8 + $0x2c0] sm:$0xff] %v289
          %395 = vst [vmem:[#allocation8 + $0x2c8] sm:$0xff] %v293
          %396 = vst [vmem:[#allocation8 + $0x2d0] sm:$0xff] %v297
          %397 = vst [vmem:[#allocation8 + $0x2d8] sm:$0xff] %v301
          %398 = vst [vmem:[#allocation8 + $0x2e0] sm:$0xff] %v289
          %399 = vst [vmem:[#allocation8 + $0x2e8] sm:$0xff] %v293
          %400 = vst [vmem:[#allocation8 + $0x2f0] sm:$0xff] %v297
          %401 = vst [vmem:[#allocation8 + $0x2f8] sm:$0xff] %v301
          %402 = vst [vmem:[#allocation8 + $0x300] sm:$0xff] %v289
          %403 = vst [vmem:[#allocation8 + $0x308] sm:$0xff] %v293
          %404 = vst [vmem:[#allocation8 + $0x310] sm:$0xff] %v297
          %405 = vst [vmem:[#allocation8 + $0x318] sm:$0xff] %v301
          %406 = vst [vmem:[#allocation8 + $0x320] sm:$0xff] %v289
          %407 = vst [vmem:[#allocation8 + $0x328] sm:$0xff] %v293
          %408 = vst [vmem:[#allocation8 + $0x330] sm:$0xff] %v297
          %409 = vst [vmem:[#allocation8 + $0x338] sm:$0xff] %v301
          %410 = vst [vmem:[#allocation8 + $0x340] sm:$0xff] %v289
          %411 = vst [vmem:[#allocation8 + $0x348] sm:$0xff] %v293
          %412 = vst [vmem:[#allocation8 + $0x350] sm:$0xff] %v297
          %413 = vst [vmem:[#allocation8 + $0x358] sm:$0xff] %v301
          %414 = vst [vmem:[#allocation8 + $0x360] sm:$0xff] %v289
          %415 = vst [vmem:[#allocation8 + $0x368] sm:$0xff] %v293
          %416 = vst [vmem:[#allocation8 + $0x370] sm:$0xff] %v297
          %417 = vst [vmem:[#allocation8 + $0x378] sm:$0xff] %v301
          %418 = vst [vmem:[#allocation8 + $0x380] sm:$0xff] %v289
          %419 = vst [vmem:[#allocation8 + $0x388] sm:$0xff] %v293
          %420 = vst [vmem:[#allocation8 + $0x390] sm:$0xff] %v297
          %421 = vst [vmem:[#allocation8 + $0x398] sm:$0xff] %v301
          %422 = vst [vmem:[#allocation8 + $0x3a0] sm:$0xff] %v289
          %423 = vst [vmem:[#allocation8 + $0x3a8] sm:$0xff] %v293
          %424 = vst [vmem:[#allocation8 + $0x3b0] sm:$0xff] %v297
          %425 = vst [vmem:[#allocation8 + $0x3b8] sm:$0xff] %v301
          %426 = vst [vmem:[#allocation8 + $0x3c0] sm:$0xff] %v289
          %427 = vst [vmem:[#allocation8 + $0x3c8] sm:$0xff] %v293
          %428 = vst [vmem:[#allocation8 + $0x3d0] sm:$0xff] %v297
          %429 = vst [vmem:[#allocation8 + $0x3d8] sm:$0xff] %v301
          %430 = vst [vmem:[#allocation8 + $0x3e0] sm:$0xff] %v289
          %431 = vst [vmem:[#allocation8 + $0x3e8] sm:$0xff] %v293
          %432 = vst [vmem:[#allocation8 + $0x3f0] sm:$0xff] %v297
          %433 = vst [vmem:[#allocation8 + $0x3f8] sm:$0xff] %v301
        $region48: #{tpu_custom_call.1} parent=31 // pred_fallthru
          _
        %v434 = vld [vmem:[#allocation8] sm:$0xff]
        %v435 = vld [vmem:[#allocation8 + $0x8] sm:$0xff]
        %v436 = vld [vmem:[#allocation8 + $0x10] sm:$0xff]
        %v437 = vld [vmem:[#allocation8 + $0x18] sm:$0xff]
        %v438 = vld [vmem:[#allocation8 + $0x20] sm:$0xff]
        %v439 = vld [vmem:[#allocation8 + $0x28] sm:$0xff]
        %v440 = vld [vmem:[#allocation8 + $0x30] sm:$0xff]
        %v441 = vld [vmem:[#allocation8 + $0x38] sm:$0xff]
        %v442 = vld [vmem:[#allocation8 + $0x40] sm:$0xff]
        %v443 = vld [vmem:[#allocation8 + $0x48] sm:$0xff]
        %v444 = vld [vmem:[#allocation8 + $0x50] sm:$0xff]
        %v445 = vld [vmem:[#allocation8 + $0x58] sm:$0xff]
        %v446 = vld [vmem:[#allocation8 + $0x60] sm:$0xff]
        %v447 = vld [vmem:[#allocation8 + $0x68] sm:$0xff]
        %v448 = vld [vmem:[#allocation8 + $0x70] sm:$0xff]
        %v449 = vld [vmem:[#allocation8 + $0x78] sm:$0xff]
        %v450 = vld [vmem:[#allocation8 + $0x80] sm:$0xff]
        %v451 = vld [vmem:[#allocation8 + $0x88] sm:$0xff]
        %v452 = vld [vmem:[#allocation8 + $0x90] sm:$0xff]
        %v453 = vld [vmem:[#allocation8 + $0x98] sm:$0xff]
        %v454 = vld [vmem:[#allocation8 + $0xa0] sm:$0xff]
        %v455 = vld [vmem:[#allocation8 + $0xa8] sm:$0xff]
        %v456 = vld [vmem:[#allocation8 + $0xb0] sm:$0xff]
        %v457 = vld [vmem:[#allocation8 + $0xb8] sm:$0xff]
        %v458 = vld [vmem:[#allocation8 + $0xc0] sm:$0xff]
        %v459 = vld [vmem:[#allocation8 + $0xc8] sm:$0xff]
        %v460 = vld [vmem:[#allocation8 + $0xd0] sm:$0xff]
        %v461 = vld [vmem:[#allocation8 + $0xd8] sm:$0xff]
        %v462 = vld [vmem:[#allocation8 + $0xe0] sm:$0xff]
        %v463 = vld [vmem:[#allocation8 + $0xe8] sm:$0xff]
        %v464 = vld [vmem:[#allocation8 + $0xf0] sm:$0xff]
        %v465 = vld [vmem:[#allocation8 + $0xf8] sm:$0xff]
        %v466 = vld [vmem:[#allocation8 + $0x100] sm:$0xff]
        %v467 = vld [vmem:[#allocation8 + $0x108] sm:$0xff]
        %v468 = vld [vmem:[#allocation8 + $0x110] sm:$0xff]
        %v469 = vld [vmem:[#allocation8 + $0x118] sm:$0xff]
        %v470 = vld [vmem:[#allocation8 + $0x120] sm:$0xff]
        %v471 = vld [vmem:[#allocation8 + $0x128] sm:$0xff]
        %v472 = vld [vmem:[#allocation8 + $0x130] sm:$0xff]
        %v473 = vld [vmem:[#allocation8 + $0x138] sm:$0xff]
        %v474 = vld [vmem:[#allocation8 + $0x140] sm:$0xff]
        %v475 = vld [vmem:[#allocation8 + $0x148] sm:$0xff]
        %v476 = vld [vmem:[#allocation8 + $0x150] sm:$0xff]
        %v477 = vld [vmem:[#allocation8 + $0x158] sm:$0xff]
        %v478 = vld [vmem:[#allocation8 + $0x160] sm:$0xff]
        %v479 = vld [vmem:[#allocation8 + $0x168] sm:$0xff]
        %v480 = vld [vmem:[#allocation8 + $0x170] sm:$0xff]
        %v481 = vld [vmem:[#allocation8 + $0x178] sm:$0xff]
        %v482 = vld [vmem:[#allocation8 + $0x180] sm:$0xff]
        %v483 = vld [vmem:[#allocation8 + $0x188] sm:$0xff]
        %v484 = vld [vmem:[#allocation8 + $0x190] sm:$0xff]
        %v485 = vld [vmem:[#allocation8 + $0x198] sm:$0xff]
        %v486 = vld [vmem:[#allocation8 + $0x1a0] sm:$0xff]
        %v487 = vld [vmem:[#allocation8 + $0x1a8] sm:$0xff]
        %v488 = vld [vmem:[#allocation8 + $0x1b0] sm:$0xff]
        %v489 = vld [vmem:[#allocation8 + $0x1b8] sm:$0xff]
        %v490 = vld [vmem:[#allocation8 + $0x1c0] sm:$0xff]
        %v491 = vld [vmem:[#allocation8 + $0x1c8] sm:$0xff]
        %v492 = vld [vmem:[#allocation8 + $0x1d0] sm:$0xff]
        %v493 = vld [vmem:[#allocation8 + $0x1d8] sm:$0xff]
        %v494 = vld [vmem:[#allocation8 + $0x1e0] sm:$0xff]
        %v495 = vld [vmem:[#allocation8 + $0x1e8] sm:$0xff]
        %v496 = vld [vmem:[#allocation8 + $0x1f0] sm:$0xff]
        %v497 = vld [vmem:[#allocation8 + $0x1f8] sm:$0xff]
        %v498 = vld [vmem:[#allocation8 + $0x200] sm:$0xff]
        %v499 = vld [vmem:[#allocation8 + $0x208] sm:$0xff]
        %v500 = vld [vmem:[#allocation8 + $0x210] sm:$0xff]
        %v501 = vld [vmem:[#allocation8 + $0x218] sm:$0xff]
        %v502 = vld [vmem:[#allocation8 + $0x220] sm:$0xff]
        %v503 = vld [vmem:[#allocation8 + $0x228] sm:$0xff]
        %v504 = vld [vmem:[#allocation8 + $0x230] sm:$0xff]
        %v505 = vld [vmem:[#allocation8 + $0x238] sm:$0xff]
        %v506 = vld [vmem:[#allocation8 + $0x240] sm:$0xff]
        %v507 = vld [vmem:[#allocation8 + $0x248] sm:$0xff]
        %v508 = vld [vmem:[#allocation8 + $0x250] sm:$0xff]
        %v509 = vld [vmem:[#allocation8 + $0x258] sm:$0xff]
        %v510 = vld [vmem:[#allocation8 + $0x260] sm:$0xff]
        %v511 = vld [vmem:[#allocation8 + $0x268] sm:$0xff]
        %v512 = vld [vmem:[#allocation8 + $0x270] sm:$0xff]
        %v513 = vld [vmem:[#allocation8 + $0x278] sm:$0xff]
        %v514 = vld [vmem:[#allocation8 + $0x280] sm:$0xff]
        %v515 = vld [vmem:[#allocation8 + $0x288] sm:$0xff]
        %v516 = vld [vmem:[#allocation8 + $0x290] sm:$0xff]
        %v517 = vld [vmem:[#allocation8 + $0x298] sm:$0xff]
        %v518 = vld [vmem:[#allocation8 + $0x2a0] sm:$0xff]
        %v519 = vld [vmem:[#allocation8 + $0x2a8] sm:$0xff]
        %v520 = vld [vmem:[#allocation8 + $0x2b0] sm:$0xff]
        %v521 = vld [vmem:[#allocation8 + $0x2b8] sm:$0xff]
        %v522 = vld [vmem:[#allocation8 + $0x2c0] sm:$0xff]
        %v523 = vld [vmem:[#allocation8 + $0x2c8] sm:$0xff]
        %v524 = vld [vmem:[#allocation8 + $0x2d0] sm:$0xff]
        %v525 = vld [vmem:[#allocation8 + $0x2d8] sm:$0xff]
        %v526 = vld [vmem:[#allocation8 + $0x2e0] sm:$0xff]
        %v527 = vld [vmem:[#allocation8 + $0x2e8] sm:$0xff]
        %v528 = vld [vmem:[#allocation8 + $0x2f0] sm:$0xff]
        %v529 = vld [vmem:[#allocation8 + $0x2f8] sm:$0xff]
        %v530 = vld [vmem:[#allocation8 + $0x300] sm:$0xff]
        %v531 = vld [vmem:[#allocation8 + $0x308] sm:$0xff]
        %v532 = vld [vmem:[#allocation8 + $0x310] sm:$0xff]
        %v533 = vld [vmem:[#allocation8 + $0x318] sm:$0xff]
        %v534 = vld [vmem:[#allocation8 + $0x320] sm:$0xff]
        %v535 = vld [vmem:[#allocation8 + $0x328] sm:$0xff]
        %v536 = vld [vmem:[#allocation8 + $0x330] sm:$0xff]
        %v537 = vld [vmem:[#allocation8 + $0x338] sm:$0xff]
        %v538 = vld [vmem:[#allocation8 + $0x340] sm:$0xff]
        %v539 = vld [vmem:[#allocation8 + $0x348] sm:$0xff]
        %v540 = vld [vmem:[#allocation8 + $0x350] sm:$0xff]
        %v541 = vld [vmem:[#allocation8 + $0x358] sm:$0xff]
        %v542 = vld [vmem:[#allocation8 + $0x360] sm:$0xff]
        %v543 = vld [vmem:[#allocation8 + $0x368] sm:$0xff]
        %v544 = vld [vmem:[#allocation8 + $0x370] sm:$0xff]
        %v545 = vld [vmem:[#allocation8 + $0x378] sm:$0xff]
        %v546 = vld [vmem:[#allocation8 + $0x380] sm:$0xff]
        %v547 = vld [vmem:[#allocation8 + $0x388] sm:$0xff]
        %v548 = vld [vmem:[#allocation8 + $0x390] sm:$0xff]
        %v549 = vld [vmem:[#allocation8 + $0x398] sm:$0xff]
        %v550 = vld [vmem:[#allocation8 + $0x3a0] sm:$0xff]
        %v551 = vld [vmem:[#allocation8 + $0x3a8] sm:$0xff]
        %v552 = vld [vmem:[#allocation8 + $0x3b0] sm:$0xff]
        %v553 = vld [vmem:[#allocation8 + $0x3b8] sm:$0xff]
        %v554 = vld [vmem:[#allocation8 + $0x3c0] sm:$0xff]
        %v555 = vld [vmem:[#allocation8 + $0x3c8] sm:$0xff]
        %v556 = vld [vmem:[#allocation8 + $0x3d0] sm:$0xff]
        %v557 = vld [vmem:[#allocation8 + $0x3d8] sm:$0xff]
        %v558 = vld [vmem:[#allocation8 + $0x3e0] sm:$0xff]
        %v559 = vld [vmem:[#allocation8 + $0x3e8] sm:$0xff]
        %v560 = vld [vmem:[#allocation8 + $0x3f0] sm:$0xff]
        %v561 = vld [vmem:[#allocation8 + $0x3f8] sm:$0xff]
        %v562 = vld [vmem:[%s237] sm:$0xff]
        %v563 = vld [vmem:[%s237 + $0x8] sm:$0xff]
        %v564 = vld [vmem:[%s237 + $0x10] sm:$0xff]
        %v565 = vld [vmem:[%s237 + $0x18] sm:$0xff]
        %v566 = vld [vmem:[%s237 + $0x20] sm:$0xff]
        %v567 = vld [vmem:[%s237 + $0x28] sm:$0xff]
        %v568 = vld [vmem:[%s237 + $0x30] sm:$0xff]
        %v569 = vld [vmem:[%s237 + $0x38] sm:$0xff]
        %v570 = vld [vmem:[%s237 + $0x40] sm:$0xff]
        %v571 = vld [vmem:[%s237 + $0x48] sm:$0xff]
        %v572 = vld [vmem:[%s237 + $0x50] sm:$0xff]
        %v573 = vld [vmem:[%s237 + $0x58] sm:$0xff]
        %v574 = vld [vmem:[%s237 + $0x60] sm:$0xff]
        %v575 = vld [vmem:[%s237 + $0x68] sm:$0xff]
        %v576 = vld [vmem:[%s237 + $0x70] sm:$0xff]
        %v577 = vld [vmem:[%s237 + $0x78] sm:$0xff]
        %v578 = vld [vmem:[%s237 + $0x80] sm:$0xff]
        %v579 = vld [vmem:[%s237 + $0x88] sm:$0xff]
        %v580 = vld [vmem:[%s237 + $0x90] sm:$0xff]
        %v581 = vld [vmem:[%s237 + $0x98] sm:$0xff]
        %v582 = vld [vmem:[%s237 + $0xa0] sm:$0xff]
        %v583 = vld [vmem:[%s237 + $0xa8] sm:$0xff]
        %v584 = vld [vmem:[%s237 + $0xb0] sm:$0xff]
        %v585 = vld [vmem:[%s237 + $0xb8] sm:$0xff]
        %v586 = vld [vmem:[%s237 + $0xc0] sm:$0xff]
        %v587 = vld [vmem:[%s237 + $0xc8] sm:$0xff]
        %v588 = vld [vmem:[%s237 + $0xd0] sm:$0xff]
        %v589 = vld [vmem:[%s237 + $0xd8] sm:$0xff]
        %v590 = vld [vmem:[%s237 + $0xe0] sm:$0xff]
        %v591 = vld [vmem:[%s237 + $0xe8] sm:$0xff]
        %v592 = vld [vmem:[%s237 + $0xf0] sm:$0xff]
        %v593 = vld [vmem:[%s237 + $0xf8] sm:$0xff]
        %v594 = vld [vmem:[%s237 + $0x100] sm:$0xff]
        %v595 = vld [vmem:[%s237 + $0x108] sm:$0xff]
        %v596 = vld [vmem:[%s237 + $0x110] sm:$0xff]
        %v597 = vld [vmem:[%s237 + $0x118] sm:$0xff]
        %v598 = vld [vmem:[%s237 + $0x120] sm:$0xff]
        %v599 = vld [vmem:[%s237 + $0x128] sm:$0xff]
        %v600 = vld [vmem:[%s237 + $0x130] sm:$0xff]
        %v601 = vld [vmem:[%s237 + $0x138] sm:$0xff]
        %v602 = vld [vmem:[%s237 + $0x140] sm:$0xff]
        %v603 = vld [vmem:[%s237 + $0x148] sm:$0xff]
        %v604 = vld [vmem:[%s237 + $0x150] sm:$0xff]
        %v605 = vld [vmem:[%s237 + $0x158] sm:$0xff]
        %v606 = vld [vmem:[%s237 + $0x160] sm:$0xff]
        %v607 = vld [vmem:[%s237 + $0x168] sm:$0xff]
        %v608 = vld [vmem:[%s237 + $0x170] sm:$0xff]
        %v609 = vld [vmem:[%s237 + $0x178] sm:$0xff]
        %v610 = vld [vmem:[%s237 + $0x180] sm:$0xff]
        %v611 = vld [vmem:[%s237 + $0x188] sm:$0xff]
        %v612 = vld [vmem:[%s237 + $0x190] sm:$0xff]
        %v613 = vld [vmem:[%s237 + $0x198] sm:$0xff]
        %v614 = vld [vmem:[%s237 + $0x1a0] sm:$0xff]
        %v615 = vld [vmem:[%s237 + $0x1a8] sm:$0xff]
        %v616 = vld [vmem:[%s237 + $0x1b0] sm:$0xff]
        %v617 = vld [vmem:[%s237 + $0x1b8] sm:$0xff]
        %v618 = vld [vmem:[%s237 + $0x1c0] sm:$0xff]
        %v619 = vld [vmem:[%s237 + $0x1c8] sm:$0xff]
        %v620 = vld [vmem:[%s237 + $0x1d0] sm:$0xff]
        %v621 = vld [vmem:[%s237 + $0x1d8] sm:$0xff]
        %v622 = vld [vmem:[%s237 + $0x1e0] sm:$0xff]
        %v623 = vld [vmem:[%s237 + $0x1e8] sm:$0xff]
        %v624 = vld [vmem:[%s237 + $0x1f0] sm:$0xff]
        %v625 = vld [vmem:[%s237 + $0x1f8] sm:$0xff]
        %v626 = vld [vmem:[%s237 + $0x200] sm:$0xff]
        %v627 = vld [vmem:[%s237 + $0x208] sm:$0xff]
        %v628 = vld [vmem:[%s237 + $0x210] sm:$0xff]
        %v629 = vld [vmem:[%s237 + $0x218] sm:$0xff]
        %v630 = vld [vmem:[%s237 + $0x220] sm:$0xff]
        %v631 = vld [vmem:[%s237 + $0x228] sm:$0xff]
        %v632 = vld [vmem:[%s237 + $0x230] sm:$0xff]
        %v633 = vld [vmem:[%s237 + $0x238] sm:$0xff]
        %v634 = vld [vmem:[%s237 + $0x240] sm:$0xff]
        %v635 = vld [vmem:[%s237 + $0x248] sm:$0xff]
        %v636 = vld [vmem:[%s237 + $0x250] sm:$0xff]
        %v637 = vld [vmem:[%s237 + $0x258] sm:$0xff]
        %v638 = vld [vmem:[%s237 + $0x260] sm:$0xff]
        %v639 = vld [vmem:[%s237 + $0x268] sm:$0xff]
        %v640 = vld [vmem:[%s237 + $0x270] sm:$0xff]
        %v641 = vld [vmem:[%s237 + $0x278] sm:$0xff]
        %v642 = vld [vmem:[%s237 + $0x280] sm:$0xff]
        %v643 = vld [vmem:[%s237 + $0x288] sm:$0xff]
        %v644 = vld [vmem:[%s237 + $0x290] sm:$0xff]
        %v645 = vld [vmem:[%s237 + $0x298] sm:$0xff]
        %v646 = vld [vmem:[%s237 + $0x2a0] sm:$0xff]
        %v647 = vld [vmem:[%s237 + $0x2a8] sm:$0xff]
        %v648 = vld [vmem:[%s237 + $0x2b0] sm:$0xff]
        %v649 = vld [vmem:[%s237 + $0x2b8] sm:$0xff]
        %v650 = vld [vmem:[%s237 + $0x2c0] sm:$0xff]
        %v651 = vld [vmem:[%s237 + $0x2c8] sm:$0xff]
        %v652 = vld [vmem:[%s237 + $0x2d0] sm:$0xff]
        %v653 = vld [vmem:[%s237 + $0x2d8] sm:$0xff]
        %v654 = vld [vmem:[%s237 + $0x2e0] sm:$0xff]
        %v655 = vld [vmem:[%s237 + $0x2e8] sm:$0xff]
        %v656 = vld [vmem:[%s237 + $0x2f0] sm:$0xff]
        %v657 = vld [vmem:[%s237 + $0x2f8] sm:$0xff]
        %v658 = vld [vmem:[%s237 + $0x300] sm:$0xff]
        %v659 = vld [vmem:[%s237 + $0x308] sm:$0xff]
        %v660 = vld [vmem:[%s237 + $0x310] sm:$0xff]
        %v661 = vld [vmem:[%s237 + $0x318] sm:$0xff]
        %v662 = vld [vmem:[%s237 + $0x320] sm:$0xff]
        %v663 = vld [vmem:[%s237 + $0x328] sm:$0xff]
        %v664 = vld [vmem:[%s237 + $0x330] sm:$0xff]
        %v665 = vld [vmem:[%s237 + $0x338] sm:$0xff]
        %v666 = vld [vmem:[%s237 + $0x340] sm:$0xff]
        %v667 = vld [vmem:[%s237 + $0x348] sm:$0xff]
        %v668 = vld [vmem:[%s237 + $0x350] sm:$0xff]
        %v669 = vld [vmem:[%s237 + $0x358] sm:$0xff]
        %v670 = vld [vmem:[%s237 + $0x360] sm:$0xff]
        %v671 = vld [vmem:[%s237 + $0x368] sm:$0xff]
        %v672 = vld [vmem:[%s237 + $0x370] sm:$0xff]
        %v673 = vld [vmem:[%s237 + $0x378] sm:$0xff]
        %v674 = vld [vmem:[%s237 + $0x380] sm:$0xff]
        %v675 = vld [vmem:[%s237 + $0x388] sm:$0xff]
        %v676 = vld [vmem:[%s237 + $0x390] sm:$0xff]
        %v677 = vld [vmem:[%s237 + $0x398] sm:$0xff]
        %v678 = vld [vmem:[%s237 + $0x3a0] sm:$0xff]
        %v679 = vld [vmem:[%s237 + $0x3a8] sm:$0xff]
        %v680 = vld [vmem:[%s237 + $0x3b0] sm:$0xff]
        %v681 = vld [vmem:[%s237 + $0x3b8] sm:$0xff]
        %v682 = vld [vmem:[%s237 + $0x3c0] sm:$0xff]
        %v683 = vld [vmem:[%s237 + $0x3c8] sm:$0xff]
        %v684 = vld [vmem:[%s237 + $0x3d0] sm:$0xff]
        %v685 = vld [vmem:[%s237 + $0x3d8] sm:$0xff]
        %v686 = vld [vmem:[%s237 + $0x3e0] sm:$0xff]
        %v687 = vld [vmem:[%s237 + $0x3e8] sm:$0xff]
        %v688 = vld [vmem:[%s237 + $0x3f0] sm:$0xff]
        %v689 = vld [vmem:[%s237 + $0x3f8] sm:$0xff]
        %v690 = vld [vmem:[%s237 + $0x400] sm:$0xff]
        %v691 = vld [vmem:[%s237 + $0x408] sm:$0xff]
        %v692 = vld [vmem:[%s237 + $0x410] sm:$0xff]
        %v693 = vld [vmem:[%s237 + $0x418] sm:$0xff]
        %v694 = vld [vmem:[%s237 + $0x420] sm:$0xff]
        %v695 = vld [vmem:[%s237 + $0x428] sm:$0xff]
        %v696 = vld [vmem:[%s237 + $0x430] sm:$0xff]
        %v697 = vld [vmem:[%s237 + $0x438] sm:$0xff]
        %v698 = vld [vmem:[%s237 + $0x440] sm:$0xff]
        %v699 = vld [vmem:[%s237 + $0x448] sm:$0xff]
        %v700 = vld [vmem:[%s237 + $0x450] sm:$0xff]
        %v701 = vld [vmem:[%s237 + $0x458] sm:$0xff]
        %v702 = vld [vmem:[%s237 + $0x460] sm:$0xff]
        %v703 = vld [vmem:[%s237 + $0x468] sm:$0xff]
        %v704 = vld [vmem:[%s237 + $0x470] sm:$0xff]
        %v705 = vld [vmem:[%s237 + $0x478] sm:$0xff]
        %v706 = vld [vmem:[%s237 + $0x480] sm:$0xff]
        %v707 = vld [vmem:[%s237 + $0x488] sm:$0xff]
        %v708 = vld [vmem:[%s237 + $0x490] sm:$0xff]
        %v709 = vld [vmem:[%s237 + $0x498] sm:$0xff]
        %v710 = vld [vmem:[%s237 + $0x4a0] sm:$0xff]
        %v711 = vld [vmem:[%s237 + $0x4a8] sm:$0xff]
        %v712 = vld [vmem:[%s237 + $0x4b0] sm:$0xff]
        %v713 = vld [vmem:[%s237 + $0x4b8] sm:$0xff]
        %v714 = vld [vmem:[%s237 + $0x4c0] sm:$0xff]
        %v715 = vld [vmem:[%s237 + $0x4c8] sm:$0xff]
        %v716 = vld [vmem:[%s237 + $0x4d0] sm:$0xff]
        %v717 = vld [vmem:[%s237 + $0x4d8] sm:$0xff]
        %v718 = vld [vmem:[%s237 + $0x4e0] sm:$0xff]
        %v719 = vld [vmem:[%s237 + $0x4e8] sm:$0xff]
        %v720 = vld [vmem:[%s237 + $0x4f0] sm:$0xff]
        %v721 = vld [vmem:[%s237 + $0x4f8] sm:$0xff]
        %v722 = vld [vmem:[%s237 + $0x500] sm:$0xff]
        %v723 = vld [vmem:[%s237 + $0x508] sm:$0xff]
        %v724 = vld [vmem:[%s237 + $0x510] sm:$0xff]
        %v725 = vld [vmem:[%s237 + $0x518] sm:$0xff]
        %v726 = vld [vmem:[%s237 + $0x520] sm:$0xff]
        %v727 = vld [vmem:[%s237 + $0x528] sm:$0xff]
        %v728 = vld [vmem:[%s237 + $0x530] sm:$0xff]
        %v729 = vld [vmem:[%s237 + $0x538] sm:$0xff]
        %v730 = vld [vmem:[%s237 + $0x540] sm:$0xff]
        %v731 = vld [vmem:[%s237 + $0x548] sm:$0xff]
        %v732 = vld [vmem:[%s237 + $0x550] sm:$0xff]
        %v733 = vld [vmem:[%s237 + $0x558] sm:$0xff]
        %v734 = vld [vmem:[%s237 + $0x560] sm:$0xff]
        %v735 = vld [vmem:[%s237 + $0x568] sm:$0xff]
        %v736 = vld [vmem:[%s237 + $0x570] sm:$0xff]
        %v737 = vld [vmem:[%s237 + $0x578] sm:$0xff]
        %v738 = vld [vmem:[%s237 + $0x580] sm:$0xff]
        %v739 = vld [vmem:[%s237 + $0x588] sm:$0xff]
        %v740 = vld [vmem:[%s237 + $0x590] sm:$0xff]
        %v741 = vld [vmem:[%s237 + $0x598] sm:$0xff]
        %v742 = vld [vmem:[%s237 + $0x5a0] sm:$0xff]
        %v743 = vld [vmem:[%s237 + $0x5a8] sm:$0xff]
        %v744 = vld [vmem:[%s237 + $0x5b0] sm:$0xff]
        %v745 = vld [vmem:[%s237 + $0x5b8] sm:$0xff]
        %v746 = vld [vmem:[%s237 + $0x5c0] sm:$0xff]
        %v747 = vld [vmem:[%s237 + $0x5c8] sm:$0xff]
        %v748 = vld [vmem:[%s237 + $0x5d0] sm:$0xff]
        %v749 = vld [vmem:[%s237 + $0x5d8] sm:$0xff]
        %v750 = vld [vmem:[%s237 + $0x5e0] sm:$0xff]
        %v751 = vld [vmem:[%s237 + $0x5e8] sm:$0xff]
        %v752 = vld [vmem:[%s237 + $0x5f0] sm:$0xff]
        %v753 = vld [vmem:[%s237 + $0x5f8] sm:$0xff]
        %v754 = vld [vmem:[%s237 + $0x600] sm:$0xff]
        %v755 = vld [vmem:[%s237 + $0x608] sm:$0xff]
        %v756 = vld [vmem:[%s237 + $0x610] sm:$0xff]
        %v757 = vld [vmem:[%s237 + $0x618] sm:$0xff]
        %v758 = vld [vmem:[%s237 + $0x620] sm:$0xff]
        %v759 = vld [vmem:[%s237 + $0x628] sm:$0xff]
        %v760 = vld [vmem:[%s237 + $0x630] sm:$0xff]
        %v761 = vld [vmem:[%s237 + $0x638] sm:$0xff]
        %v762 = vld [vmem:[%s237 + $0x640] sm:$0xff]
        %v763 = vld [vmem:[%s237 + $0x648] sm:$0xff]
        %v764 = vld [vmem:[%s237 + $0x650] sm:$0xff]
        %v765 = vld [vmem:[%s237 + $0x658] sm:$0xff]
        %v766 = vld [vmem:[%s237 + $0x660] sm:$0xff]
        %v767 = vld [vmem:[%s237 + $0x668] sm:$0xff]
        %v768 = vld [vmem:[%s237 + $0x670] sm:$0xff]
        %v769 = vld [vmem:[%s237 + $0x678] sm:$0xff]
        %v770 = vld [vmem:[%s237 + $0x680] sm:$0xff]
        %v771 = vld [vmem:[%s237 + $0x688] sm:$0xff]
        %v772 = vld [vmem:[%s237 + $0x690] sm:$0xff]
        %v773 = vld [vmem:[%s237 + $0x698] sm:$0xff]
        %v774 = vld [vmem:[%s237 + $0x6a0] sm:$0xff]
        %v775 = vld [vmem:[%s237 + $0x6a8] sm:$0xff]
        %v776 = vld [vmem:[%s237 + $0x6b0] sm:$0xff]
        %v777 = vld [vmem:[%s237 + $0x6b8] sm:$0xff]
        %v778 = vld [vmem:[%s237 + $0x6c0] sm:$0xff]
        %v779 = vld [vmem:[%s237 + $0x6c8] sm:$0xff]
        %v780 = vld [vmem:[%s237 + $0x6d0] sm:$0xff]
        %v781 = vld [vmem:[%s237 + $0x6d8] sm:$0xff]
        %v782 = vld [vmem:[%s237 + $0x6e0] sm:$0xff]
        %v783 = vld [vmem:[%s237 + $0x6e8] sm:$0xff]
        %v784 = vld [vmem:[%s237 + $0x6f0] sm:$0xff]
        %v785 = vld [vmem:[%s237 + $0x6f8] sm:$0xff]
        %v786 = vld [vmem:[%s237 + $0x700] sm:$0xff]
        %v787 = vld [vmem:[%s237 + $0x708] sm:$0xff]
        %v788 = vld [vmem:[%s237 + $0x710] sm:$0xff]
        %v789 = vld [vmem:[%s237 + $0x718] sm:$0xff]
        %v790 = vld [vmem:[%s237 + $0x720] sm:$0xff]
        %v791 = vld [vmem:[%s237 + $0x728] sm:$0xff]
        %v792 = vld [vmem:[%s237 + $0x730] sm:$0xff]
        %v793 = vld [vmem:[%s237 + $0x738] sm:$0xff]
        %v794 = vld [vmem:[%s237 + $0x740] sm:$0xff]
        %v795 = vld [vmem:[%s237 + $0x748] sm:$0xff]
        %v796 = vld [vmem:[%s237 + $0x750] sm:$0xff]
        %v797 = vld [vmem:[%s237 + $0x758] sm:$0xff]
        %v798 = vld [vmem:[%s237 + $0x760] sm:$0xff]
        %v799 = vld [vmem:[%s237 + $0x768] sm:$0xff]
        %v800 = vld [vmem:[%s237 + $0x770] sm:$0xff]
        %v801 = vld [vmem:[%s237 + $0x778] sm:$0xff]
        %v802 = vld [vmem:[%s237 + $0x780] sm:$0xff]
        %v803 = vld [vmem:[%s237 + $0x788] sm:$0xff]
        %v804 = vld [vmem:[%s237 + $0x790] sm:$0xff]
        %v805 = vld [vmem:[%s237 + $0x798] sm:$0xff]
        %v806 = vld [vmem:[%s237 + $0x7a0] sm:$0xff]
        %v807 = vld [vmem:[%s237 + $0x7a8] sm:$0xff]
        %v808 = vld [vmem:[%s237 + $0x7b0] sm:$0xff]
        %v809 = vld [vmem:[%s237 + $0x7b8] sm:$0xff]
        %v810 = vld [vmem:[%s237 + $0x7c0] sm:$0xff]
        %v811 = vld [vmem:[%s237 + $0x7c8] sm:$0xff]
        %v812 = vld [vmem:[%s237 + $0x7d0] sm:$0xff]
        %v813 = vld [vmem:[%s237 + $0x7d8] sm:$0xff]
        %v814 = vld [vmem:[%s237 + $0x7e0] sm:$0xff]
        %v815 = vld [vmem:[%s237 + $0x7e8] sm:$0xff]
        %v816 = vld [vmem:[%s237 + $0x7f0] sm:$0xff]
        %v817 = vld [vmem:[%s237 + $0x7f8] sm:$0xff]
        %v818 = vld [vmem:[%s246] sm:$0xff]
        %v819 = vld [vmem:[%s246 + $0x8] sm:$0xff]
        %v820 = vld [vmem:[%s246 + $0x10] sm:$0xff]
        %v821 = vld [vmem:[%s246 + $0x18] sm:$0xff]
        %v822 = vld [vmem:[%s246 + $0x20] sm:$0xff]
        %v823 = vld [vmem:[%s246 + $0x28] sm:$0xff]
        %v824 = vld [vmem:[%s246 + $0x30] sm:$0xff]
        %v825 = vld [vmem:[%s246 + $0x38] sm:$0xff]
        %v826 = vld [vmem:[%s246 + $0x40] sm:$0xff]
        %v827 = vld [vmem:[%s246 + $0x48] sm:$0xff]
        %v828 = vld [vmem:[%s246 + $0x50] sm:$0xff]
        %v829 = vld [vmem:[%s246 + $0x58] sm:$0xff]
        %v830 = vld [vmem:[%s246 + $0x60] sm:$0xff]
        %v831 = vld [vmem:[%s246 + $0x68] sm:$0xff]
        %v832 = vld [vmem:[%s246 + $0x70] sm:$0xff]
        %v833 = vld [vmem:[%s246 + $0x78] sm:$0xff]
        %v834 = vld [vmem:[%s246 + $0x80] sm:$0xff]
        %v835 = vld [vmem:[%s246 + $0x88] sm:$0xff]
        %v836 = vld [vmem:[%s246 + $0x90] sm:$0xff]
        %v837 = vld [vmem:[%s246 + $0x98] sm:$0xff]
        %v838 = vld [vmem:[%s246 + $0xa0] sm:$0xff]
        %v839 = vld [vmem:[%s246 + $0xa8] sm:$0xff]
        %v840 = vld [vmem:[%s246 + $0xb0] sm:$0xff]
        %v841 = vld [vmem:[%s246 + $0xb8] sm:$0xff]
        %v842 = vld [vmem:[%s246 + $0xc0] sm:$0xff]
        %v843 = vld [vmem:[%s246 + $0xc8] sm:$0xff]
        %v844 = vld [vmem:[%s246 + $0xd0] sm:$0xff]
        %v845 = vld [vmem:[%s246 + $0xd8] sm:$0xff]
        %v846 = vld [vmem:[%s246 + $0xe0] sm:$0xff]
        %v847 = vld [vmem:[%s246 + $0xe8] sm:$0xff]
        %v848 = vld [vmem:[%s246 + $0xf0] sm:$0xff]
        %v849 = vld [vmem:[%s246 + $0xf8] sm:$0xff]
        %v850 = vld [vmem:[%s246 + $0x100] sm:$0xff]
        %v851 = vld [vmem:[%s246 + $0x108] sm:$0xff]
        %v852 = vld [vmem:[%s246 + $0x110] sm:$0xff]
        %v853 = vld [vmem:[%s246 + $0x118] sm:$0xff]
        %v854 = vld [vmem:[%s246 + $0x120] sm:$0xff]
        %v855 = vld [vmem:[%s246 + $0x128] sm:$0xff]
        %v856 = vld [vmem:[%s246 + $0x130] sm:$0xff]
        %v857 = vld [vmem:[%s246 + $0x138] sm:$0xff]
        %v858 = vld [vmem:[%s246 + $0x140] sm:$0xff]
        %v859 = vld [vmem:[%s246 + $0x148] sm:$0xff]
        %v860 = vld [vmem:[%s246 + $0x150] sm:$0xff]
        %v861 = vld [vmem:[%s246 + $0x158] sm:$0xff]
        %v862 = vld [vmem:[%s246 + $0x160] sm:$0xff]
        %v863 = vld [vmem:[%s246 + $0x168] sm:$0xff]
        %v864 = vld [vmem:[%s246 + $0x170] sm:$0xff]
        %v865 = vld [vmem:[%s246 + $0x178] sm:$0xff]
        %v866 = vld [vmem:[%s246 + $0x180] sm:$0xff]
        %v867 = vld [vmem:[%s246 + $0x188] sm:$0xff]
        %v868 = vld [vmem:[%s246 + $0x190] sm:$0xff]
        %v869 = vld [vmem:[%s246 + $0x198] sm:$0xff]
        %v870 = vld [vmem:[%s246 + $0x1a0] sm:$0xff]
        %v871 = vld [vmem:[%s246 + $0x1a8] sm:$0xff]
        %v872 = vld [vmem:[%s246 + $0x1b0] sm:$0xff]
        %v873 = vld [vmem:[%s246 + $0x1b8] sm:$0xff]
        %v874 = vld [vmem:[%s246 + $0x1c0] sm:$0xff]
        %v875 = vld [vmem:[%s246 + $0x1c8] sm:$0xff]
        %v876 = vld [vmem:[%s246 + $0x1d0] sm:$0xff]
        %v877 = vld [vmem:[%s246 + $0x1d8] sm:$0xff]
        %v878 = vld [vmem:[%s246 + $0x1e0] sm:$0xff]
        %v879 = vld [vmem:[%s246 + $0x1e8] sm:$0xff]
        %v880 = vld [vmem:[%s246 + $0x1f0] sm:$0xff]
        %v881 = vld [vmem:[%s246 + $0x1f8] sm:$0xff]
        %v882 = vld [vmem:[%s246 + $0x200] sm:$0xff]
        %v883 = vld [vmem:[%s246 + $0x208] sm:$0xff]
        %v884 = vld [vmem:[%s246 + $0x210] sm:$0xff]
        %v885 = vld [vmem:[%s246 + $0x218] sm:$0xff]
        %v886 = vld [vmem:[%s246 + $0x220] sm:$0xff]
        %v887 = vld [vmem:[%s246 + $0x228] sm:$0xff]
        %v888 = vld [vmem:[%s246 + $0x230] sm:$0xff]
        %v889 = vld [vmem:[%s246 + $0x238] sm:$0xff]
        %v890 = vld [vmem:[%s246 + $0x240] sm:$0xff]
        %v891 = vld [vmem:[%s246 + $0x248] sm:$0xff]
        %v892 = vld [vmem:[%s246 + $0x250] sm:$0xff]
        %v893 = vld [vmem:[%s246 + $0x258] sm:$0xff]
        %v894 = vld [vmem:[%s246 + $0x260] sm:$0xff]
        %v895 = vld [vmem:[%s246 + $0x268] sm:$0xff]
        %v896 = vld [vmem:[%s246 + $0x270] sm:$0xff]
        %v897 = vld [vmem:[%s246 + $0x278] sm:$0xff]
        %v898 = vld [vmem:[%s246 + $0x280] sm:$0xff]
        %v899 = vld [vmem:[%s246 + $0x288] sm:$0xff]
        %v900 = vld [vmem:[%s246 + $0x290] sm:$0xff]
        %v901 = vld [vmem:[%s246 + $0x298] sm:$0xff]
        %v902 = vld [vmem:[%s246 + $0x2a0] sm:$0xff]
        %v903 = vld [vmem:[%s246 + $0x2a8] sm:$0xff]
        %v904 = vld [vmem:[%s246 + $0x2b0] sm:$0xff]
        %v905 = vld [vmem:[%s246 + $0x2b8] sm:$0xff]
        %v906 = vld [vmem:[%s246 + $0x2c0] sm:$0xff]
        %v907 = vld [vmem:[%s246 + $0x2c8] sm:$0xff]
        %v908 = vld [vmem:[%s246 + $0x2d0] sm:$0xff]
        %v909 = vld [vmem:[%s246 + $0x2d8] sm:$0xff]
        %v910 = vld [vmem:[%s246 + $0x2e0] sm:$0xff]
        %v911 = vld [vmem:[%s246 + $0x2e8] sm:$0xff]
        %v912 = vld [vmem:[%s246 + $0x2f0] sm:$0xff]
        %v913 = vld [vmem:[%s246 + $0x2f8] sm:$0xff]
        %v914 = vld [vmem:[%s246 + $0x300] sm:$0xff]
        %v915 = vld [vmem:[%s246 + $0x308] sm:$0xff]
        %v916 = vld [vmem:[%s246 + $0x310] sm:$0xff]
        %v917 = vld [vmem:[%s246 + $0x318] sm:$0xff]
        %v918 = vld [vmem:[%s246 + $0x320] sm:$0xff]
        %v919 = vld [vmem:[%s246 + $0x328] sm:$0xff]
        %v920 = vld [vmem:[%s246 + $0x330] sm:$0xff]
        %v921 = vld [vmem:[%s246 + $0x338] sm:$0xff]
        %v922 = vld [vmem:[%s246 + $0x340] sm:$0xff]
        %v923 = vld [vmem:[%s246 + $0x348] sm:$0xff]
        %v924 = vld [vmem:[%s246 + $0x350] sm:$0xff]
        %v925 = vld [vmem:[%s246 + $0x358] sm:$0xff]
        %v926 = vld [vmem:[%s246 + $0x360] sm:$0xff]
        %v927 = vld [vmem:[%s246 + $0x368] sm:$0xff]
        %v928 = vld [vmem:[%s246 + $0x370] sm:$0xff]
        %v929 = vld [vmem:[%s246 + $0x378] sm:$0xff]
        %v930 = vld [vmem:[%s246 + $0x380] sm:$0xff]
        %v931 = vld [vmem:[%s246 + $0x388] sm:$0xff]
        %v932 = vld [vmem:[%s246 + $0x390] sm:$0xff]
        %v933 = vld [vmem:[%s246 + $0x398] sm:$0xff]
        %v934 = vld [vmem:[%s246 + $0x3a0] sm:$0xff]
        %v935 = vld [vmem:[%s246 + $0x3a8] sm:$0xff]
        %v936 = vld [vmem:[%s246 + $0x3b0] sm:$0xff]
        %v937 = vld [vmem:[%s246 + $0x3b8] sm:$0xff]
        %v938 = vld [vmem:[%s246 + $0x3c0] sm:$0xff]
        %v939 = vld [vmem:[%s246 + $0x3c8] sm:$0xff]
        %v940 = vld [vmem:[%s246 + $0x3d0] sm:$0xff]
        %v941 = vld [vmem:[%s246 + $0x3d8] sm:$0xff]
        %v942 = vld [vmem:[%s246 + $0x3e0] sm:$0xff]
        %v943 = vld [vmem:[%s246 + $0x3e8] sm:$0xff]
        %v944 = vld [vmem:[%s246 + $0x3f0] sm:$0xff]
        %v945 = vld [vmem:[%s246 + $0x3f8] sm:$0xff]
        %v946 = vld [vmem:[%s246 + $0x400] sm:$0xff]
        %v947 = vld [vmem:[%s246 + $0x408] sm:$0xff]
        %v948 = vld [vmem:[%s246 + $0x410] sm:$0xff]
        %v949 = vld [vmem:[%s246 + $0x418] sm:$0xff]
        %v950 = vld [vmem:[%s246 + $0x420] sm:$0xff]
        %v951 = vld [vmem:[%s246 + $0x428] sm:$0xff]
        %v952 = vld [vmem:[%s246 + $0x430] sm:$0xff]
        %v953 = vld [vmem:[%s246 + $0x438] sm:$0xff]
        %v954 = vld [vmem:[%s246 + $0x440] sm:$0xff]
        %v955 = vld [vmem:[%s246 + $0x448] sm:$0xff]
        %v956 = vld [vmem:[%s246 + $0x450] sm:$0xff]
        %v957 = vld [vmem:[%s246 + $0x458] sm:$0xff]
        %v958 = vld [vmem:[%s246 + $0x460] sm:$0xff]
        %v959 = vld [vmem:[%s246 + $0x468] sm:$0xff]
        %v960 = vld [vmem:[%s246 + $0x470] sm:$0xff]
        %v961 = vld [vmem:[%s246 + $0x478] sm:$0xff]
        %v962 = vld [vmem:[%s246 + $0x480] sm:$0xff]
        %v963 = vld [vmem:[%s246 + $0x488] sm:$0xff]
        %v964 = vld [vmem:[%s246 + $0x490] sm:$0xff]
        %v965 = vld [vmem:[%s246 + $0x498] sm:$0xff]
        %v966 = vld [vmem:[%s246 + $0x4a0] sm:$0xff]
        %v967 = vld [vmem:[%s246 + $0x4a8] sm:$0xff]
        %v968 = vld [vmem:[%s246 + $0x4b0] sm:$0xff]
        %v969 = vld [vmem:[%s246 + $0x4b8] sm:$0xff]
        %v970 = vld [vmem:[%s246 + $0x4c0] sm:$0xff]
        %v971 = vld [vmem:[%s246 + $0x4c8] sm:$0xff]
        %v972 = vld [vmem:[%s246 + $0x4d0] sm:$0xff]
        %v973 = vld [vmem:[%s246 + $0x4d8] sm:$0xff]
        %v974 = vld [vmem:[%s246 + $0x4e0] sm:$0xff]
        %v975 = vld [vmem:[%s246 + $0x4e8] sm:$0xff]
        %v976 = vld [vmem:[%s246 + $0x4f0] sm:$0xff]
        %v977 = vld [vmem:[%s246 + $0x4f8] sm:$0xff]
        %v978 = vld [vmem:[%s246 + $0x500] sm:$0xff]
        %v979 = vld [vmem:[%s246 + $0x508] sm:$0xff]
        %v980 = vld [vmem:[%s246 + $0x510] sm:$0xff]
        %v981 = vld [vmem:[%s246 + $0x518] sm:$0xff]
        %v982 = vld [vmem:[%s246 + $0x520] sm:$0xff]
        %v983 = vld [vmem:[%s246 + $0x528] sm:$0xff]
        %v984 = vld [vmem:[%s246 + $0x530] sm:$0xff]
        %v985 = vld [vmem:[%s246 + $0x538] sm:$0xff]
        %v986 = vld [vmem:[%s246 + $0x540] sm:$0xff]
        %v987 = vld [vmem:[%s246 + $0x548] sm:$0xff]
        %v988 = vld [vmem:[%s246 + $0x550] sm:$0xff]
        %v989 = vld [vmem:[%s246 + $0x558] sm:$0xff]
        %v990 = vld [vmem:[%s246 + $0x560] sm:$0xff]
        %v991 = vld [vmem:[%s246 + $0x568] sm:$0xff]
        %v992 = vld [vmem:[%s246 + $0x570] sm:$0xff]
        %v993 = vld [vmem:[%s246 + $0x578] sm:$0xff]
        %v994 = vld [vmem:[%s246 + $0x580] sm:$0xff]
        %v995 = vld [vmem:[%s246 + $0x588] sm:$0xff]
        %v996 = vld [vmem:[%s246 + $0x590] sm:$0xff]
        %v997 = vld [vmem:[%s246 + $0x598] sm:$0xff]
        %v998 = vld [vmem:[%s246 + $0x5a0] sm:$0xff]
        %v999 = vld [vmem:[%s246 + $0x5a8] sm:$0xff]
        %v1000 = vld [vmem:[%s246 + $0x5b0] sm:$0xff]
        %v1001 = vld [vmem:[%s246 + $0x5b8] sm:$0xff]
        %v1002 = vld [vmem:[%s246 + $0x5c0] sm:$0xff]
        %v1003 = vld [vmem:[%s246 + $0x5c8] sm:$0xff]
        %v1004 = vld [vmem:[%s246 + $0x5d0] sm:$0xff]
        %v1005 = vld [vmem:[%s246 + $0x5d8] sm:$0xff]
        %v1006 = vld [vmem:[%s246 + $0x5e0] sm:$0xff]
        %v1007 = vld [vmem:[%s246 + $0x5e8] sm:$0xff]
        %v1008 = vld [vmem:[%s246 + $0x5f0] sm:$0xff]
        %v1009 = vld [vmem:[%s246 + $0x5f8] sm:$0xff]
        %v1010 = vld [vmem:[%s246 + $0x600] sm:$0xff]
        %v1011 = vld [vmem:[%s246 + $0x608] sm:$0xff]
        %v1012 = vld [vmem:[%s246 + $0x610] sm:$0xff]
        %v1013 = vld [vmem:[%s246 + $0x618] sm:$0xff]
        %v1014 = vld [vmem:[%s246 + $0x620] sm:$0xff]
        %v1015 = vld [vmem:[%s246 + $0x628] sm:$0xff]
        %v1016 = vld [vmem:[%s246 + $0x630] sm:$0xff]
        %v1017 = vld [vmem:[%s246 + $0x638] sm:$0xff]
        %v1018 = vld [vmem:[%s246 + $0x640] sm:$0xff]
        %v1019 = vld [vmem:[%s246 + $0x648] sm:$0xff]
        %v1020 = vld [vmem:[%s246 + $0x650] sm:$0xff]
        %v1021 = vld [vmem:[%s246 + $0x658] sm:$0xff]
        %v1022 = vld [vmem:[%s246 + $0x660] sm:$0xff]
        %v1023 = vld [vmem:[%s246 + $0x668] sm:$0xff]
        %v1024 = vld [vmem:[%s246 + $0x670] sm:$0xff]
        %v1025 = vld [vmem:[%s246 + $0x678] sm:$0xff]
        %v1026 = vld [vmem:[%s246 + $0x680] sm:$0xff]
        %v1027 = vld [vmem:[%s246 + $0x688] sm:$0xff]
        %v1028 = vld [vmem:[%s246 + $0x690] sm:$0xff]
        %v1029 = vld [vmem:[%s246 + $0x698] sm:$0xff]
        %v1030 = vld [vmem:[%s246 + $0x6a0] sm:$0xff]
        %v1031 = vld [vmem:[%s246 + $0x6a8] sm:$0xff]
        %v1032 = vld [vmem:[%s246 + $0x6b0] sm:$0xff]
        %v1033 = vld [vmem:[%s246 + $0x6b8] sm:$0xff]
        %v1034 = vld [vmem:[%s246 + $0x6c0] sm:$0xff]
        %v1035 = vld [vmem:[%s246 + $0x6c8] sm:$0xff]
        %v1036 = vld [vmem:[%s246 + $0x6d0] sm:$0xff]
        %v1037 = vld [vmem:[%s246 + $0x6d8] sm:$0xff]
        %v1038 = vld [vmem:[%s246 + $0x6e0] sm:$0xff]
        %v1039 = vld [vmem:[%s246 + $0x6e8] sm:$0xff]
        %v1040 = vld [vmem:[%s246 + $0x6f0] sm:$0xff]
        %v1041 = vld [vmem:[%s246 + $0x6f8] sm:$0xff]
        %v1042 = vld [vmem:[%s246 + $0x700] sm:$0xff]
        %v1043 = vld [vmem:[%s246 + $0x708] sm:$0xff]
        %v1044 = vld [vmem:[%s246 + $0x710] sm:$0xff]
        %v1045 = vld [vmem:[%s246 + $0x718] sm:$0xff]
        %v1046 = vld [vmem:[%s246 + $0x720] sm:$0xff]
        %v1047 = vld [vmem:[%s246 + $0x728] sm:$0xff]
        %v1048 = vld [vmem:[%s246 + $0x730] sm:$0xff]
        %v1049 = vld [vmem:[%s246 + $0x738] sm:$0xff]
        %v1050 = vld [vmem:[%s246 + $0x740] sm:$0xff]
        %v1051 = vld [vmem:[%s246 + $0x748] sm:$0xff]
        %v1052 = vld [vmem:[%s246 + $0x750] sm:$0xff]
        %v1053 = vld [vmem:[%s246 + $0x758] sm:$0xff]
        %v1054 = vld [vmem:[%s246 + $0x760] sm:$0xff]
        %v1055 = vld [vmem:[%s246 + $0x768] sm:$0xff]
        %v1056 = vld [vmem:[%s246 + $0x770] sm:$0xff]
        %v1057 = vld [vmem:[%s246 + $0x778] sm:$0xff]
        %v1058 = vld [vmem:[%s246 + $0x780] sm:$0xff]
        %v1059 = vld [vmem:[%s246 + $0x788] sm:$0xff]
        %v1060 = vld [vmem:[%s246 + $0x790] sm:$0xff]
        %v1061 = vld [vmem:[%s246 + $0x798] sm:$0xff]
        %v1062 = vld [vmem:[%s246 + $0x7a0] sm:$0xff]
        %v1063 = vld [vmem:[%s246 + $0x7a8] sm:$0xff]
        %v1064 = vld [vmem:[%s246 + $0x7b0] sm:$0xff]
        %v1065 = vld [vmem:[%s246 + $0x7b8] sm:$0xff]
        %v1066 = vld [vmem:[%s246 + $0x7c0] sm:$0xff]
        %v1067 = vld [vmem:[%s246 + $0x7c8] sm:$0xff]
        %v1068 = vld [vmem:[%s246 + $0x7d0] sm:$0xff]
        %v1069 = vld [vmem:[%s246 + $0x7d8] sm:$0xff]
        %v1070 = vld [vmem:[%s246 + $0x7e0] sm:$0xff]
        %v1071 = vld [vmem:[%s246 + $0x7e8] sm:$0xff]
        %v1072 = vld [vmem:[%s246 + $0x7f0] sm:$0xff]
        %v1073 = vld [vmem:[%s246 + $0x7f8] sm:$0xff]
        %v1074 = vld [vmem:[%s246 + $0x800] sm:$0xff]
        %v1075 = vld [vmem:[%s246 + $0x808] sm:$0xff]
        %v1076 = vld [vmem:[%s246 + $0x810] sm:$0xff]
        %v1077 = vld [vmem:[%s246 + $0x818] sm:$0xff]
        %v1078 = vld [vmem:[%s246 + $0x820] sm:$0xff]
        %v1079 = vld [vmem:[%s246 + $0x828] sm:$0xff]
        %v1080 = vld [vmem:[%s246 + $0x830] sm:$0xff]
        %v1081 = vld [vmem:[%s246 + $0x838] sm:$0xff]
        %v1082 = vld [vmem:[%s246 + $0x840] sm:$0xff]
        %v1083 = vld [vmem:[%s246 + $0x848] sm:$0xff]
        %v1084 = vld [vmem:[%s246 + $0x850] sm:$0xff]
        %v1085 = vld [vmem:[%s246 + $0x858] sm:$0xff]
        %v1086 = vld [vmem:[%s246 + $0x860] sm:$0xff]
        %v1087 = vld [vmem:[%s246 + $0x868] sm:$0xff]
        %v1088 = vld [vmem:[%s246 + $0x870] sm:$0xff]
        %v1089 = vld [vmem:[%s246 + $0x878] sm:$0xff]
        %v1090 = vld [vmem:[%s246 + $0x880] sm:$0xff]
        %v1091 = vld [vmem:[%s246 + $0x888] sm:$0xff]
        %v1092 = vld [vmem:[%s246 + $0x890] sm:$0xff]
        %v1093 = vld [vmem:[%s246 + $0x898] sm:$0xff]
        %v1094 = vld [vmem:[%s246 + $0x8a0] sm:$0xff]
        %v1095 = vld [vmem:[%s246 + $0x8a8] sm:$0xff]
        %v1096 = vld [vmem:[%s246 + $0x8b0] sm:$0xff]
        %v1097 = vld [vmem:[%s246 + $0x8b8] sm:$0xff]
        %v1098 = vld [vmem:[%s246 + $0x8c0] sm:$0xff]
        %v1099 = vld [vmem:[%s246 + $0x8c8] sm:$0xff]
        %v1100 = vld [vmem:[%s246 + $0x8d0] sm:$0xff]
        %v1101 = vld [vmem:[%s246 + $0x8d8] sm:$0xff]
        %v1102 = vld [vmem:[%s246 + $0x8e0] sm:$0xff]
        %v1103 = vld [vmem:[%s246 + $0x8e8] sm:$0xff]
        %v1104 = vld [vmem:[%s246 + $0x8f0] sm:$0xff]
        %v1105 = vld [vmem:[%s246 + $0x8f8] sm:$0xff]
        %v1106 = vld [vmem:[%s246 + $0x900] sm:$0xff]
        %v1107 = vld [vmem:[%s246 + $0x908] sm:$0xff]
        %v1108 = vld [vmem:[%s246 + $0x910] sm:$0xff]
        %v1109 = vld [vmem:[%s246 + $0x918] sm:$0xff]
        %v1110 = vld [vmem:[%s246 + $0x920] sm:$0xff]
        %v1111 = vld [vmem:[%s246 + $0x928] sm:$0xff]
        %v1112 = vld [vmem:[%s246 + $0x930] sm:$0xff]
        %v1113 = vld [vmem:[%s246 + $0x938] sm:$0xff]
        %v1114 = vld [vmem:[%s246 + $0x940] sm:$0xff]
        %v1115 = vld [vmem:[%s246 + $0x948] sm:$0xff]
        %v1116 = vld [vmem:[%s246 + $0x950] sm:$0xff]
        %v1117 = vld [vmem:[%s246 + $0x958] sm:$0xff]
        %v1118 = vld [vmem:[%s246 + $0x960] sm:$0xff]
        %v1119 = vld [vmem:[%s246 + $0x968] sm:$0xff]
        %v1120 = vld [vmem:[%s246 + $0x970] sm:$0xff]
        %v1121 = vld [vmem:[%s246 + $0x978] sm:$0xff]
        %v1122 = vld [vmem:[%s246 + $0x980] sm:$0xff]
        %v1123 = vld [vmem:[%s246 + $0x988] sm:$0xff]
        %v1124 = vld [vmem:[%s246 + $0x990] sm:$0xff]
        %v1125 = vld [vmem:[%s246 + $0x998] sm:$0xff]
        %v1126 = vld [vmem:[%s246 + $0x9a0] sm:$0xff]
        %v1127 = vld [vmem:[%s246 + $0x9a8] sm:$0xff]
        %v1128 = vld [vmem:[%s246 + $0x9b0] sm:$0xff]
        %v1129 = vld [vmem:[%s246 + $0x9b8] sm:$0xff]
        %v1130 = vld [vmem:[%s246 + $0x9c0] sm:$0xff]
        %v1131 = vld [vmem:[%s246 + $0x9c8] sm:$0xff]
        %v1132 = vld [vmem:[%s246 + $0x9d0] sm:$0xff]
        %v1133 = vld [vmem:[%s246 + $0x9d8] sm:$0xff]
        %v1134 = vld [vmem:[%s246 + $0x9e0] sm:$0xff]
        %v1135 = vld [vmem:[%s246 + $0x9e8] sm:$0xff]
        %v1136 = vld [vmem:[%s246 + $0x9f0] sm:$0xff]
        %v1137 = vld [vmem:[%s246 + $0x9f8] sm:$0xff]
        %v1138 = vld [vmem:[%s246 + $0xa00] sm:$0xff]
        %v1139 = vld [vmem:[%s246 + $0xa08] sm:$0xff]
        %v1140 = vld [vmem:[%s246 + $0xa10] sm:$0xff]
        %v1141 = vld [vmem:[%s246 + $0xa18] sm:$0xff]
        %v1142 = vld [vmem:[%s246 + $0xa20] sm:$0xff]
        %v1143 = vld [vmem:[%s246 + $0xa28] sm:$0xff]
        %v1144 = vld [vmem:[%s246 + $0xa30] sm:$0xff]
        %v1145 = vld [vmem:[%s246 + $0xa38] sm:$0xff]
        %v1146 = vld [vmem:[%s246 + $0xa40] sm:$0xff]
        %v1147 = vld [vmem:[%s246 + $0xa48] sm:$0xff]
        %v1148 = vld [vmem:[%s246 + $0xa50] sm:$0xff]
        %v1149 = vld [vmem:[%s246 + $0xa58] sm:$0xff]
        %v1150 = vld [vmem:[%s246 + $0xa60] sm:$0xff]
        %v1151 = vld [vmem:[%s246 + $0xa68] sm:$0xff]
        %v1152 = vld [vmem:[%s246 + $0xa70] sm:$0xff]
        %v1153 = vld [vmem:[%s246 + $0xa78] sm:$0xff]
        %v1154 = vld [vmem:[%s246 + $0xa80] sm:$0xff]
        %v1155 = vld [vmem:[%s246 + $0xa88] sm:$0xff]
        %v1156 = vld [vmem:[%s246 + $0xa90] sm:$0xff]
        %v1157 = vld [vmem:[%s246 + $0xa98] sm:$0xff]
        %v1158 = vld [vmem:[%s246 + $0xaa0] sm:$0xff]
        %v1159 = vld [vmem:[%s246 + $0xaa8] sm:$0xff]
        %v1160 = vld [vmem:[%s246 + $0xab0] sm:$0xff]
        %v1161 = vld [vmem:[%s246 + $0xab8] sm:$0xff]
        %v1162 = vld [vmem:[%s246 + $0xac0] sm:$0xff]
        %v1163 = vld [vmem:[%s246 + $0xac8] sm:$0xff]
        %v1164 = vld [vmem:[%s246 + $0xad0] sm:$0xff]
        %v1165 = vld [vmem:[%s246 + $0xad8] sm:$0xff]
        %v1166 = vld [vmem:[%s246 + $0xae0] sm:$0xff]
        %v1167 = vld [vmem:[%s246 + $0xae8] sm:$0xff]
        %v1168 = vld [vmem:[%s246 + $0xaf0] sm:$0xff]
        %v1169 = vld [vmem:[%s246 + $0xaf8] sm:$0xff]
        %v1170 = vld [vmem:[%s246 + $0xb00] sm:$0xff]
        %v1171 = vld [vmem:[%s246 + $0xb08] sm:$0xff]
        %v1172 = vld [vmem:[%s246 + $0xb10] sm:$0xff]
        %v1173 = vld [vmem:[%s246 + $0xb18] sm:$0xff]
        %v1174 = vld [vmem:[%s246 + $0xb20] sm:$0xff]
        %v1175 = vld [vmem:[%s246 + $0xb28] sm:$0xff]
        %v1176 = vld [vmem:[%s246 + $0xb30] sm:$0xff]
        %v1177 = vld [vmem:[%s246 + $0xb38] sm:$0xff]
        %v1178 = vld [vmem:[%s246 + $0xb40] sm:$0xff]
        %v1179 = vld [vmem:[%s246 + $0xb48] sm:$0xff]
        %v1180 = vld [vmem:[%s246 + $0xb50] sm:$0xff]
        %v1181 = vld [vmem:[%s246 + $0xb58] sm:$0xff]
        %v1182 = vld [vmem:[%s246 + $0xb60] sm:$0xff]
        %v1183 = vld [vmem:[%s246 + $0xb68] sm:$0xff]
        %v1184 = vld [vmem:[%s246 + $0xb70] sm:$0xff]
        %v1185 = vld [vmem:[%s246 + $0xb78] sm:$0xff]
        %v1186 = vld [vmem:[%s246 + $0xb80] sm:$0xff]
        %v1187 = vld [vmem:[%s246 + $0xb88] sm:$0xff]
        %v1188 = vld [vmem:[%s246 + $0xb90] sm:$0xff]
        %v1189 = vld [vmem:[%s246 + $0xb98] sm:$0xff]
        %v1190 = vld [vmem:[%s246 + $0xba0] sm:$0xff]
        %v1191 = vld [vmem:[%s246 + $0xba8] sm:$0xff]
        %v1192 = vld [vmem:[%s246 + $0xbb0] sm:$0xff]
        %v1193 = vld [vmem:[%s246 + $0xbb8] sm:$0xff]
        %v1194 = vld [vmem:[%s246 + $0xbc0] sm:$0xff]
        %v1195 = vld [vmem:[%s246 + $0xbc8] sm:$0xff]
        %v1196 = vld [vmem:[%s246 + $0xbd0] sm:$0xff]
        %v1197 = vld [vmem:[%s246 + $0xbd8] sm:$0xff]
        %v1198 = vld [vmem:[%s246 + $0xbe0] sm:$0xff]
        %v1199 = vld [vmem:[%s246 + $0xbe8] sm:$0xff]
        %v1200 = vld [vmem:[%s246 + $0xbf0] sm:$0xff]
        %v1201 = vld [vmem:[%s246 + $0xbf8] sm:$0xff]
        %v1202 = vld [vmem:[%s246 + $0xc00] sm:$0xff]
        %v1203 = vld [vmem:[%s246 + $0xc08] sm:$0xff]
        %v1204 = vld [vmem:[%s246 + $0xc10] sm:$0xff]
        %v1205 = vld [vmem:[%s246 + $0xc18] sm:$0xff]
        %v1206 = vld [vmem:[%s246 + $0xc20] sm:$0xff]
        %v1207 = vld [vmem:[%s246 + $0xc28] sm:$0xff]
        %v1208 = vld [vmem:[%s246 + $0xc30] sm:$0xff]
        %v1209 = vld [vmem:[%s246 + $0xc38] sm:$0xff]
        %v1210 = vld [vmem:[%s246 + $0xc40] sm:$0xff]
        %v1211 = vld [vmem:[%s246 + $0xc48] sm:$0xff]
        %v1212 = vld [vmem:[%s246 + $0xc50] sm:$0xff]
        %v1213 = vld [vmem:[%s246 + $0xc58] sm:$0xff]
        %v1214 = vld [vmem:[%s246 + $0xc60] sm:$0xff]
        %v1215 = vld [vmem:[%s246 + $0xc68] sm:$0xff]
        %v1216 = vld [vmem:[%s246 + $0xc70] sm:$0xff]
        %v1217 = vld [vmem:[%s246 + $0xc78] sm:$0xff]
        %v1218 = vld [vmem:[%s246 + $0xc80] sm:$0xff]
        %v1219 = vld [vmem:[%s246 + $0xc88] sm:$0xff]
        %v1220 = vld [vmem:[%s246 + $0xc90] sm:$0xff]
        %v1221 = vld [vmem:[%s246 + $0xc98] sm:$0xff]
        %v1222 = vld [vmem:[%s246 + $0xca0] sm:$0xff]
        %v1223 = vld [vmem:[%s246 + $0xca8] sm:$0xff]
        %v1224 = vld [vmem:[%s246 + $0xcb0] sm:$0xff]
        %v1225 = vld [vmem:[%s246 + $0xcb8] sm:$0xff]
        %v1226 = vld [vmem:[%s246 + $0xcc0] sm:$0xff]
        %v1227 = vld [vmem:[%s246 + $0xcc8] sm:$0xff]
        %v1228 = vld [vmem:[%s246 + $0xcd0] sm:$0xff]
        %v1229 = vld [vmem:[%s246 + $0xcd8] sm:$0xff]
        %v1230 = vld [vmem:[%s246 + $0xce0] sm:$0xff]
        %v1231 = vld [vmem:[%s246 + $0xce8] sm:$0xff]
        %v1232 = vld [vmem:[%s246 + $0xcf0] sm:$0xff]
        %v1233 = vld [vmem:[%s246 + $0xcf8] sm:$0xff]
        %v1234 = vld [vmem:[%s246 + $0xd00] sm:$0xff]
        %v1235 = vld [vmem:[%s246 + $0xd08] sm:$0xff]
        %v1236 = vld [vmem:[%s246 + $0xd10] sm:$0xff]
        %v1237 = vld [vmem:[%s246 + $0xd18] sm:$0xff]
        %v1238 = vld [vmem:[%s246 + $0xd20] sm:$0xff]
        %v1239 = vld [vmem:[%s246 + $0xd28] sm:$0xff]
        %v1240 = vld [vmem:[%s246 + $0xd30] sm:$0xff]
        %v1241 = vld [vmem:[%s246 + $0xd38] sm:$0xff]
        %v1242 = vld [vmem:[%s246 + $0xd40] sm:$0xff]
        %v1243 = vld [vmem:[%s246 + $0xd48] sm:$0xff]
        %v1244 = vld [vmem:[%s246 + $0xd50] sm:$0xff]
        %v1245 = vld [vmem:[%s246 + $0xd58] sm:$0xff]
        %v1246 = vld [vmem:[%s246 + $0xd60] sm:$0xff]
        %v1247 = vld [vmem:[%s246 + $0xd68] sm:$0xff]
        %v1248 = vld [vmem:[%s246 + $0xd70] sm:$0xff]
        %v1249 = vld [vmem:[%s246 + $0xd78] sm:$0xff]
        %v1250 = vld [vmem:[%s246 + $0xd80] sm:$0xff]
        %v1251 = vld [vmem:[%s246 + $0xd88] sm:$0xff]
        %v1252 = vld [vmem:[%s246 + $0xd90] sm:$0xff]
        %v1253 = vld [vmem:[%s246 + $0xd98] sm:$0xff]
        %v1254 = vld [vmem:[%s246 + $0xda0] sm:$0xff]
        %v1255 = vld [vmem:[%s246 + $0xda8] sm:$0xff]
        %v1256 = vld [vmem:[%s246 + $0xdb0] sm:$0xff]
        %v1257 = vld [vmem:[%s246 + $0xdb8] sm:$0xff]
        %v1258 = vld [vmem:[%s246 + $0xdc0] sm:$0xff]
        %v1259 = vld [vmem:[%s246 + $0xdc8] sm:$0xff]
        %v1260 = vld [vmem:[%s246 + $0xdd0] sm:$0xff]
        %v1261 = vld [vmem:[%s246 + $0xdd8] sm:$0xff]
        %v1262 = vld [vmem:[%s246 + $0xde0] sm:$0xff]
        %v1263 = vld [vmem:[%s246 + $0xde8] sm:$0xff]
        %v1264 = vld [vmem:[%s246 + $0xdf0] sm:$0xff]
        %v1265 = vld [vmem:[%s246 + $0xdf8] sm:$0xff]
        %v1266 = vld [vmem:[%s246 + $0xe00] sm:$0xff]
        %v1267 = vld [vmem:[%s246 + $0xe08] sm:$0xff]
        %v1268 = vld [vmem:[%s246 + $0xe10] sm:$0xff]
        %v1269 = vld [vmem:[%s246 + $0xe18] sm:$0xff]
        %v1270 = vld [vmem:[%s246 + $0xe20] sm:$0xff]
        %v1271 = vld [vmem:[%s246 + $0xe28] sm:$0xff]
        %v1272 = vld [vmem:[%s246 + $0xe30] sm:$0xff]
        %v1273 = vld [vmem:[%s246 + $0xe38] sm:$0xff]
        %v1274 = vld [vmem:[%s246 + $0xe40] sm:$0xff]
        %v1275 = vld [vmem:[%s246 + $0xe48] sm:$0xff]
        %v1276 = vld [vmem:[%s246 + $0xe50] sm:$0xff]
        %v1277 = vld [vmem:[%s246 + $0xe58] sm:$0xff]
        %v1278 = vld [vmem:[%s246 + $0xe60] sm:$0xff]
        %v1279 = vld [vmem:[%s246 + $0xe68] sm:$0xff]
        %v1280 = vld [vmem:[%s246 + $0xe70] sm:$0xff]
        %v1281 = vld [vmem:[%s246 + $0xe78] sm:$0xff]
        %v1282 = vld [vmem:[%s246 + $0xe80] sm:$0xff]
        %v1283 = vld [vmem:[%s246 + $0xe88] sm:$0xff]
        %v1284 = vld [vmem:[%s246 + $0xe90] sm:$0xff]
        %v1285 = vld [vmem:[%s246 + $0xe98] sm:$0xff]
        %v1286 = vld [vmem:[%s246 + $0xea0] sm:$0xff]
        %v1287 = vld [vmem:[%s246 + $0xea8] sm:$0xff]
        %v1288 = vld [vmem:[%s246 + $0xeb0] sm:$0xff]
        %v1289 = vld [vmem:[%s246 + $0xeb8] sm:$0xff]
        %v1290 = vld [vmem:[%s246 + $0xec0] sm:$0xff]
        %v1291 = vld [vmem:[%s246 + $0xec8] sm:$0xff]
        %v1292 = vld [vmem:[%s246 + $0xed0] sm:$0xff]
        %v1293 = vld [vmem:[%s246 + $0xed8] sm:$0xff]
        %v1294 = vld [vmem:[%s246 + $0xee0] sm:$0xff]
        %v1295 = vld [vmem:[%s246 + $0xee8] sm:$0xff]
        %v1296 = vld [vmem:[%s246 + $0xef0] sm:$0xff]
        %v1297 = vld [vmem:[%s246 + $0xef8] sm:$0xff]
        %v1298 = vld [vmem:[%s246 + $0xf00] sm:$0xff]
        %v1299 = vld [vmem:[%s246 + $0xf08] sm:$0xff]
        %v1300 = vld [vmem:[%s246 + $0xf10] sm:$0xff]
        %v1301 = vld [vmem:[%s246 + $0xf18] sm:$0xff]
        %v1302 = vld [vmem:[%s246 + $0xf20] sm:$0xff]
        %v1303 = vld [vmem:[%s246 + $0xf28] sm:$0xff]
        %v1304 = vld [vmem:[%s246 + $0xf30] sm:$0xff]
        %v1305 = vld [vmem:[%s246 + $0xf38] sm:$0xff]
        %v1306 = vld [vmem:[%s246 + $0xf40] sm:$0xff]
        %v1307 = vld [vmem:[%s246 + $0xf48] sm:$0xff]
        %v1308 = vld [vmem:[%s246 + $0xf50] sm:$0xff]
        %v1309 = vld [vmem:[%s246 + $0xf58] sm:$0xff]
        %v1310 = vld [vmem:[%s246 + $0xf60] sm:$0xff]
        %v1311 = vld [vmem:[%s246 + $0xf68] sm:$0xff]
        %v1312 = vld [vmem:[%s246 + $0xf70] sm:$0xff]
        %v1313 = vld [vmem:[%s246 + $0xf78] sm:$0xff]
        %v1314 = vld [vmem:[%s246 + $0xf80] sm:$0xff]
        %v1315 = vld [vmem:[%s246 + $0xf88] sm:$0xff]
        %v1316 = vld [vmem:[%s246 + $0xf90] sm:$0xff]
        %v1317 = vld [vmem:[%s246 + $0xf98] sm:$0xff]
        %v1318 = vld [vmem:[%s246 + $0xfa0] sm:$0xff]
        %v1319 = vld [vmem:[%s246 + $0xfa8] sm:$0xff]
        %v1320 = vld [vmem:[%s246 + $0xfb0] sm:$0xff]
        %v1321 = vld [vmem:[%s246 + $0xfb8] sm:$0xff]
        %v1322 = vld [vmem:[%s246 + $0xfc0] sm:$0xff]
        %v1323 = vld [vmem:[%s246 + $0xfc8] sm:$0xff]
        %v1324 = vld [vmem:[%s246 + $0xfd0] sm:$0xff]
        %v1325 = vld [vmem:[%s246 + $0xfd8] sm:$0xff]
        %v1326 = vld [vmem:[%s246 + $0xfe0] sm:$0xff]
        %v1327 = vld [vmem:[%s246 + $0xfe8] sm:$0xff]
        %v1328 = vld [vmem:[%s246 + $0xff0] sm:$0xff]
        %v1329 = vld [vmem:[%s246 + $0xff8] sm:$0xff]
        %1330 = vmatprep.subr.mxu0 %v939
        %1331 = vmatpush1.xpose.msra.mxu0 %v938
        %1332 = vmatprep.subr.mxu0 %v931
        %1333 = vmatpush1.xpose.msra.mxu0 %v930
        %1334 = vmatprep.subr.mxu0 %v923
        %1335 = vmatpush1.xpose.msra.mxu0 %v922
        %1336 = vmatprep.subr.mxu0 %v915
        %1337 = vmatpush1.xpose.msra.mxu0 %v914
        %1338 = vmatprep.subr.mxu0 %v907
        %1339 = vmatpush1.xpose.msra.mxu0 %v906
        %1340 = vmatprep.subr.mxu0 %v899
        %1341 = vmatpush1.xpose.msra.mxu0 %v898
        %1342 = vmatprep.subr.mxu0 %v891
        %1343 = vmatpush1.xpose.msra.mxu0 %v890
        %1344 = vmatprep.subr.mxu0 %v883
        %1345 = vmatpush1.xpose.msra.mxu0 %v882
        %1346 = vmatprep.subr.mxu0 %v875
        %1347 = vmatpush1.xpose.msra.mxu0 %v874
        %1348 = vmatprep.subr.mxu0 %v867
        %1349 = vmatpush1.xpose.msra.mxu0 %v866
        %1350 = vmatprep.subr.mxu0 %v859
        %1351 = vmatpush1.xpose.msra.mxu0 %v858
        %1352 = vmatprep.subr.mxu0 %v851
        %1353 = vmatpush1.xpose.msra.mxu0 %v850
        %1354 = vmatprep.subr.mxu0 %v843
        %1355 = vmatpush1.xpose.msra.mxu0 %v842
        %1356 = vmatprep.subr.mxu0 %v835
        %1357 = vmatpush1.xpose.msra.mxu0 %v834
        %1358 = vmatprep.subr.mxu0 %v827
        %1359 = vmatpush1.xpose.msra.mxu0 %v826
        %1360 = vmatprep.subr.mxu0 %v819
        %1361 = vmatpush1.xpose.msra.mxu0 %v818
        %1362 = vmatprep.subr.mxu0 %v1067
        %1363 = vmatpush2.xpose.msra.mxu0 %v1066
        %1364 = vmatprep.subr.mxu0 %v1059
        %1365 = vmatpush2.xpose.msra.mxu0 %v1058
        %1366 = vmatprep.subr.mxu0 %v1051
        %1367 = vmatpush2.xpose.msra.mxu0 %v1050
        %1368 = vmatprep.subr.mxu0 %v1043
        %1369 = vmatpush2.xpose.msra.mxu0 %v1042
        %1370 = vmatprep.subr.mxu0 %v1035
        %1371 = vmatpush2.xpose.msra.mxu0 %v1034
        %1372 = vmatprep.subr.mxu0 %v1027
        %1373 = vmatpush2.xpose.msra.mxu0 %v1026
        %1374 = vmatprep.subr.mxu0 %v1019
        %1375 = vmatpush2.xpose.msra.mxu0 %v1018
        %1376 = vmatprep.subr.mxu0 %v1011
        %1377 = vmatpush2.xpose.msra.mxu0 %v1010
        %1378 = vmatprep.subr.mxu0 %v1003
        %1379 = vmatpush2.xpose.msra.mxu0 %v1002
        %1380 = vmatprep.subr.mxu0 %v995
        %1381 = vmatpush2.xpose.msra.mxu0 %v994
        %1382 = vmatprep.subr.mxu0 %v987
        %1383 = vmatpush2.xpose.msra.mxu0 %v986
        %1384 = vmatprep.subr.mxu0 %v979
        %1385 = vmatpush2.xpose.msra.mxu0 %v978
        %1386 = vmatprep.subr.mxu0 %v971
        %1387 = vmatpush2.xpose.msra.mxu0 %v970
        %1388 = vmatprep.subr.mxu0 %v963
        %1389 = vmatpush2.xpose.msra.mxu0 %v962
        %1390 = vmatprep.subr.mxu0 %v955
        %1391 = vmatpush2.xpose.msra.mxu0 %v954
        %1392 = vmatprep.subr.mxu0 %v947
        %1393 = vmatpush2.xpose.msra.mxu0 %v946
        %1394 = vmatprep.mubr.f32.mxu0 %v563
        %1395 = vmatmul.mubr.f32.gmra.mxu0 %v562
        %v1396 = vpop.f32.mrf.mxu0
        %v1397 = vadd.f32 0.0, %v1396
        %v1398 = vpop.f32.mrf.mxu0
        %v1399 = vadd.f32 0.0, %v1398
        %1400 = vmatprep.mubr.f32.mxu0 %v571
        %1401 = vmatmul.mubr.f32.gmra.mxu0 %v570
        %v1402 = vpop.f32.mrf.mxu0
        %v1403 = vadd.f32 0.0, %v1402
        %v1404 = vpop.f32.mrf.mxu0
        %v1405 = vadd.f32 0.0, %v1404
        %1406 = vmatprep.mubr.f32.mxu0 %v579
        %1407 = vmatmul.mubr.f32.gmra.mxu0 %v578
        %v1408 = vpop.f32.mrf.mxu0
        %v1409 = vadd.f32 0.0, %v1408
        %v1410 = vpop.f32.mrf.mxu0
        %v1411 = vadd.f32 0.0, %v1410
        %1412 = vmatprep.mubr.f32.mxu0 %v587
        %1413 = vmatmul.mubr.f32.gmra.mxu0 %v586
        %v1414 = vpop.f32.mrf.mxu0
        %v1415 = vadd.f32 0.0, %v1414
        %v1416 = vpop.f32.mrf.mxu0
        %v1417 = vadd.f32 0.0, %v1416
        %1418 = vmatprep.mubr.f32.mxu0 %v595
        %1419 = vmatmul.mubr.f32.gmra.mxu0 %v594
        %v1420 = vpop.f32.mrf.mxu0
        %v1421 = vadd.f32 0.0, %v1420
        %v1422 = vpop.f32.mrf.mxu0
        %v1423 = vadd.f32 0.0, %v1422
        %1424 = vmatprep.mubr.f32.mxu0 %v603
        %1425 = vmatmul.mubr.f32.gmra.mxu0 %v602
        %v1426 = vpop.f32.mrf.mxu0
        %v1427 = vadd.f32 0.0, %v1426
        %v1428 = vpop.f32.mrf.mxu0
        %v1429 = vadd.f32 0.0, %v1428
        %1430 = vmatprep.mubr.f32.mxu0 %v611
        %1431 = vmatmul.mubr.f32.gmra.mxu0 %v610
        %v1432 = vpop.f32.mrf.mxu0
        %v1433 = vadd.f32 0.0, %v1432
        %v1434 = vpop.f32.mrf.mxu0
        %v1435 = vadd.f32 0.0, %v1434
        %1436 = vmatprep.mubr.f32.mxu0 %v619
        %1437 = vmatmul.mubr.f32.gmra.mxu0 %v618
        %v1438 = vpop.f32.mrf.mxu0
        %v1439 = vadd.f32 0.0, %v1438
        %v1440 = vpop.f32.mrf.mxu0
        %v1441 = vadd.f32 0.0, %v1440
        %1442 = vmatprep.mubr.f32.mxu0 %v627
        %1443 = vmatmul.mubr.f32.gmra.mxu0 %v626
        %v1444 = vpop.f32.mrf.mxu0
        %v1445 = vadd.f32 0.0, %v1444
        %v1446 = vpop.f32.mrf.mxu0
        %v1447 = vadd.f32 0.0, %v1446
        %1448 = vmatprep.mubr.f32.mxu0 %v635
        %1449 = vmatmul.mubr.f32.gmra.mxu0 %v634
        %v1450 = vpop.f32.mrf.mxu0
        %v1451 = vadd.f32 0.0, %v1450
        %v1452 = vpop.f32.mrf.mxu0
        %v1453 = vadd.f32 0.0, %v1452
        %1454 = vmatprep.mubr.f32.mxu0 %v643
        %1455 = vmatmul.mubr.f32.gmra.mxu0 %v642
        %v1456 = vpop.f32.mrf.mxu0
        %v1457 = vadd.f32 0.0, %v1456
        %v1458 = vpop.f32.mrf.mxu0
        %v1459 = vadd.f32 0.0, %v1458
        %1460 = vmatprep.mubr.f32.mxu0 %v651
        %1461 = vmatmul.mubr.f32.gmra.mxu0 %v650
        %v1462 = vpop.f32.mrf.mxu0
        %v1463 = vadd.f32 0.0, %v1462
        %v1464 = vpop.f32.mrf.mxu0
        %v1465 = vadd.f32 0.0, %v1464
        %1466 = vmatprep.mubr.f32.mxu0 %v659
        %1467 = vmatmul.mubr.f32.gmra.mxu0 %v658
        %v1468 = vpop.f32.mrf.mxu0
        %v1469 = vadd.f32 0.0, %v1468
        %v1470 = vpop.f32.mrf.mxu0
        %v1471 = vadd.f32 0.0, %v1470
        %1472 = vmatprep.mubr.f32.mxu0 %v667
        %1473 = vmatmul.mubr.f32.gmra.mxu0 %v666
        %v1474 = vpop.f32.mrf.mxu0
        %v1475 = vadd.f32 0.0, %v1474
        %v1476 = vpop.f32.mrf.mxu0
        %v1477 = vadd.f32 0.0, %v1476
        %1478 = vmatprep.mubr.f32.mxu0 %v675
        %1479 = vmatmul.mubr.f32.gmra.mxu0 %v674
        %v1480 = vpop.f32.mrf.mxu0
        %v1481 = vadd.f32 0.0, %v1480
        %v1482 = vpop.f32.mrf.mxu0
        %v1483 = vadd.f32 0.0, %v1482
        %1484 = vmatprep.mubr.f32.mxu0 %v683
        %1485 = vmatmul.mubr.f32.gmra.mxu0 %v682
        %v1486 = vpop.f32.mrf.mxu0
        %v1487 = vadd.f32 0.0, %v1486
        %v1488 = vpop.f32.mrf.mxu0
        %v1489 = vadd.f32 0.0, %v1488
        %1490 = vmatprep.mubr.f32.mxu0 %v691
        %1491 = vmatmul.mubr.f32.gmra.mxu0 %v690
        %v1492 = vpop.f32.mrf.mxu0
        %v1493 = vadd.f32 0.0, %v1492
        %v1494 = vpop.f32.mrf.mxu0
        %v1495 = vadd.f32 0.0, %v1494
        %1496 = vmatprep.mubr.f32.mxu0 %v699
        %1497 = vmatmul.mubr.f32.gmra.mxu0 %v698
        %v1498 = vpop.f32.mrf.mxu0
        %v1499 = vadd.f32 0.0, %v1498
        %v1500 = vpop.f32.mrf.mxu0
        %v1501 = vadd.f32 0.0, %v1500
        %1502 = vmatprep.mubr.f32.mxu0 %v707
        %1503 = vmatmul.mubr.f32.gmra.mxu0 %v706
        %v1504 = vpop.f32.mrf.mxu0
        %v1505 = vadd.f32 0.0, %v1504
        %v1506 = vpop.f32.mrf.mxu0
        %v1507 = vadd.f32 0.0, %v1506
        %1508 = vmatprep.mubr.f32.mxu0 %v715
        %1509 = vmatmul.mubr.f32.gmra.mxu0 %v714
        %v1510 = vpop.f32.mrf.mxu0
        %v1511 = vadd.f32 0.0, %v1510
        %v1512 = vpop.f32.mrf.mxu0
        %v1513 = vadd.f32 0.0, %v1512
        %1514 = vmatprep.mubr.f32.mxu0 %v723
        %1515 = vmatmul.mubr.f32.gmra.mxu0 %v722
        %v1516 = vpop.f32.mrf.mxu0
        %v1517 = vadd.f32 0.0, %v1516
        %v1518 = vpop.f32.mrf.mxu0
        %v1519 = vadd.f32 0.0, %v1518
        %1520 = vmatprep.mubr.f32.mxu0 %v731
        %1521 = vmatmul.mubr.f32.gmra.mxu0 %v730
        %v1522 = vpop.f32.mrf.mxu0
        %v1523 = vadd.f32 0.0, %v1522
        %v1524 = vpop.f32.mrf.mxu0
        %v1525 = vadd.f32 0.0, %v1524
        %1526 = vmatprep.mubr.f32.mxu0 %v739
        %1527 = vmatmul.mubr.f32.gmra.mxu0 %v738
        %v1528 = vpop.f32.mrf.mxu0
        %v1529 = vadd.f32 0.0, %v1528
        %v1530 = vpop.f32.mrf.mxu0
        %v1531 = vadd.f32 0.0, %v1530
        %1532 = vmatprep.mubr.f32.mxu0 %v747
        %1533 = vmatmul.mubr.f32.gmra.mxu0 %v746
        %v1534 = vpop.f32.mrf.mxu0
        %v1535 = vadd.f32 0.0, %v1534
        %v1536 = vpop.f32.mrf.mxu0
        %v1537 = vadd.f32 0.0, %v1536
        %1538 = vmatprep.mubr.f32.mxu0 %v755
        %1539 = vmatmul.mubr.f32.gmra.mxu0 %v754
        %v1540 = vpop.f32.mrf.mxu0
        %v1541 = vadd.f32 0.0, %v1540
        %v1542 = vpop.f32.mrf.mxu0
        %v1543 = vadd.f32 0.0, %v1542
        %1544 = vmatprep.mubr.f32.mxu0 %v763
        %1545 = vmatmul.mubr.f32.gmra.mxu0 %v762
        %v1546 = vpop.f32.mrf.mxu0
        %v1547 = vadd.f32 0.0, %v1546
        %v1548 = vpop.f32.mrf.mxu0
        %v1549 = vadd.f32 0.0, %v1548
        %1550 = vmatprep.mubr.f32.mxu0 %v771
        %1551 = vmatmul.mubr.f32.gmra.mxu0 %v770
        %v1552 = vpop.f32.mrf.mxu0
        %v1553 = vadd.f32 0.0, %v1552
        %v1554 = vpop.f32.mrf.mxu0
        %v1555 = vadd.f32 0.0, %v1554
        %1556 = vmatprep.mubr.f32.mxu0 %v779
        %1557 = vmatmul.mubr.f32.gmra.mxu0 %v778
        %v1558 = vpop.f32.mrf.mxu0
        %v1559 = vadd.f32 0.0, %v1558
        %v1560 = vpop.f32.mrf.mxu0
        %v1561 = vadd.f32 0.0, %v1560
        %1562 = vmatprep.mubr.f32.mxu0 %v787
        %1563 = vmatmul.mubr.f32.gmra.mxu0 %v786
        %v1564 = vpop.f32.mrf.mxu0
        %v1565 = vadd.f32 0.0, %v1564
        %v1566 = vpop.f32.mrf.mxu0
        %v1567 = vadd.f32 0.0, %v1566
        %1568 = vmatprep.mubr.f32.mxu0 %v795
        %1569 = vmatmul.mubr.f32.gmra.mxu0 %v794
        %v1570 = vpop.f32.mrf.mxu0
        %v1571 = vadd.f32 0.0, %v1570
        %v1572 = vpop.f32.mrf.mxu0
        %v1573 = vadd.f32 0.0, %v1572
        %1574 = vmatprep.mubr.f32.mxu0 %v803
        %1575 = vmatmul.mubr.f32.gmra.mxu0 %v802
        %v1576 = vpop.f32.mrf.mxu0
        %v1577 = vadd.f32 0.0, %v1576
        %v1578 = vpop.f32.mrf.mxu0
        %v1579 = vadd.f32 0.0, %v1578
        %1580 = vmatprep.mubr.f32.mxu0 %v811
        %1581 = vmatmul.mubr.f32.gmra.mxu0 %v810
        %v1582 = vpop.f32.mrf.mxu0
        %v1583 = vadd.f32 0.0, %v1582
        %v1584 = vpop.f32.mrf.mxu0
        %v1585 = vadd.f32 0.0, %v1584
        %1586 = vdwg.mxu0
        %1587 = vmatprep.subr.mxu0 %v941
        %1588 = vmatpush1.xpose.msra.mxu0 %v940
        %1589 = vmatprep.subr.mxu0 %v933
        %1590 = vmatpush1.xpose.msra.mxu0 %v932
        %1591 = vmatprep.subr.mxu0 %v925
        %1592 = vmatpush1.xpose.msra.mxu0 %v924
        %1593 = vmatprep.subr.mxu0 %v917
        %1594 = vmatpush1.xpose.msra.mxu0 %v916
        %1595 = vmatprep.subr.mxu0 %v909
        %1596 = vmatpush1.xpose.msra.mxu0 %v908
        %1597 = vmatprep.subr.mxu0 %v901
        %1598 = vmatpush1.xpose.msra.mxu0 %v900
        %1599 = vmatprep.subr.mxu0 %v893
        %1600 = vmatpush1.xpose.msra.mxu0 %v892
        %1601 = vmatprep.subr.mxu0 %v885
        %1602 = vmatpush1.xpose.msra.mxu0 %v884
        %1603 = vmatprep.subr.mxu0 %v877
        %1604 = vmatpush1.xpose.msra.mxu0 %v876
        %1605 = vmatprep.subr.mxu0 %v869
        %1606 = vmatpush1.xpose.msra.mxu0 %v868
        %1607 = vmatprep.subr.mxu0 %v861
        %1608 = vmatpush1.xpose.msra.mxu0 %v860
        %1609 = vmatprep.subr.mxu0 %v853
        %1610 = vmatpush1.xpose.msra.mxu0 %v852
        %1611 = vmatprep.subr.mxu0 %v845
        %1612 = vmatpush1.xpose.msra.mxu0 %v844
        %1613 = vmatprep.subr.mxu0 %v837
        %1614 = vmatpush1.xpose.msra.mxu0 %v836
        %1615 = vmatprep.subr.mxu0 %v829
        %1616 = vmatpush1.xpose.msra.mxu0 %v828
        %1617 = vmatprep.subr.mxu0 %v821
        %1618 = vmatpush1.xpose.msra.mxu0 %v820
        %1619 = vmatprep.subr.mxu0 %v1069
        %1620 = vmatpush2.xpose.msra.mxu0 %v1068
        %1621 = vmatprep.subr.mxu0 %v1061
        %1622 = vmatpush2.xpose.msra.mxu0 %v1060
        %1623 = vmatprep.subr.mxu0 %v1053
        %1624 = vmatpush2.xpose.msra.mxu0 %v1052
        %1625 = vmatprep.subr.mxu0 %v1045
        %1626 = vmatpush2.xpose.msra.mxu0 %v1044
        %1627 = vmatprep.subr.mxu0 %v1037
        %1628 = vmatpush2.xpose.msra.mxu0 %v1036
        %1629 = vmatprep.subr.mxu0 %v1029
        %1630 = vmatpush2.xpose.msra.mxu0 %v1028
        %1631 = vmatprep.subr.mxu0 %v1021
        %1632 = vmatpush2.xpose.msra.mxu0 %v1020
        %1633 = vmatprep.subr.mxu0 %v1013
        %1634 = vmatpush2.xpose.msra.mxu0 %v1012
        %1635 = vmatprep.subr.mxu0 %v1005
        %1636 = vmatpush2.xpose.msra.mxu0 %v1004
        %1637 = vmatprep.subr.mxu0 %v997
        %1638 = vmatpush2.xpose.msra.mxu0 %v996
        %1639 = vmatprep.subr.mxu0 %v989
        %1640 = vmatpush2.xpose.msra.mxu0 %v988
        %1641 = vmatprep.subr.mxu0 %v981
        %1642 = vmatpush2.xpose.msra.mxu0 %v980
        %1643 = vmatprep.subr.mxu0 %v973
        %1644 = vmatpush2.xpose.msra.mxu0 %v972
        %1645 = vmatprep.subr.mxu0 %v965
        %1646 = vmatpush2.xpose.msra.mxu0 %v964
        %1647 = vmatprep.subr.mxu0 %v957
        %1648 = vmatpush2.xpose.msra.mxu0 %v956
        %1649 = vmatprep.subr.mxu0 %v949
        %1650 = vmatpush2.xpose.msra.mxu0 %v948
        %1651 = vmatprep.mubr.f32.mxu0 %v565
        %1652 = vmatmul.mubr.f32.gmra.mxu0 %v564
        %v1653 = vpop.f32.mrf.mxu0
        %v1654 = vadd.f32 %v1397, %v1653
        %v1655 = vpop.f32.mrf.mxu0
        %v1656 = vadd.f32 %v1399, %v1655
        %1657 = vmatprep.mubr.f32.mxu0 %v573
        %1658 = vmatmul.mubr.f32.gmra.mxu0 %v572
        %v1659 = vpop.f32.mrf.mxu0
        %v1660 = vadd.f32 %v1403, %v1659
        %v1661 = vpop.f32.mrf.mxu0
        %v1662 = vadd.f32 %v1405, %v1661
        %1663 = vmatprep.mubr.f32.mxu0 %v581
        %1664 = vmatmul.mubr.f32.gmra.mxu0 %v580
        %v1665 = vpop.f32.mrf.mxu0
        %v1666 = vadd.f32 %v1409, %v1665
        %v1667 = vpop.f32.mrf.mxu0
        %v1668 = vadd.f32 %v1411, %v1667
        %1669 = vmatprep.mubr.f32.mxu0 %v589
        %1670 = vmatmul.mubr.f32.gmra.mxu0 %v588
        %v1671 = vpop.f32.mrf.mxu0
        %v1672 = vadd.f32 %v1415, %v1671
        %v1673 = vpop.f32.mrf.mxu0
        %v1674 = vadd.f32 %v1417, %v1673
        %1675 = vmatprep.mubr.f32.mxu0 %v597
        %1676 = vmatmul.mubr.f32.gmra.mxu0 %v596
        %v1677 = vpop.f32.mrf.mxu0
        %v1678 = vadd.f32 %v1421, %v1677
        %v1679 = vpop.f32.mrf.mxu0
        %v1680 = vadd.f32 %v1423, %v1679
        %1681 = vmatprep.mubr.f32.mxu0 %v605
        %1682 = vmatmul.mubr.f32.gmra.mxu0 %v604
        %v1683 = vpop.f32.mrf.mxu0
        %v1684 = vadd.f32 %v1427, %v1683
        %v1685 = vpop.f32.mrf.mxu0
        %v1686 = vadd.f32 %v1429, %v1685
        %1687 = vmatprep.mubr.f32.mxu0 %v613
        %1688 = vmatmul.mubr.f32.gmra.mxu0 %v612
        %v1689 = vpop.f32.mrf.mxu0
        %v1690 = vadd.f32 %v1433, %v1689
        %v1691 = vpop.f32.mrf.mxu0
        %v1692 = vadd.f32 %v1435, %v1691
        %1693 = vmatprep.mubr.f32.mxu0 %v621
        %1694 = vmatmul.mubr.f32.gmra.mxu0 %v620
        %v1695 = vpop.f32.mrf.mxu0
        %v1696 = vadd.f32 %v1439, %v1695
        %v1697 = vpop.f32.mrf.mxu0
        %v1698 = vadd.f32 %v1441, %v1697
        %1699 = vmatprep.mubr.f32.mxu0 %v629
        %1700 = vmatmul.mubr.f32.gmra.mxu0 %v628
        %v1701 = vpop.f32.mrf.mxu0
        %v1702 = vadd.f32 %v1445, %v1701
        %v1703 = vpop.f32.mrf.mxu0
        %v1704 = vadd.f32 %v1447, %v1703
        %1705 = vmatprep.mubr.f32.mxu0 %v637
        %1706 = vmatmul.mubr.f32.gmra.mxu0 %v636
        %v1707 = vpop.f32.mrf.mxu0
        %v1708 = vadd.f32 %v1451, %v1707
        %v1709 = vpop.f32.mrf.mxu0
        %v1710 = vadd.f32 %v1453, %v1709
        %1711 = vmatprep.mubr.f32.mxu0 %v645
        %1712 = vmatmul.mubr.f32.gmra.mxu0 %v644
        %v1713 = vpop.f32.mrf.mxu0
        %v1714 = vadd.f32 %v1457, %v1713
        %v1715 = vpop.f32.mrf.mxu0
        %v1716 = vadd.f32 %v1459, %v1715
        %1717 = vmatprep.mubr.f32.mxu0 %v653
        %1718 = vmatmul.mubr.f32.gmra.mxu0 %v652
        %v1719 = vpop.f32.mrf.mxu0
        %v1720 = vadd.f32 %v1463, %v1719
        %v1721 = vpop.f32.mrf.mxu0
        %v1722 = vadd.f32 %v1465, %v1721
        %1723 = vmatprep.mubr.f32.mxu0 %v661
        %1724 = vmatmul.mubr.f32.gmra.mxu0 %v660
        %v1725 = vpop.f32.mrf.mxu0
        %v1726 = vadd.f32 %v1469, %v1725
        %v1727 = vpop.f32.mrf.mxu0
        %v1728 = vadd.f32 %v1471, %v1727
        %1729 = vmatprep.mubr.f32.mxu0 %v669
        %1730 = vmatmul.mubr.f32.gmra.mxu0 %v668
        %v1731 = vpop.f32.mrf.mxu0
        %v1732 = vadd.f32 %v1475, %v1731
        %v1733 = vpop.f32.mrf.mxu0
        %v1734 = vadd.f32 %v1477, %v1733
        %1735 = vmatprep.mubr.f32.mxu0 %v677
        %1736 = vmatmul.mubr.f32.gmra.mxu0 %v676
        %v1737 = vpop.f32.mrf.mxu0
        %v1738 = vadd.f32 %v1481, %v1737
        %v1739 = vpop.f32.mrf.mxu0
        %v1740 = vadd.f32 %v1483, %v1739
        %1741 = vmatprep.mubr.f32.mxu0 %v685
        %1742 = vmatmul.mubr.f32.gmra.mxu0 %v684
        %v1743 = vpop.f32.mrf.mxu0
        %v1744 = vadd.f32 %v1487, %v1743
        %v1745 = vpop.f32.mrf.mxu0
        %v1746 = vadd.f32 %v1489, %v1745
        %1747 = vmatprep.mubr.f32.mxu0 %v693
        %1748 = vmatmul.mubr.f32.gmra.mxu0 %v692
        %v1749 = vpop.f32.mrf.mxu0
        %v1750 = vadd.f32 %v1493, %v1749
        %v1751 = vpop.f32.mrf.mxu0
        %v1752 = vadd.f32 %v1495, %v1751
        %1753 = vmatprep.mubr.f32.mxu0 %v701
        %1754 = vmatmul.mubr.f32.gmra.mxu0 %v700
        %v1755 = vpop.f32.mrf.mxu0
        %v1756 = vadd.f32 %v1499, %v1755
        %v1757 = vpop.f32.mrf.mxu0
        %v1758 = vadd.f32 %v1501, %v1757
        %1759 = vmatprep.mubr.f32.mxu0 %v709
        %1760 = vmatmul.mubr.f32.gmra.mxu0 %v708
        %v1761 = vpop.f32.mrf.mxu0
        %v1762 = vadd.f32 %v1505, %v1761
        %v1763 = vpop.f32.mrf.mxu0
        %v1764 = vadd.f32 %v1507, %v1763
        %1765 = vmatprep.mubr.f32.mxu0 %v717
        %1766 = vmatmul.mubr.f32.gmra.mxu0 %v716
        %v1767 = vpop.f32.mrf.mxu0
        %v1768 = vadd.f32 %v1511, %v1767
        %v1769 = vpop.f32.mrf.mxu0
        %v1770 = vadd.f32 %v1513, %v1769
        %1771 = vmatprep.mubr.f32.mxu0 %v725
        %1772 = vmatmul.mubr.f32.gmra.mxu0 %v724
        %v1773 = vpop.f32.mrf.mxu0
        %v1774 = vadd.f32 %v1517, %v1773
        %v1775 = vpop.f32.mrf.mxu0
        %v1776 = vadd.f32 %v1519, %v1775
        %1777 = vmatprep.mubr.f32.mxu0 %v733
        %1778 = vmatmul.mubr.f32.gmra.mxu0 %v732
        %v1779 = vpop.f32.mrf.mxu0
        %v1780 = vadd.f32 %v1523, %v1779
        %v1781 = vpop.f32.mrf.mxu0
        %v1782 = vadd.f32 %v1525, %v1781
        %1783 = vmatprep.mubr.f32.mxu0 %v741
        %1784 = vmatmul.mubr.f32.gmra.mxu0 %v740
        %v1785 = vpop.f32.mrf.mxu0
        %v1786 = vadd.f32 %v1529, %v1785
        %v1787 = vpop.f32.mrf.mxu0
        %v1788 = vadd.f32 %v1531, %v1787
        %1789 = vmatprep.mubr.f32.mxu0 %v749
        %1790 = vmatmul.mubr.f32.gmra.mxu0 %v748
        %v1791 = vpop.f32.mrf.mxu0
        %v1792 = vadd.f32 %v1535, %v1791
        %v1793 = vpop.f32.mrf.mxu0
        %v1794 = vadd.f32 %v1537, %v1793
        %1795 = vmatprep.mubr.f32.mxu0 %v757
        %1796 = vmatmul.mubr.f32.gmra.mxu0 %v756
        %v1797 = vpop.f32.mrf.mxu0
        %v1798 = vadd.f32 %v1541, %v1797
        %v1799 = vpop.f32.mrf.mxu0
        %v1800 = vadd.f32 %v1543, %v1799
        %1801 = vmatprep.mubr.f32.mxu0 %v765
        %1802 = vmatmul.mubr.f32.gmra.mxu0 %v764
        %v1803 = vpop.f32.mrf.mxu0
        %v1804 = vadd.f32 %v1547, %v1803
        %v1805 = vpop.f32.mrf.mxu0
        %v1806 = vadd.f32 %v1549, %v1805
        %1807 = vmatprep.mubr.f32.mxu0 %v773
        %1808 = vmatmul.mubr.f32.gmra.mxu0 %v772
        %v1809 = vpop.f32.mrf.mxu0
        %v1810 = vadd.f32 %v1553, %v1809
        %v1811 = vpop.f32.mrf.mxu0
        %v1812 = vadd.f32 %v1555, %v1811
        %1813 = vmatprep.mubr.f32.mxu0 %v781
        %1814 = vmatmul.mubr.f32.gmra.mxu0 %v780
        %v1815 = vpop.f32.mrf.mxu0
        %v1816 = vadd.f32 %v1559, %v1815
        %v1817 = vpop.f32.mrf.mxu0
        %v1818 = vadd.f32 %v1561, %v1817
        %1819 = vmatprep.mubr.f32.mxu0 %v789
        %1820 = vmatmul.mubr.f32.gmra.mxu0 %v788
        %v1821 = vpop.f32.mrf.mxu0
        %v1822 = vadd.f32 %v1565, %v1821
        %v1823 = vpop.f32.mrf.mxu0
        %v1824 = vadd.f32 %v1567, %v1823
        %1825 = vmatprep.mubr.f32.mxu0 %v797
        %1826 = vmatmul.mubr.f32.gmra.mxu0 %v796
        %v1827 = vpop.f32.mrf.mxu0
        %v1828 = vadd.f32 %v1571, %v1827
        %v1829 = vpop.f32.mrf.mxu0
        %v1830 = vadd.f32 %v1573, %v1829
        %1831 = vmatprep.mubr.f32.mxu0 %v805
        %1832 = vmatmul.mubr.f32.gmra.mxu0 %v804
        %v1833 = vpop.f32.mrf.mxu0
        %v1834 = vadd.f32 %v1577, %v1833
        %v1835 = vpop.f32.mrf.mxu0
        %v1836 = vadd.f32 %v1579, %v1835
        %1837 = vmatprep.mubr.f32.mxu0 %v813
        %1838 = vmatmul.mubr.f32.gmra.mxu0 %v812
        %v1839 = vpop.f32.mrf.mxu0
        %v1840 = vadd.f32 %v1583, %v1839
        %v1841 = vpop.f32.mrf.mxu0
        %v1842 = vadd.f32 %v1585, %v1841
        %1843 = vdwg.mxu0
        %1844 = vmatprep.subr.mxu0 %v943
        %1845 = vmatpush1.xpose.msra.mxu0 %v942
        %1846 = vmatprep.subr.mxu0 %v935
        %1847 = vmatpush1.xpose.msra.mxu0 %v934
        %1848 = vmatprep.subr.mxu0 %v927
        %1849 = vmatpush1.xpose.msra.mxu0 %v926
        %1850 = vmatprep.subr.mxu0 %v919
        %1851 = vmatpush1.xpose.msra.mxu0 %v918
        %1852 = vmatprep.subr.mxu0 %v911
        %1853 = vmatpush1.xpose.msra.mxu0 %v910
        %1854 = vmatprep.subr.mxu0 %v903
        %1855 = vmatpush1.xpose.msra.mxu0 %v902
        %1856 = vmatprep.subr.mxu0 %v895
        %1857 = vmatpush1.xpose.msra.mxu0 %v894
        %1858 = vmatprep.subr.mxu0 %v887
        %1859 = vmatpush1.xpose.msra.mxu0 %v886
        %1860 = vmatprep.subr.mxu0 %v879
        %1861 = vmatpush1.xpose.msra.mxu0 %v878
        %1862 = vmatprep.subr.mxu0 %v871
        %1863 = vmatpush1.xpose.msra.mxu0 %v870
        %1864 = vmatprep.subr.mxu0 %v863
        %1865 = vmatpush1.xpose.msra.mxu0 %v862
        %1866 = vmatprep.subr.mxu0 %v855
        %1867 = vmatpush1.xpose.msra.mxu0 %v854
        %1868 = vmatprep.subr.mxu0 %v847
        %1869 = vmatpush1.xpose.msra.mxu0 %v846
        %1870 = vmatprep.subr.mxu0 %v839
        %1871 = vmatpush1.xpose.msra.mxu0 %v838
        %1872 = vmatprep.subr.mxu0 %v831
        %1873 = vmatpush1.xpose.msra.mxu0 %v830
        %1874 = vmatprep.subr.mxu0 %v823
        %1875 = vmatpush1.xpose.msra.mxu0 %v822
        %1876 = vmatprep.subr.mxu0 %v1071
        %1877 = vmatpush2.xpose.msra.mxu0 %v1070
        %1878 = vmatprep.subr.mxu0 %v1063
        %1879 = vmatpush2.xpose.msra.mxu0 %v1062
        %1880 = vmatprep.subr.mxu0 %v1055
        %1881 = vmatpush2.xpose.msra.mxu0 %v1054
        %1882 = vmatprep.subr.mxu0 %v1047
        %1883 = vmatpush2.xpose.msra.mxu0 %v1046
        %1884 = vmatprep.subr.mxu0 %v1039
        %1885 = vmatpush2.xpose.msra.mxu0 %v1038
        %1886 = vmatprep.subr.mxu0 %v1031
        %1887 = vmatpush2.xpose.msra.mxu0 %v1030
        %1888 = vmatprep.subr.mxu0 %v1023
        %1889 = vmatpush2.xpose.msra.mxu0 %v1022
        %1890 = vmatprep.subr.mxu0 %v1015
        %1891 = vmatpush2.xpose.msra.mxu0 %v1014
        %1892 = vmatprep.subr.mxu0 %v1007
        %1893 = vmatpush2.xpose.msra.mxu0 %v1006
        %1894 = vmatprep.subr.mxu0 %v999
        %1895 = vmatpush2.xpose.msra.mxu0 %v998
        %1896 = vmatprep.subr.mxu0 %v991
        %1897 = vmatpush2.xpose.msra.mxu0 %v990
        %1898 = vmatprep.subr.mxu0 %v983
        %1899 = vmatpush2.xpose.msra.mxu0 %v982
        %1900 = vmatprep.subr.mxu0 %v975
        %1901 = vmatpush2.xpose.msra.mxu0 %v974
        %1902 = vmatprep.subr.mxu0 %v967
        %1903 = vmatpush2.xpose.msra.mxu0 %v966
        %1904 = vmatprep.subr.mxu0 %v959
        %1905 = vmatpush2.xpose.msra.mxu0 %v958
        %1906 = vmatprep.subr.mxu0 %v951
        %1907 = vmatpush2.xpose.msra.mxu0 %v950
        %1908 = vmatprep.mubr.f32.mxu0 %v567
        %1909 = vmatmul.mubr.f32.gmra.mxu0 %v566
        %v1910 = vpop.f32.mrf.mxu0
        %v1911 = vadd.f32 %v1654, %v1910
        %v1912 = vpop.f32.mrf.mxu0
        %v1913 = vadd.f32 %v1656, %v1912
        %1914 = vmatprep.mubr.f32.mxu0 %v575
        %1915 = vmatmul.mubr.f32.gmra.mxu0 %v574
        %v1916 = vpop.f32.mrf.mxu0
        %v1917 = vadd.f32 %v1660, %v1916
        %v1918 = vpop.f32.mrf.mxu0
        %v1919 = vadd.f32 %v1662, %v1918
        %1920 = vmatprep.mubr.f32.mxu0 %v583
        %1921 = vmatmul.mubr.f32.gmra.mxu0 %v582
        %v1922 = vpop.f32.mrf.mxu0
        %v1923 = vadd.f32 %v1666, %v1922
        %v1924 = vpop.f32.mrf.mxu0
        %v1925 = vadd.f32 %v1668, %v1924
        %1926 = vmatprep.mubr.f32.mxu0 %v591
        %1927 = vmatmul.mubr.f32.gmra.mxu0 %v590
        %v1928 = vpop.f32.mrf.mxu0
        %v1929 = vadd.f32 %v1672, %v1928
        %v1930 = vpop.f32.mrf.mxu0
        %v1931 = vadd.f32 %v1674, %v1930
        %1932 = vmatprep.mubr.f32.mxu0 %v599
        %1933 = vmatmul.mubr.f32.gmra.mxu0 %v598
        %v1934 = vpop.f32.mrf.mxu0
        %v1935 = vadd.f32 %v1678, %v1934
        %v1936 = vpop.f32.mrf.mxu0
        %v1937 = vadd.f32 %v1680, %v1936
        %1938 = vmatprep.mubr.f32.mxu0 %v607
        %1939 = vmatmul.mubr.f32.gmra.mxu0 %v606
        %v1940 = vpop.f32.mrf.mxu0
        %v1941 = vadd.f32 %v1684, %v1940
        %v1942 = vpop.f32.mrf.mxu0
        %v1943 = vadd.f32 %v1686, %v1942
        %1944 = vmatprep.mubr.f32.mxu0 %v615
        %1945 = vmatmul.mubr.f32.gmra.mxu0 %v614
        %v1946 = vpop.f32.mrf.mxu0
        %v1947 = vadd.f32 %v1690, %v1946
        %v1948 = vpop.f32.mrf.mxu0
        %v1949 = vadd.f32 %v1692, %v1948
        %1950 = vmatprep.mubr.f32.mxu0 %v623
        %1951 = vmatmul.mubr.f32.gmra.mxu0 %v622
        %v1952 = vpop.f32.mrf.mxu0
        %v1953 = vadd.f32 %v1696, %v1952
        %v1954 = vpop.f32.mrf.mxu0
        %v1955 = vadd.f32 %v1698, %v1954
        %1956 = vmatprep.mubr.f32.mxu0 %v631
        %1957 = vmatmul.mubr.f32.gmra.mxu0 %v630
        %v1958 = vpop.f32.mrf.mxu0
        %v1959 = vadd.f32 %v1702, %v1958
        %v1960 = vpop.f32.mrf.mxu0
        %v1961 = vadd.f32 %v1704, %v1960
        %1962 = vmatprep.mubr.f32.mxu0 %v639
        %1963 = vmatmul.mubr.f32.gmra.mxu0 %v638
        %v1964 = vpop.f32.mrf.mxu0
        %v1965 = vadd.f32 %v1708, %v1964
        %v1966 = vpop.f32.mrf.mxu0
        %v1967 = vadd.f32 %v1710, %v1966
        %1968 = vmatprep.mubr.f32.mxu0 %v647
        %1969 = vmatmul.mubr.f32.gmra.mxu0 %v646
        %v1970 = vpop.f32.mrf.mxu0
        %v1971 = vadd.f32 %v1714, %v1970
        %v1972 = vpop.f32.mrf.mxu0
        %v1973 = vadd.f32 %v1716, %v1972
        %1974 = vmatprep.mubr.f32.mxu0 %v655
        %1975 = vmatmul.mubr.f32.gmra.mxu0 %v654
        %v1976 = vpop.f32.mrf.mxu0
        %v1977 = vadd.f32 %v1720, %v1976
        %v1978 = vpop.f32.mrf.mxu0
        %v1979 = vadd.f32 %v1722, %v1978
        %1980 = vmatprep.mubr.f32.mxu0 %v663
        %1981 = vmatmul.mubr.f32.gmra.mxu0 %v662
        %v1982 = vpop.f32.mrf.mxu0
        %v1983 = vadd.f32 %v1726, %v1982
        %v1984 = vpop.f32.mrf.mxu0
        %v1985 = vadd.f32 %v1728, %v1984
        %1986 = vmatprep.mubr.f32.mxu0 %v671
        %1987 = vmatmul.mubr.f32.gmra.mxu0 %v670
        %v1988 = vpop.f32.mrf.mxu0
        %v1989 = vadd.f32 %v1732, %v1988
        %v1990 = vpop.f32.mrf.mxu0
        %v1991 = vadd.f32 %v1734, %v1990
        %1992 = vmatprep.mubr.f32.mxu0 %v679
        %1993 = vmatmul.mubr.f32.gmra.mxu0 %v678
        %v1994 = vpop.f32.mrf.mxu0
        %v1995 = vadd.f32 %v1738, %v1994
        %v1996 = vpop.f32.mrf.mxu0
        %v1997 = vadd.f32 %v1740, %v1996
        %1998 = vmatprep.mubr.f32.mxu0 %v687
        %1999 = vmatmul.mubr.f32.gmra.mxu0 %v686
        %v2000 = vpop.f32.mrf.mxu0
        %v2001 = vadd.f32 %v1744, %v2000
        %v2002 = vpop.f32.mrf.mxu0
        %v2003 = vadd.f32 %v1746, %v2002
        %2004 = vmatprep.mubr.f32.mxu0 %v695
        %2005 = vmatmul.mubr.f32.gmra.mxu0 %v694
        %v2006 = vpop.f32.mrf.mxu0
        %v2007 = vadd.f32 %v1750, %v2006
        %v2008 = vpop.f32.mrf.mxu0
        %v2009 = vadd.f32 %v1752, %v2008
        %2010 = vmatprep.mubr.f32.mxu0 %v703
        %2011 = vmatmul.mubr.f32.gmra.mxu0 %v702
        %v2012 = vpop.f32.mrf.mxu0
        %v2013 = vadd.f32 %v1756, %v2012
        %v2014 = vpop.f32.mrf.mxu0
        %v2015 = vadd.f32 %v1758, %v2014
        %2016 = vmatprep.mubr.f32.mxu0 %v711
        %2017 = vmatmul.mubr.f32.gmra.mxu0 %v710
        %v2018 = vpop.f32.mrf.mxu0
        %v2019 = vadd.f32 %v1762, %v2018
        %v2020 = vpop.f32.mrf.mxu0
        %v2021 = vadd.f32 %v1764, %v2020
        %2022 = vmatprep.mubr.f32.mxu0 %v719
        %2023 = vmatmul.mubr.f32.gmra.mxu0 %v718
        %v2024 = vpop.f32.mrf.mxu0
        %v2025 = vadd.f32 %v1768, %v2024
        %v2026 = vpop.f32.mrf.mxu0
        %v2027 = vadd.f32 %v1770, %v2026
        %2028 = vmatprep.mubr.f32.mxu0 %v727
        %2029 = vmatmul.mubr.f32.gmra.mxu0 %v726
        %v2030 = vpop.f32.mrf.mxu0
        %v2031 = vadd.f32 %v1774, %v2030
        %v2032 = vpop.f32.mrf.mxu0
        %v2033 = vadd.f32 %v1776, %v2032
        %2034 = vmatprep.mubr.f32.mxu0 %v735
        %2035 = vmatmul.mubr.f32.gmra.mxu0 %v734
        %v2036 = vpop.f32.mrf.mxu0
        %v2037 = vadd.f32 %v1780, %v2036
        %v2038 = vpop.f32.mrf.mxu0
        %v2039 = vadd.f32 %v1782, %v2038
        %2040 = vmatprep.mubr.f32.mxu0 %v743
        %2041 = vmatmul.mubr.f32.gmra.mxu0 %v742
        %v2042 = vpop.f32.mrf.mxu0
        %v2043 = vadd.f32 %v1786, %v2042
        %v2044 = vpop.f32.mrf.mxu0
        %v2045 = vadd.f32 %v1788, %v2044
        %2046 = vmatprep.mubr.f32.mxu0 %v751
        %2047 = vmatmul.mubr.f32.gmra.mxu0 %v750
        %v2048 = vpop.f32.mrf.mxu0
        %v2049 = vadd.f32 %v1792, %v2048
        %v2050 = vpop.f32.mrf.mxu0
        %v2051 = vadd.f32 %v1794, %v2050
        %2052 = vmatprep.mubr.f32.mxu0 %v759
        %2053 = vmatmul.mubr.f32.gmra.mxu0 %v758
        %v2054 = vpop.f32.mrf.mxu0
        %v2055 = vadd.f32 %v1798, %v2054
        %v2056 = vpop.f32.mrf.mxu0
        %v2057 = vadd.f32 %v1800, %v2056
        %2058 = vmatprep.mubr.f32.mxu0 %v767
        %2059 = vmatmul.mubr.f32.gmra.mxu0 %v766
        %v2060 = vpop.f32.mrf.mxu0
        %v2061 = vadd.f32 %v1804, %v2060
        %v2062 = vpop.f32.mrf.mxu0
        %v2063 = vadd.f32 %v1806, %v2062
        %2064 = vmatprep.mubr.f32.mxu0 %v775
        %2065 = vmatmul.mubr.f32.gmra.mxu0 %v774
        %v2066 = vpop.f32.mrf.mxu0
        %v2067 = vadd.f32 %v1810, %v2066
        %v2068 = vpop.f32.mrf.mxu0
        %v2069 = vadd.f32 %v1812, %v2068
        %2070 = vmatprep.mubr.f32.mxu0 %v783
        %2071 = vmatmul.mubr.f32.gmra.mxu0 %v782
        %v2072 = vpop.f32.mrf.mxu0
        %v2073 = vadd.f32 %v1816, %v2072
        %v2074 = vpop.f32.mrf.mxu0
        %v2075 = vadd.f32 %v1818, %v2074
        %2076 = vmatprep.mubr.f32.mxu0 %v791
        %2077 = vmatmul.mubr.f32.gmra.mxu0 %v790
        %v2078 = vpop.f32.mrf.mxu0
        %v2079 = vadd.f32 %v1822, %v2078
        %v2080 = vpop.f32.mrf.mxu0
        %v2081 = vadd.f32 %v1824, %v2080
        %2082 = vmatprep.mubr.f32.mxu0 %v799
        %2083 = vmatmul.mubr.f32.gmra.mxu0 %v798
        %v2084 = vpop.f32.mrf.mxu0
        %v2085 = vadd.f32 %v1828, %v2084
        %v2086 = vpop.f32.mrf.mxu0
        %v2087 = vadd.f32 %v1830, %v2086
        %2088 = vmatprep.mubr.f32.mxu0 %v807
        %2089 = vmatmul.mubr.f32.gmra.mxu0 %v806
        %v2090 = vpop.f32.mrf.mxu0
        %v2091 = vadd.f32 %v1834, %v2090
        %v2092 = vpop.f32.mrf.mxu0
        %v2093 = vadd.f32 %v1836, %v2092
        %2094 = vmatprep.mubr.f32.mxu0 %v815
        %2095 = vmatmul.mubr.f32.gmra.mxu0 %v814
        %v2096 = vpop.f32.mrf.mxu0
        %v2097 = vadd.f32 %v1840, %v2096
        %v2098 = vpop.f32.mrf.mxu0
        %v2099 = vadd.f32 %v1842, %v2098
        %2100 = vdwg.mxu0
        %2101 = vmatprep.subr.mxu0 %v945
        %2102 = vmatpush1.xpose.msra.mxu0 %v944
        %2103 = vmatprep.subr.mxu0 %v937
        %2104 = vmatpush1.xpose.msra.mxu0 %v936
        %2105 = vmatprep.subr.mxu0 %v929
        %2106 = vmatpush1.xpose.msra.mxu0 %v928
        %2107 = vmatprep.subr.mxu0 %v921
        %2108 = vmatpush1.xpose.msra.mxu0 %v920
        %2109 = vmatprep.subr.mxu0 %v913
        %2110 = vmatpush1.xpose.msra.mxu0 %v912
        %2111 = vmatprep.subr.mxu0 %v905
        %2112 = vmatpush1.xpose.msra.mxu0 %v904
        %2113 = vmatprep.subr.mxu0 %v897
        %2114 = vmatpush1.xpose.msra.mxu0 %v896
        %2115 = vmatprep.subr.mxu0 %v889
        %2116 = vmatpush1.xpose.msra.mxu0 %v888
        %2117 = vmatprep.subr.mxu0 %v881
        %2118 = vmatpush1.xpose.msra.mxu0 %v880
        %2119 = vmatprep.subr.mxu0 %v873
        %2120 = vmatpush1.xpose.msra.mxu0 %v872
        %2121 = vmatprep.subr.mxu0 %v865
        %2122 = vmatpush1.xpose.msra.mxu0 %v864
        %2123 = vmatprep.subr.mxu0 %v857
        %2124 = vmatpush1.xpose.msra.mxu0 %v856
        %2125 = vmatprep.subr.mxu0 %v849
        %2126 = vmatpush1.xpose.msra.mxu0 %v848
        %2127 = vmatprep.subr.mxu0 %v841
        %2128 = vmatpush1.xpose.msra.mxu0 %v840
        %2129 = vmatprep.subr.mxu0 %v833
        %2130 = vmatpush1.xpose.msra.mxu0 %v832
        %2131 = vmatprep.subr.mxu0 %v825
        %2132 = vmatpush1.xpose.msra.mxu0 %v824
        %2133 = vmatprep.subr.mxu0 %v1073
        %2134 = vmatpush2.xpose.msra.mxu0 %v1072
        %2135 = vmatprep.subr.mxu0 %v1065
        %2136 = vmatpush2.xpose.msra.mxu0 %v1064
        %2137 = vmatprep.subr.mxu0 %v1057
        %2138 = vmatpush2.xpose.msra.mxu0 %v1056
        %2139 = vmatprep.subr.mxu0 %v1049
        %2140 = vmatpush2.xpose.msra.mxu0 %v1048
        %2141 = vmatprep.subr.mxu0 %v1041
        %2142 = vmatpush2.xpose.msra.mxu0 %v1040
        %2143 = vmatprep.subr.mxu0 %v1033
        %2144 = vmatpush2.xpose.msra.mxu0 %v1032
        %2145 = vmatprep.subr.mxu0 %v1025
        %2146 = vmatpush2.xpose.msra.mxu0 %v1024
        %2147 = vmatprep.subr.mxu0 %v1017
        %2148 = vmatpush2.xpose.msra.mxu0 %v1016
        %2149 = vmatprep.subr.mxu0 %v1009
        %2150 = vmatpush2.xpose.msra.mxu0 %v1008
        %2151 = vmatprep.subr.mxu0 %v1001
        %2152 = vmatpush2.xpose.msra.mxu0 %v1000
        %2153 = vmatprep.subr.mxu0 %v993
        %2154 = vmatpush2.xpose.msra.mxu0 %v992
        %2155 = vmatprep.subr.mxu0 %v985
        %2156 = vmatpush2.xpose.msra.mxu0 %v984
        %2157 = vmatprep.subr.mxu0 %v977
        %2158 = vmatpush2.xpose.msra.mxu0 %v976
        %2159 = vmatprep.subr.mxu0 %v969
        %2160 = vmatpush2.xpose.msra.mxu0 %v968
        %2161 = vmatprep.subr.mxu0 %v961
        %2162 = vmatpush2.xpose.msra.mxu0 %v960
        %2163 = vmatprep.subr.mxu0 %v953
        %2164 = vmatpush2.xpose.msra.mxu0 %v952
        %2165 = vmatprep.mubr.f32.mxu0 %v569
        %2166 = vmatmul.mubr.f32.gmra.mxu0 %v568
        %v2167 = vpop.f32.mrf.mxu0
        %v2168 = vadd.f32 %v1911, %v2167
        %v2169 = vpop.f32.mrf.mxu0
        %v2170 = vadd.f32 %v1913, %v2169
        %2171 = vmatprep.mubr.f32.mxu0 %v577
        %2172 = vmatmul.mubr.f32.gmra.mxu0 %v576
        %v2173 = vpop.f32.mrf.mxu0
        %v2174 = vadd.f32 %v1917, %v2173
        %v2175 = vpop.f32.mrf.mxu0
        %v2176 = vadd.f32 %v1919, %v2175
        %2177 = vmatprep.mubr.f32.mxu0 %v585
        %2178 = vmatmul.mubr.f32.gmra.mxu0 %v584
        %v2179 = vpop.f32.mrf.mxu0
        %v2180 = vadd.f32 %v1923, %v2179
        %v2181 = vpop.f32.mrf.mxu0
        %v2182 = vadd.f32 %v1925, %v2181
        %2183 = vmatprep.mubr.f32.mxu0 %v593
        %2184 = vmatmul.mubr.f32.gmra.mxu0 %v592
        %v2185 = vpop.f32.mrf.mxu0
        %v2186 = vadd.f32 %v1929, %v2185
        %v2187 = vpop.f32.mrf.mxu0
        %v2188 = vadd.f32 %v1931, %v2187
        %2189 = vmatprep.mubr.f32.mxu0 %v601
        %2190 = vmatmul.mubr.f32.gmra.mxu0 %v600
        %v2191 = vpop.f32.mrf.mxu0
        %v2192 = vadd.f32 %v1935, %v2191
        %v2193 = vpop.f32.mrf.mxu0
        %v2194 = vadd.f32 %v1937, %v2193
        %2195 = vmatprep.mubr.f32.mxu0 %v609
        %2196 = vmatmul.mubr.f32.gmra.mxu0 %v608
        %v2197 = vpop.f32.mrf.mxu0
        %v2198 = vadd.f32 %v1941, %v2197
        %v2199 = vpop.f32.mrf.mxu0
        %v2200 = vadd.f32 %v1943, %v2199
        %2201 = vmatprep.mubr.f32.mxu0 %v617
        %2202 = vmatmul.mubr.f32.gmra.mxu0 %v616
        %v2203 = vpop.f32.mrf.mxu0
        %v2204 = vadd.f32 %v1947, %v2203
        %v2205 = vpop.f32.mrf.mxu0
        %v2206 = vadd.f32 %v1949, %v2205
        %2207 = vmatprep.mubr.f32.mxu0 %v625
        %2208 = vmatmul.mubr.f32.gmra.mxu0 %v624
        %v2209 = vpop.f32.mrf.mxu0
        %v2210 = vadd.f32 %v1953, %v2209
        %v2211 = vpop.f32.mrf.mxu0
        %v2212 = vadd.f32 %v1955, %v2211
        %2213 = vmatprep.mubr.f32.mxu0 %v633
        %2214 = vmatmul.mubr.f32.gmra.mxu0 %v632
        %v2215 = vpop.f32.mrf.mxu0
        %v2216 = vadd.f32 %v1959, %v2215
        %v2217 = vpop.f32.mrf.mxu0
        %v2218 = vadd.f32 %v1961, %v2217
        %2219 = vmatprep.mubr.f32.mxu0 %v641
        %2220 = vmatmul.mubr.f32.gmra.mxu0 %v640
        %v2221 = vpop.f32.mrf.mxu0
        %v2222 = vadd.f32 %v1965, %v2221
        %v2223 = vpop.f32.mrf.mxu0
        %v2224 = vadd.f32 %v1967, %v2223
        %2225 = vmatprep.mubr.f32.mxu0 %v649
        %2226 = vmatmul.mubr.f32.gmra.mxu0 %v648
        %v2227 = vpop.f32.mrf.mxu0
        %v2228 = vadd.f32 %v1971, %v2227
        %v2229 = vpop.f32.mrf.mxu0
        %v2230 = vadd.f32 %v1973, %v2229
        %2231 = vmatprep.mubr.f32.mxu0 %v657
        %2232 = vmatmul.mubr.f32.gmra.mxu0 %v656
        %v2233 = vpop.f32.mrf.mxu0
        %v2234 = vadd.f32 %v1977, %v2233
        %v2235 = vpop.f32.mrf.mxu0
        %v2236 = vadd.f32 %v1979, %v2235
        %2237 = vmatprep.mubr.f32.mxu0 %v665
        %2238 = vmatmul.mubr.f32.gmra.mxu0 %v664
        %v2239 = vpop.f32.mrf.mxu0
        %v2240 = vadd.f32 %v1983, %v2239
        %v2241 = vpop.f32.mrf.mxu0
        %v2242 = vadd.f32 %v1985, %v2241
        %2243 = vmatprep.mubr.f32.mxu0 %v673
        %2244 = vmatmul.mubr.f32.gmra.mxu0 %v672
        %v2245 = vpop.f32.mrf.mxu0
        %v2246 = vadd.f32 %v1989, %v2245
        %v2247 = vpop.f32.mrf.mxu0
        %v2248 = vadd.f32 %v1991, %v2247
        %2249 = vmatprep.mubr.f32.mxu0 %v681
        %2250 = vmatmul.mubr.f32.gmra.mxu0 %v680
        %v2251 = vpop.f32.mrf.mxu0
        %v2252 = vadd.f32 %v1995, %v2251
        %v2253 = vpop.f32.mrf.mxu0
        %v2254 = vadd.f32 %v1997, %v2253
        %2255 = vmatprep.mubr.f32.mxu0 %v689
        %2256 = vmatmul.mubr.f32.gmra.mxu0 %v688
        %v2257 = vpop.f32.mrf.mxu0
        %v2258 = vadd.f32 %v2001, %v2257
        %v2259 = vpop.f32.mrf.mxu0
        %v2260 = vadd.f32 %v2003, %v2259
        %2261 = vmatprep.mubr.f32.mxu0 %v697
        %2262 = vmatmul.mubr.f32.gmra.mxu0 %v696
        %v2263 = vpop.f32.mrf.mxu0
        %v2264 = vadd.f32 %v2007, %v2263
        %v2265 = vpop.f32.mrf.mxu0
        %v2266 = vadd.f32 %v2009, %v2265
        %2267 = vmatprep.mubr.f32.mxu0 %v705
        %2268 = vmatmul.mubr.f32.gmra.mxu0 %v704
        %v2269 = vpop.f32.mrf.mxu0
        %v2270 = vadd.f32 %v2013, %v2269
        %v2271 = vpop.f32.mrf.mxu0
        %v2272 = vadd.f32 %v2015, %v2271
        %2273 = vmatprep.mubr.f32.mxu0 %v713
        %2274 = vmatmul.mubr.f32.gmra.mxu0 %v712
        %v2275 = vpop.f32.mrf.mxu0
        %v2276 = vadd.f32 %v2019, %v2275
        %v2277 = vpop.f32.mrf.mxu0
        %v2278 = vadd.f32 %v2021, %v2277
        %2279 = vmatprep.mubr.f32.mxu0 %v721
        %2280 = vmatmul.mubr.f32.gmra.mxu0 %v720
        %v2281 = vpop.f32.mrf.mxu0
        %v2282 = vadd.f32 %v2025, %v2281
        %v2283 = vpop.f32.mrf.mxu0
        %v2284 = vadd.f32 %v2027, %v2283
        %2285 = vmatprep.mubr.f32.mxu0 %v729
        %2286 = vmatmul.mubr.f32.gmra.mxu0 %v728
        %v2287 = vpop.f32.mrf.mxu0
        %v2288 = vadd.f32 %v2031, %v2287
        %v2289 = vpop.f32.mrf.mxu0
        %v2290 = vadd.f32 %v2033, %v2289
        %2291 = vmatprep.mubr.f32.mxu0 %v737
        %2292 = vmatmul.mubr.f32.gmra.mxu0 %v736
        %v2293 = vpop.f32.mrf.mxu0
        %v2294 = vadd.f32 %v2037, %v2293
        %v2295 = vpop.f32.mrf.mxu0
        %v2296 = vadd.f32 %v2039, %v2295
        %2297 = vmatprep.mubr.f32.mxu0 %v745
        %2298 = vmatmul.mubr.f32.gmra.mxu0 %v744
        %v2299 = vpop.f32.mrf.mxu0
        %v2300 = vadd.f32 %v2043, %v2299
        %v2301 = vpop.f32.mrf.mxu0
        %v2302 = vadd.f32 %v2045, %v2301
        %2303 = vmatprep.mubr.f32.mxu0 %v753
        %2304 = vmatmul.mubr.f32.gmra.mxu0 %v752
        %v2305 = vpop.f32.mrf.mxu0
        %v2306 = vadd.f32 %v2049, %v2305
        %v2307 = vpop.f32.mrf.mxu0
        %v2308 = vadd.f32 %v2051, %v2307
        %2309 = vmatprep.mubr.f32.mxu0 %v761
        %2310 = vmatmul.mubr.f32.gmra.mxu0 %v760
        %v2311 = vpop.f32.mrf.mxu0
        %v2312 = vadd.f32 %v2055, %v2311
        %v2313 = vpop.f32.mrf.mxu0
        %v2314 = vadd.f32 %v2057, %v2313
        %2315 = vmatprep.mubr.f32.mxu0 %v769
        %2316 = vmatmul.mubr.f32.gmra.mxu0 %v768
        %v2317 = vpop.f32.mrf.mxu0
        %v2318 = vadd.f32 %v2061, %v2317
        %v2319 = vpop.f32.mrf.mxu0
        %v2320 = vadd.f32 %v2063, %v2319
        %2321 = vmatprep.mubr.f32.mxu0 %v777
        %2322 = vmatmul.mubr.f32.gmra.mxu0 %v776
        %v2323 = vpop.f32.mrf.mxu0
        %v2324 = vadd.f32 %v2067, %v2323
        %v2325 = vpop.f32.mrf.mxu0
        %v2326 = vadd.f32 %v2069, %v2325
        %2327 = vmatprep.mubr.f32.mxu0 %v785
        %2328 = vmatmul.mubr.f32.gmra.mxu0 %v784
        %v2329 = vpop.f32.mrf.mxu0
        %v2330 = vadd.f32 %v2073, %v2329
        %v2331 = vpop.f32.mrf.mxu0
        %v2332 = vadd.f32 %v2075, %v2331
        %2333 = vmatprep.mubr.f32.mxu0 %v793
        %2334 = vmatmul.mubr.f32.gmra.mxu0 %v792
        %v2335 = vpop.f32.mrf.mxu0
        %v2336 = vadd.f32 %v2079, %v2335
        %v2337 = vpop.f32.mrf.mxu0
        %v2338 = vadd.f32 %v2081, %v2337
        %2339 = vmatprep.mubr.f32.mxu0 %v801
        %2340 = vmatmul.mubr.f32.gmra.mxu0 %v800
        %v2341 = vpop.f32.mrf.mxu0
        %v2342 = vadd.f32 %v2085, %v2341
        %v2343 = vpop.f32.mrf.mxu0
        %v2344 = vadd.f32 %v2087, %v2343
        %2345 = vmatprep.mubr.f32.mxu0 %v809
        %2346 = vmatmul.mubr.f32.gmra.mxu0 %v808
        %v2347 = vpop.f32.mrf.mxu0
        %v2348 = vadd.f32 %v2091, %v2347
        %v2349 = vpop.f32.mrf.mxu0
        %v2350 = vadd.f32 %v2093, %v2349
        %2351 = vmatprep.mubr.f32.mxu0 %v817
        %2352 = vmatmul.mubr.f32.gmra.mxu0 %v816
        %v2353 = vpop.f32.mrf.mxu0
        %v2354 = vadd.f32 %v2097, %v2353
        %v2355 = vpop.f32.mrf.mxu0
        %v2356 = vadd.f32 %v2099, %v2355
        %2357 = vdwg.mxu0
        %2358 = vmatprep.subr.mxu0 %v1195
        %2359 = vmatpush1.xpose.msra.mxu0 %v1194
        %2360 = vmatprep.subr.mxu0 %v1187
        %2361 = vmatpush1.xpose.msra.mxu0 %v1186
        %2362 = vmatprep.subr.mxu0 %v1179
        %2363 = vmatpush1.xpose.msra.mxu0 %v1178
        %2364 = vmatprep.subr.mxu0 %v1171
        %2365 = vmatpush1.xpose.msra.mxu0 %v1170
        %2366 = vmatprep.subr.mxu0 %v1163
        %2367 = vmatpush1.xpose.msra.mxu0 %v1162
        %2368 = vmatprep.subr.mxu0 %v1155
        %2369 = vmatpush1.xpose.msra.mxu0 %v1154
        %2370 = vmatprep.subr.mxu0 %v1147
        %2371 = vmatpush1.xpose.msra.mxu0 %v1146
        %2372 = vmatprep.subr.mxu0 %v1139
        %2373 = vmatpush1.xpose.msra.mxu0 %v1138
        %2374 = vmatprep.subr.mxu0 %v1131
        %2375 = vmatpush1.xpose.msra.mxu0 %v1130
        %2376 = vmatprep.subr.mxu0 %v1123
        %2377 = vmatpush1.xpose.msra.mxu0 %v1122
        %2378 = vmatprep.subr.mxu0 %v1115
        %2379 = vmatpush1.xpose.msra.mxu0 %v1114
        %2380 = vmatprep.subr.mxu0 %v1107
        %2381 = vmatpush1.xpose.msra.mxu0 %v1106
        %2382 = vmatprep.subr.mxu0 %v1099
        %2383 = vmatpush1.xpose.msra.mxu0 %v1098
        %2384 = vmatprep.subr.mxu0 %v1091
        %2385 = vmatpush1.xpose.msra.mxu0 %v1090
        %2386 = vmatprep.subr.mxu0 %v1083
        %2387 = vmatpush1.xpose.msra.mxu0 %v1082
        %2388 = vmatprep.subr.mxu0 %v1075
        %2389 = vmatpush1.xpose.msra.mxu0 %v1074
        %2390 = vmatprep.subr.mxu0 %v1323
        %2391 = vmatpush2.xpose.msra.mxu0 %v1322
        %2392 = vmatprep.subr.mxu0 %v1315
        %2393 = vmatpush2.xpose.msra.mxu0 %v1314
        %2394 = vmatprep.subr.mxu0 %v1307
        %2395 = vmatpush2.xpose.msra.mxu0 %v1306
        %2396 = vmatprep.subr.mxu0 %v1299
        %2397 = vmatpush2.xpose.msra.mxu0 %v1298
        %2398 = vmatprep.subr.mxu0 %v1291
        %2399 = vmatpush2.xpose.msra.mxu0 %v1290
        %2400 = vmatprep.subr.mxu0 %v1283
        %2401 = vmatpush2.xpose.msra.mxu0 %v1282
        %2402 = vmatprep.subr.mxu0 %v1275
        %2403 = vmatpush2.xpose.msra.mxu0 %v1274
        %2404 = vmatprep.subr.mxu0 %v1267
        %2405 = vmatpush2.xpose.msra.mxu0 %v1266
        %2406 = vmatprep.subr.mxu0 %v1259
        %2407 = vmatpush2.xpose.msra.mxu0 %v1258
        %2408 = vmatprep.subr.mxu0 %v1251
        %2409 = vmatpush2.xpose.msra.mxu0 %v1250
        %2410 = vmatprep.subr.mxu0 %v1243
        %2411 = vmatpush2.xpose.msra.mxu0 %v1242
        %2412 = vmatprep.subr.mxu0 %v1235
        %2413 = vmatpush2.xpose.msra.mxu0 %v1234
        %2414 = vmatprep.subr.mxu0 %v1227
        %2415 = vmatpush2.xpose.msra.mxu0 %v1226
        %2416 = vmatprep.subr.mxu0 %v1219
        %2417 = vmatpush2.xpose.msra.mxu0 %v1218
        %2418 = vmatprep.subr.mxu0 %v1211
        %2419 = vmatpush2.xpose.msra.mxu0 %v1210
        %2420 = vmatprep.subr.mxu0 %v1203
        %2421 = vmatpush2.xpose.msra.mxu0 %v1202
        %2422 = vmatprep.mubr.f32.mxu0 %v563
        %2423 = vmatmul.mubr.f32.gmra.mxu0 %v562
        %v2424 = vpop.f32.mrf.mxu0
        %v2425 = vadd.f32 0.0, %v2424
        %v2426 = vpop.f32.mrf.mxu0
        %v2427 = vadd.f32 0.0, %v2426
        %2428 = vmatprep.mubr.f32.mxu0 %v571
        %2429 = vmatmul.mubr.f32.gmra.mxu0 %v570
        %v2430 = vpop.f32.mrf.mxu0
        %v2431 = vadd.f32 0.0, %v2430
        %v2432 = vpop.f32.mrf.mxu0
        %v2433 = vadd.f32 0.0, %v2432
        %2434 = vmatprep.mubr.f32.mxu0 %v579
        %2435 = vmatmul.mubr.f32.gmra.mxu0 %v578
        %v2436 = vpop.f32.mrf.mxu0
        %v2437 = vadd.f32 0.0, %v2436
        %v2438 = vpop.f32.mrf.mxu0
        %v2439 = vadd.f32 0.0, %v2438
        %2440 = vmatprep.mubr.f32.mxu0 %v587
        %2441 = vmatmul.mubr.f32.gmra.mxu0 %v586
        %v2442 = vpop.f32.mrf.mxu0
        %v2443 = vadd.f32 0.0, %v2442
        %v2444 = vpop.f32.mrf.mxu0
        %v2445 = vadd.f32 0.0, %v2444
        %2446 = vmatprep.mubr.f32.mxu0 %v595
        %2447 = vmatmul.mubr.f32.gmra.mxu0 %v594
        %v2448 = vpop.f32.mrf.mxu0
        %v2449 = vadd.f32 0.0, %v2448
        %v2450 = vpop.f32.mrf.mxu0
        %v2451 = vadd.f32 0.0, %v2450
        %2452 = vmatprep.mubr.f32.mxu0 %v603
        %2453 = vmatmul.mubr.f32.gmra.mxu0 %v602
        %v2454 = vpop.f32.mrf.mxu0
        %v2455 = vadd.f32 0.0, %v2454
        %v2456 = vpop.f32.mrf.mxu0
        %v2457 = vadd.f32 0.0, %v2456
        %2458 = vmatprep.mubr.f32.mxu0 %v611
        %2459 = vmatmul.mubr.f32.gmra.mxu0 %v610
        %v2460 = vpop.f32.mrf.mxu0
        %v2461 = vadd.f32 0.0, %v2460
        %v2462 = vpop.f32.mrf.mxu0
        %v2463 = vadd.f32 0.0, %v2462
        %2464 = vmatprep.mubr.f32.mxu0 %v619
        %2465 = vmatmul.mubr.f32.gmra.mxu0 %v618
        %v2466 = vpop.f32.mrf.mxu0
        %v2467 = vadd.f32 0.0, %v2466
        %v2468 = vpop.f32.mrf.mxu0
        %v2469 = vadd.f32 0.0, %v2468
        %2470 = vmatprep.mubr.f32.mxu0 %v627
        %2471 = vmatmul.mubr.f32.gmra.mxu0 %v626
        %v2472 = vpop.f32.mrf.mxu0
        %v2473 = vadd.f32 0.0, %v2472
        %v2474 = vpop.f32.mrf.mxu0
        %v2475 = vadd.f32 0.0, %v2474
        %2476 = vmatprep.mubr.f32.mxu0 %v635
        %2477 = vmatmul.mubr.f32.gmra.mxu0 %v634
        %v2478 = vpop.f32.mrf.mxu0
        %v2479 = vadd.f32 0.0, %v2478
        %v2480 = vpop.f32.mrf.mxu0
        %v2481 = vadd.f32 0.0, %v2480
        %2482 = vmatprep.mubr.f32.mxu0 %v643
        %2483 = vmatmul.mubr.f32.gmra.mxu0 %v642
        %v2484 = vpop.f32.mrf.mxu0
        %v2485 = vadd.f32 0.0, %v2484
        %v2486 = vpop.f32.mrf.mxu0
        %v2487 = vadd.f32 0.0, %v2486
        %2488 = vmatprep.mubr.f32.mxu0 %v651
        %2489 = vmatmul.mubr.f32.gmra.mxu0 %v650
        %v2490 = vpop.f32.mrf.mxu0
        %v2491 = vadd.f32 0.0, %v2490
        %v2492 = vpop.f32.mrf.mxu0
        %v2493 = vadd.f32 0.0, %v2492
        %2494 = vmatprep.mubr.f32.mxu0 %v659
        %2495 = vmatmul.mubr.f32.gmra.mxu0 %v658
        %v2496 = vpop.f32.mrf.mxu0
        %v2497 = vadd.f32 0.0, %v2496
        %v2498 = vpop.f32.mrf.mxu0
        %v2499 = vadd.f32 0.0, %v2498
        %2500 = vmatprep.mubr.f32.mxu0 %v667
        %2501 = vmatmul.mubr.f32.gmra.mxu0 %v666
        %v2502 = vpop.f32.mrf.mxu0
        %v2503 = vadd.f32 0.0, %v2502
        %v2504 = vpop.f32.mrf.mxu0
        %v2505 = vadd.f32 0.0, %v2504
        %2506 = vmatprep.mubr.f32.mxu0 %v675
        %2507 = vmatmul.mubr.f32.gmra.mxu0 %v674
        %v2508 = vpop.f32.mrf.mxu0
        %v2509 = vadd.f32 0.0, %v2508
        %v2510 = vpop.f32.mrf.mxu0
        %v2511 = vadd.f32 0.0, %v2510
        %2512 = vmatprep.mubr.f32.mxu0 %v683
        %2513 = vmatmul.mubr.f32.gmra.mxu0 %v682
        %v2514 = vpop.f32.mrf.mxu0
        %v2515 = vadd.f32 0.0, %v2514
        %v2516 = vpop.f32.mrf.mxu0
        %v2517 = vadd.f32 0.0, %v2516
        %2518 = vmatprep.mubr.f32.mxu0 %v691
        %2519 = vmatmul.mubr.f32.gmra.mxu0 %v690
        %v2520 = vpop.f32.mrf.mxu0
        %v2521 = vadd.f32 0.0, %v2520
        %v2522 = vpop.f32.mrf.mxu0
        %v2523 = vadd.f32 0.0, %v2522
        %2524 = vmatprep.mubr.f32.mxu0 %v699
        %2525 = vmatmul.mubr.f32.gmra.mxu0 %v698
        %v2526 = vpop.f32.mrf.mxu0
        %v2527 = vadd.f32 0.0, %v2526
        %v2528 = vpop.f32.mrf.mxu0
        %v2529 = vadd.f32 0.0, %v2528
        %2530 = vmatprep.mubr.f32.mxu0 %v707
        %2531 = vmatmul.mubr.f32.gmra.mxu0 %v706
        %v2532 = vpop.f32.mrf.mxu0
        %v2533 = vadd.f32 0.0, %v2532
        %v2534 = vpop.f32.mrf.mxu0
        %v2535 = vadd.f32 0.0, %v2534
        %2536 = vmatprep.mubr.f32.mxu0 %v715
        %2537 = vmatmul.mubr.f32.gmra.mxu0 %v714
        %v2538 = vpop.f32.mrf.mxu0
        %v2539 = vadd.f32 0.0, %v2538
        %v2540 = vpop.f32.mrf.mxu0
        %v2541 = vadd.f32 0.0, %v2540
        %2542 = vmatprep.mubr.f32.mxu0 %v723
        %2543 = vmatmul.mubr.f32.gmra.mxu0 %v722
        %v2544 = vpop.f32.mrf.mxu0
        %v2545 = vadd.f32 0.0, %v2544
        %v2546 = vpop.f32.mrf.mxu0
        %v2547 = vadd.f32 0.0, %v2546
        %2548 = vmatprep.mubr.f32.mxu0 %v731
        %2549 = vmatmul.mubr.f32.gmra.mxu0 %v730
        %v2550 = vpop.f32.mrf.mxu0
        %v2551 = vadd.f32 0.0, %v2550
        %v2552 = vpop.f32.mrf.mxu0
        %v2553 = vadd.f32 0.0, %v2552
        %2554 = vmatprep.mubr.f32.mxu0 %v739
        %2555 = vmatmul.mubr.f32.gmra.mxu0 %v738
        %v2556 = vpop.f32.mrf.mxu0
        %v2557 = vadd.f32 0.0, %v2556
        %v2558 = vpop.f32.mrf.mxu0
        %v2559 = vadd.f32 0.0, %v2558
        %2560 = vmatprep.mubr.f32.mxu0 %v747
        %2561 = vmatmul.mubr.f32.gmra.mxu0 %v746
        %v2562 = vpop.f32.mrf.mxu0
        %v2563 = vadd.f32 0.0, %v2562
        %v2564 = vpop.f32.mrf.mxu0
        %v2565 = vadd.f32 0.0, %v2564
        %2566 = vmatprep.mubr.f32.mxu0 %v755
        %2567 = vmatmul.mubr.f32.gmra.mxu0 %v754
        %v2568 = vpop.f32.mrf.mxu0
        %v2569 = vadd.f32 0.0, %v2568
        %v2570 = vpop.f32.mrf.mxu0
        %v2571 = vadd.f32 0.0, %v2570
        %2572 = vmatprep.mubr.f32.mxu0 %v763
        %2573 = vmatmul.mubr.f32.gmra.mxu0 %v762
        %v2574 = vpop.f32.mrf.mxu0
        %v2575 = vadd.f32 0.0, %v2574
        %v2576 = vpop.f32.mrf.mxu0
        %v2577 = vadd.f32 0.0, %v2576
        %2578 = vmatprep.mubr.f32.mxu0 %v771
        %2579 = vmatmul.mubr.f32.gmra.mxu0 %v770
        %v2580 = vpop.f32.mrf.mxu0
        %v2581 = vadd.f32 0.0, %v2580
        %v2582 = vpop.f32.mrf.mxu0
        %v2583 = vadd.f32 0.0, %v2582
        %2584 = vmatprep.mubr.f32.mxu0 %v779
        %2585 = vmatmul.mubr.f32.gmra.mxu0 %v778
        %v2586 = vpop.f32.mrf.mxu0
        %v2587 = vadd.f32 0.0, %v2586
        %v2588 = vpop.f32.mrf.mxu0
        %v2589 = vadd.f32 0.0, %v2588
        %2590 = vmatprep.mubr.f32.mxu0 %v787
        %2591 = vmatmul.mubr.f32.gmra.mxu0 %v786
        %v2592 = vpop.f32.mrf.mxu0
        %v2593 = vadd.f32 0.0, %v2592
        %v2594 = vpop.f32.mrf.mxu0
        %v2595 = vadd.f32 0.0, %v2594
        %2596 = vmatprep.mubr.f32.mxu0 %v795
        %2597 = vmatmul.mubr.f32.gmra.mxu0 %v794
        %v2598 = vpop.f32.mrf.mxu0
        %v2599 = vadd.f32 0.0, %v2598
        %v2600 = vpop.f32.mrf.mxu0
        %v2601 = vadd.f32 0.0, %v2600
        %2602 = vmatprep.mubr.f32.mxu0 %v803
        %2603 = vmatmul.mubr.f32.gmra.mxu0 %v802
        %v2604 = vpop.f32.mrf.mxu0
        %v2605 = vadd.f32 0.0, %v2604
        %v2606 = vpop.f32.mrf.mxu0
        %v2607 = vadd.f32 0.0, %v2606
        %2608 = vmatprep.mubr.f32.mxu0 %v811
        %2609 = vmatmul.mubr.f32.gmra.mxu0 %v810
        %v2610 = vpop.f32.mrf.mxu0
        %v2611 = vadd.f32 0.0, %v2610
        %v2612 = vpop.f32.mrf.mxu0
        %v2613 = vadd.f32 0.0, %v2612
        %2614 = vdwg.mxu0
        %2615 = vmatprep.subr.mxu0 %v1197
        %2616 = vmatpush1.xpose.msra.mxu0 %v1196
        %2617 = vmatprep.subr.mxu0 %v1189
        %2618 = vmatpush1.xpose.msra.mxu0 %v1188
        %2619 = vmatprep.subr.mxu0 %v1181
        %2620 = vmatpush1.xpose.msra.mxu0 %v1180
        %2621 = vmatprep.subr.mxu0 %v1173
        %2622 = vmatpush1.xpose.msra.mxu0 %v1172
        %2623 = vmatprep.subr.mxu0 %v1165
        %2624 = vmatpush1.xpose.msra.mxu0 %v1164
        %2625 = vmatprep.subr.mxu0 %v1157
        %2626 = vmatpush1.xpose.msra.mxu0 %v1156
        %2627 = vmatprep.subr.mxu0 %v1149
        %2628 = vmatpush1.xpose.msra.mxu0 %v1148
        %2629 = vmatprep.subr.mxu0 %v1141
        %2630 = vmatpush1.xpose.msra.mxu0 %v1140
        %2631 = vmatprep.subr.mxu0 %v1133
        %2632 = vmatpush1.xpose.msra.mxu0 %v1132
        %2633 = vmatprep.subr.mxu0 %v1125
        %2634 = vmatpush1.xpose.msra.mxu0 %v1124
        %2635 = vmatprep.subr.mxu0 %v1117
        %2636 = vmatpush1.xpose.msra.mxu0 %v1116
        %2637 = vmatprep.subr.mxu0 %v1109
        %2638 = vmatpush1.xpose.msra.mxu0 %v1108
        %2639 = vmatprep.subr.mxu0 %v1101
        %2640 = vmatpush1.xpose.msra.mxu0 %v1100
        %2641 = vmatprep.subr.mxu0 %v1093
        %2642 = vmatpush1.xpose.msra.mxu0 %v1092
        %2643 = vmatprep.subr.mxu0 %v1085
        %2644 = vmatpush1.xpose.msra.mxu0 %v1084
        %2645 = vmatprep.subr.mxu0 %v1077
        %2646 = vmatpush1.xpose.msra.mxu0 %v1076
        %2647 = vmatprep.subr.mxu0 %v1325
        %2648 = vmatpush2.xpose.msra.mxu0 %v1324
        %2649 = vmatprep.subr.mxu0 %v1317
        %2650 = vmatpush2.xpose.msra.mxu0 %v1316
        %2651 = vmatprep.subr.mxu0 %v1309
        %2652 = vmatpush2.xpose.msra.mxu0 %v1308
        %2653 = vmatprep.subr.mxu0 %v1301
        %2654 = vmatpush2.xpose.msra.mxu0 %v1300
        %2655 = vmatprep.subr.mxu0 %v1293
        %2656 = vmatpush2.xpose.msra.mxu0 %v1292
        %2657 = vmatprep.subr.mxu0 %v1285
        %2658 = vmatpush2.xpose.msra.mxu0 %v1284
        %2659 = vmatprep.subr.mxu0 %v1277
        %2660 = vmatpush2.xpose.msra.mxu0 %v1276
        %2661 = vmatprep.subr.mxu0 %v1269
        %2662 = vmatpush2.xpose.msra.mxu0 %v1268
        %2663 = vmatprep.subr.mxu0 %v1261
        %2664 = vmatpush2.xpose.msra.mxu0 %v1260
        %2665 = vmatprep.subr.mxu0 %v1253
        %2666 = vmatpush2.xpose.msra.mxu0 %v1252
        %2667 = vmatprep.subr.mxu0 %v1245
        %2668 = vmatpush2.xpose.msra.mxu0 %v1244
        %2669 = vmatprep.subr.mxu0 %v1237
        %2670 = vmatpush2.xpose.msra.mxu0 %v1236
        %2671 = vmatprep.subr.mxu0 %v1229
        %2672 = vmatpush2.xpose.msra.mxu0 %v1228
        %2673 = vmatprep.subr.mxu0 %v1221
        %2674 = vmatpush2.xpose.msra.mxu0 %v1220
        %2675 = vmatprep.subr.mxu0 %v1213
        %2676 = vmatpush2.xpose.msra.mxu0 %v1212
        %2677 = vmatprep.subr.mxu0 %v1205
        %2678 = vmatpush2.xpose.msra.mxu0 %v1204
        %2679 = vmatprep.mubr.f32.mxu0 %v565
        %2680 = vmatmul.mubr.f32.gmra.mxu0 %v564
        %v2681 = vpop.f32.mrf.mxu0
        %v2682 = vadd.f32 %v2425, %v2681
        %v2683 = vpop.f32.mrf.mxu0
        %v2684 = vadd.f32 %v2427, %v2683
        %2685 = vmatprep.mubr.f32.mxu0 %v573
        %2686 = vmatmul.mubr.f32.gmra.mxu0 %v572
        %v2687 = vpop.f32.mrf.mxu0
        %v2688 = vadd.f32 %v2431, %v2687
        %v2689 = vpop.f32.mrf.mxu0
        %v2690 = vadd.f32 %v2433, %v2689
        %2691 = vmatprep.mubr.f32.mxu0 %v581
        %2692 = vmatmul.mubr.f32.gmra.mxu0 %v580
        %v2693 = vpop.f32.mrf.mxu0
        %v2694 = vadd.f32 %v2437, %v2693
        %v2695 = vpop.f32.mrf.mxu0
        %v2696 = vadd.f32 %v2439, %v2695
        %2697 = vmatprep.mubr.f32.mxu0 %v589
        %2698 = vmatmul.mubr.f32.gmra.mxu0 %v588
        %v2699 = vpop.f32.mrf.mxu0
        %v2700 = vadd.f32 %v2443, %v2699
        %v2701 = vpop.f32.mrf.mxu0
        %v2702 = vadd.f32 %v2445, %v2701
        %2703 = vmatprep.mubr.f32.mxu0 %v597
        %2704 = vmatmul.mubr.f32.gmra.mxu0 %v596
        %v2705 = vpop.f32.mrf.mxu0
        %v2706 = vadd.f32 %v2449, %v2705
        %v2707 = vpop.f32.mrf.mxu0
        %v2708 = vadd.f32 %v2451, %v2707
        %2709 = vmatprep.mubr.f32.mxu0 %v605
        %2710 = vmatmul.mubr.f32.gmra.mxu0 %v604
        %v2711 = vpop.f32.mrf.mxu0
        %v2712 = vadd.f32 %v2455, %v2711
        %v2713 = vpop.f32.mrf.mxu0
        %v2714 = vadd.f32 %v2457, %v2713
        %2715 = vmatprep.mubr.f32.mxu0 %v613
        %2716 = vmatmul.mubr.f32.gmra.mxu0 %v612
        %v2717 = vpop.f32.mrf.mxu0
        %v2718 = vadd.f32 %v2461, %v2717
        %v2719 = vpop.f32.mrf.mxu0
        %v2720 = vadd.f32 %v2463, %v2719
        %2721 = vmatprep.mubr.f32.mxu0 %v621
        %2722 = vmatmul.mubr.f32.gmra.mxu0 %v620
        %v2723 = vpop.f32.mrf.mxu0
        %v2724 = vadd.f32 %v2467, %v2723
        %v2725 = vpop.f32.mrf.mxu0
        %v2726 = vadd.f32 %v2469, %v2725
        %2727 = vmatprep.mubr.f32.mxu0 %v629
        %2728 = vmatmul.mubr.f32.gmra.mxu0 %v628
        %v2729 = vpop.f32.mrf.mxu0
        %v2730 = vadd.f32 %v2473, %v2729
        %v2731 = vpop.f32.mrf.mxu0
        %v2732 = vadd.f32 %v2475, %v2731
        %2733 = vmatprep.mubr.f32.mxu0 %v637
        %2734 = vmatmul.mubr.f32.gmra.mxu0 %v636
        %v2735 = vpop.f32.mrf.mxu0
        %v2736 = vadd.f32 %v2479, %v2735
        %v2737 = vpop.f32.mrf.mxu0
        %v2738 = vadd.f32 %v2481, %v2737
        %2739 = vmatprep.mubr.f32.mxu0 %v645
        %2740 = vmatmul.mubr.f32.gmra.mxu0 %v644
        %v2741 = vpop.f32.mrf.mxu0
        %v2742 = vadd.f32 %v2485, %v2741
        %v2743 = vpop.f32.mrf.mxu0
        %v2744 = vadd.f32 %v2487, %v2743
        %2745 = vmatprep.mubr.f32.mxu0 %v653
        %2746 = vmatmul.mubr.f32.gmra.mxu0 %v652
        %v2747 = vpop.f32.mrf.mxu0
        %v2748 = vadd.f32 %v2491, %v2747
        %v2749 = vpop.f32.mrf.mxu0
        %v2750 = vadd.f32 %v2493, %v2749
        %2751 = vmatprep.mubr.f32.mxu0 %v661
        %2752 = vmatmul.mubr.f32.gmra.mxu0 %v660
        %v2753 = vpop.f32.mrf.mxu0
        %v2754 = vadd.f32 %v2497, %v2753
        %v2755 = vpop.f32.mrf.mxu0
        %v2756 = vadd.f32 %v2499, %v2755
        %2757 = vmatprep.mubr.f32.mxu0 %v669
        %2758 = vmatmul.mubr.f32.gmra.mxu0 %v668
        %v2759 = vpop.f32.mrf.mxu0
        %v2760 = vadd.f32 %v2503, %v2759
        %v2761 = vpop.f32.mrf.mxu0
        %v2762 = vadd.f32 %v2505, %v2761
        %2763 = vmatprep.mubr.f32.mxu0 %v677
        %2764 = vmatmul.mubr.f32.gmra.mxu0 %v676
        %v2765 = vpop.f32.mrf.mxu0
        %v2766 = vadd.f32 %v2509, %v2765
        %v2767 = vpop.f32.mrf.mxu0
        %v2768 = vadd.f32 %v2511, %v2767
        %2769 = vmatprep.mubr.f32.mxu0 %v685
        %2770 = vmatmul.mubr.f32.gmra.mxu0 %v684
        %v2771 = vpop.f32.mrf.mxu0
        %v2772 = vadd.f32 %v2515, %v2771
        %v2773 = vpop.f32.mrf.mxu0
        %v2774 = vadd.f32 %v2517, %v2773
        %2775 = vmatprep.mubr.f32.mxu0 %v693
        %2776 = vmatmul.mubr.f32.gmra.mxu0 %v692
        %v2777 = vpop.f32.mrf.mxu0
        %v2778 = vadd.f32 %v2521, %v2777
        %v2779 = vpop.f32.mrf.mxu0
        %v2780 = vadd.f32 %v2523, %v2779
        %2781 = vmatprep.mubr.f32.mxu0 %v701
        %2782 = vmatmul.mubr.f32.gmra.mxu0 %v700
        %v2783 = vpop.f32.mrf.mxu0
        %v2784 = vadd.f32 %v2527, %v2783
        %v2785 = vpop.f32.mrf.mxu0
        %v2786 = vadd.f32 %v2529, %v2785
        %2787 = vmatprep.mubr.f32.mxu0 %v709
        %2788 = vmatmul.mubr.f32.gmra.mxu0 %v708
        %v2789 = vpop.f32.mrf.mxu0
        %v2790 = vadd.f32 %v2533, %v2789
        %v2791 = vpop.f32.mrf.mxu0
        %v2792 = vadd.f32 %v2535, %v2791
        %2793 = vmatprep.mubr.f32.mxu0 %v717
        %2794 = vmatmul.mubr.f32.gmra.mxu0 %v716
        %v2795 = vpop.f32.mrf.mxu0
        %v2796 = vadd.f32 %v2539, %v2795
        %v2797 = vpop.f32.mrf.mxu0
        %v2798 = vadd.f32 %v2541, %v2797
        %2799 = vmatprep.mubr.f32.mxu0 %v725
        %2800 = vmatmul.mubr.f32.gmra.mxu0 %v724
        %v2801 = vpop.f32.mrf.mxu0
        %v2802 = vadd.f32 %v2545, %v2801
        %v2803 = vpop.f32.mrf.mxu0
        %v2804 = vadd.f32 %v2547, %v2803
        %2805 = vmatprep.mubr.f32.mxu0 %v733
        %2806 = vmatmul.mubr.f32.gmra.mxu0 %v732
        %v2807 = vpop.f32.mrf.mxu0
        %v2808 = vadd.f32 %v2551, %v2807
        %v2809 = vpop.f32.mrf.mxu0
        %v2810 = vadd.f32 %v2553, %v2809
        %2811 = vmatprep.mubr.f32.mxu0 %v741
        %2812 = vmatmul.mubr.f32.gmra.mxu0 %v740
        %v2813 = vpop.f32.mrf.mxu0
        %v2814 = vadd.f32 %v2557, %v2813
        %v2815 = vpop.f32.mrf.mxu0
        %v2816 = vadd.f32 %v2559, %v2815
        %2817 = vmatprep.mubr.f32.mxu0 %v749
        %2818 = vmatmul.mubr.f32.gmra.mxu0 %v748
        %v2819 = vpop.f32.mrf.mxu0
        %v2820 = vadd.f32 %v2563, %v2819
        %v2821 = vpop.f32.mrf.mxu0
        %v2822 = vadd.f32 %v2565, %v2821
        %2823 = vmatprep.mubr.f32.mxu0 %v757
        %2824 = vmatmul.mubr.f32.gmra.mxu0 %v756
        %v2825 = vpop.f32.mrf.mxu0
        %v2826 = vadd.f32 %v2569, %v2825
        %v2827 = vpop.f32.mrf.mxu0
        %v2828 = vadd.f32 %v2571, %v2827
        %2829 = vmatprep.mubr.f32.mxu0 %v765
        %2830 = vmatmul.mubr.f32.gmra.mxu0 %v764
        %v2831 = vpop.f32.mrf.mxu0
        %v2832 = vadd.f32 %v2575, %v2831
        %v2833 = vpop.f32.mrf.mxu0
        %v2834 = vadd.f32 %v2577, %v2833
        %2835 = vmatprep.mubr.f32.mxu0 %v773
        %2836 = vmatmul.mubr.f32.gmra.mxu0 %v772
        %v2837 = vpop.f32.mrf.mxu0
        %v2838 = vadd.f32 %v2581, %v2837
        %v2839 = vpop.f32.mrf.mxu0
        %v2840 = vadd.f32 %v2583, %v2839
        %2841 = vmatprep.mubr.f32.mxu0 %v781
        %2842 = vmatmul.mubr.f32.gmra.mxu0 %v780
        %v2843 = vpop.f32.mrf.mxu0
        %v2844 = vadd.f32 %v2587, %v2843
        %v2845 = vpop.f32.mrf.mxu0
        %v2846 = vadd.f32 %v2589, %v2845
        %2847 = vmatprep.mubr.f32.mxu0 %v789
        %2848 = vmatmul.mubr.f32.gmra.mxu0 %v788
        %v2849 = vpop.f32.mrf.mxu0
        %v2850 = vadd.f32 %v2593, %v2849
        %v2851 = vpop.f32.mrf.mxu0
        %v2852 = vadd.f32 %v2595, %v2851
        %2853 = vmatprep.mubr.f32.mxu0 %v797
        %2854 = vmatmul.mubr.f32.gmra.mxu0 %v796
        %v2855 = vpop.f32.mrf.mxu0
        %v2856 = vadd.f32 %v2599, %v2855
        %v2857 = vpop.f32.mrf.mxu0
        %v2858 = vadd.f32 %v2601, %v2857
        %2859 = vmatprep.mubr.f32.mxu0 %v805
        %2860 = vmatmul.mubr.f32.gmra.mxu0 %v804
        %v2861 = vpop.f32.mrf.mxu0
        %v2862 = vadd.f32 %v2605, %v2861
        %v2863 = vpop.f32.mrf.mxu0
        %v2864 = vadd.f32 %v2607, %v2863
        %2865 = vmatprep.mubr.f32.mxu0 %v813
        %2866 = vmatmul.mubr.f32.gmra.mxu0 %v812
        %v2867 = vpop.f32.mrf.mxu0
        %v2868 = vadd.f32 %v2611, %v2867
        %v2869 = vpop.f32.mrf.mxu0
        %v2870 = vadd.f32 %v2613, %v2869
        %2871 = vdwg.mxu0
        %2872 = vmatprep.subr.mxu0 %v1199
        %2873 = vmatpush1.xpose.msra.mxu0 %v1198
        %2874 = vmatprep.subr.mxu0 %v1191
        %2875 = vmatpush1.xpose.msra.mxu0 %v1190
        %2876 = vmatprep.subr.mxu0 %v1183
        %2877 = vmatpush1.xpose.msra.mxu0 %v1182
        %2878 = vmatprep.subr.mxu0 %v1175
        %2879 = vmatpush1.xpose.msra.mxu0 %v1174
        %2880 = vmatprep.subr.mxu0 %v1167
        %2881 = vmatpush1.xpose.msra.mxu0 %v1166
        %2882 = vmatprep.subr.mxu0 %v1159
        %2883 = vmatpush1.xpose.msra.mxu0 %v1158
        %2884 = vmatprep.subr.mxu0 %v1151
        %2885 = vmatpush1.xpose.msra.mxu0 %v1150
        %2886 = vmatprep.subr.mxu0 %v1143
        %2887 = vmatpush1.xpose.msra.mxu0 %v1142
        %2888 = vmatprep.subr.mxu0 %v1135
        %2889 = vmatpush1.xpose.msra.mxu0 %v1134
        %2890 = vmatprep.subr.mxu0 %v1127
        %2891 = vmatpush1.xpose.msra.mxu0 %v1126
        %2892 = vmatprep.subr.mxu0 %v1119
        %2893 = vmatpush1.xpose.msra.mxu0 %v1118
        %2894 = vmatprep.subr.mxu0 %v1111
        %2895 = vmatpush1.xpose.msra.mxu0 %v1110
        %2896 = vmatprep.subr.mxu0 %v1103
        %2897 = vmatpush1.xpose.msra.mxu0 %v1102
        %2898 = vmatprep.subr.mxu0 %v1095
        %2899 = vmatpush1.xpose.msra.mxu0 %v1094
        %2900 = vmatprep.subr.mxu0 %v1087
        %2901 = vmatpush1.xpose.msra.mxu0 %v1086
        %2902 = vmatprep.subr.mxu0 %v1079
        %2903 = vmatpush1.xpose.msra.mxu0 %v1078
        %2904 = vmatprep.subr.mxu0 %v1327
        %2905 = vmatpush2.xpose.msra.mxu0 %v1326
        %2906 = vmatprep.subr.mxu0 %v1319
        %2907 = vmatpush2.xpose.msra.mxu0 %v1318
        %2908 = vmatprep.subr.mxu0 %v1311
        %2909 = vmatpush2.xpose.msra.mxu0 %v1310
        %2910 = vmatprep.subr.mxu0 %v1303
        %2911 = vmatpush2.xpose.msra.mxu0 %v1302
        %2912 = vmatprep.subr.mxu0 %v1295
        %2913 = vmatpush2.xpose.msra.mxu0 %v1294
        %2914 = vmatprep.subr.mxu0 %v1287
        %2915 = vmatpush2.xpose.msra.mxu0 %v1286
        %2916 = vmatprep.subr.mxu0 %v1279
        %2917 = vmatpush2.xpose.msra.mxu0 %v1278
        %2918 = vmatprep.subr.mxu0 %v1271
        %2919 = vmatpush2.xpose.msra.mxu0 %v1270
        %2920 = vmatprep.subr.mxu0 %v1263
        %2921 = vmatpush2.xpose.msra.mxu0 %v1262
        %2922 = vmatprep.subr.mxu0 %v1255
        %2923 = vmatpush2.xpose.msra.mxu0 %v1254
        %2924 = vmatprep.subr.mxu0 %v1247
        %2925 = vmatpush2.xpose.msra.mxu0 %v1246
        %2926 = vmatprep.subr.mxu0 %v1239
        %2927 = vmatpush2.xpose.msra.mxu0 %v1238
        %2928 = vmatprep.subr.mxu0 %v1231
        %2929 = vmatpush2.xpose.msra.mxu0 %v1230
        %2930 = vmatprep.subr.mxu0 %v1223
        %2931 = vmatpush2.xpose.msra.mxu0 %v1222
        %2932 = vmatprep.subr.mxu0 %v1215
        %2933 = vmatpush2.xpose.msra.mxu0 %v1214
        %2934 = vmatprep.subr.mxu0 %v1207
        %2935 = vmatpush2.xpose.msra.mxu0 %v1206
        %2936 = vmatprep.mubr.f32.mxu0 %v567
        %2937 = vmatmul.mubr.f32.gmra.mxu0 %v566
        %v2938 = vpop.f32.mrf.mxu0
        %v2939 = vadd.f32 %v2682, %v2938
        %v2940 = vpop.f32.mrf.mxu0
        %v2941 = vadd.f32 %v2684, %v2940
        %2942 = vmatprep.mubr.f32.mxu0 %v575
        %2943 = vmatmul.mubr.f32.gmra.mxu0 %v574
        %v2944 = vpop.f32.mrf.mxu0
        %v2945 = vadd.f32 %v2688, %v2944
        %v2946 = vpop.f32.mrf.mxu0
        %v2947 = vadd.f32 %v2690, %v2946
        %2948 = vmatprep.mubr.f32.mxu0 %v583
        %2949 = vmatmul.mubr.f32.gmra.mxu0 %v582
        %v2950 = vpop.f32.mrf.mxu0
        %v2951 = vadd.f32 %v2694, %v2950
        %v2952 = vpop.f32.mrf.mxu0
        %v2953 = vadd.f32 %v2696, %v2952
        %2954 = vmatprep.mubr.f32.mxu0 %v591
        %2955 = vmatmul.mubr.f32.gmra.mxu0 %v590
        %v2956 = vpop.f32.mrf.mxu0
        %v2957 = vadd.f32 %v2700, %v2956
        %v2958 = vpop.f32.mrf.mxu0
        %v2959 = vadd.f32 %v2702, %v2958
        %2960 = vmatprep.mubr.f32.mxu0 %v599
        %2961 = vmatmul.mubr.f32.gmra.mxu0 %v598
        %v2962 = vpop.f32.mrf.mxu0
        %v2963 = vadd.f32 %v2706, %v2962
        %v2964 = vpop.f32.mrf.mxu0
        %v2965 = vadd.f32 %v2708, %v2964
        %2966 = vmatprep.mubr.f32.mxu0 %v607
        %2967 = vmatmul.mubr.f32.gmra.mxu0 %v606
        %v2968 = vpop.f32.mrf.mxu0
        %v2969 = vadd.f32 %v2712, %v2968
        %v2970 = vpop.f32.mrf.mxu0
        %v2971 = vadd.f32 %v2714, %v2970
        %2972 = vmatprep.mubr.f32.mxu0 %v615
        %2973 = vmatmul.mubr.f32.gmra.mxu0 %v614
        %v2974 = vpop.f32.mrf.mxu0
        %v2975 = vadd.f32 %v2718, %v2974
        %v2976 = vpop.f32.mrf.mxu0
        %v2977 = vadd.f32 %v2720, %v2976
        %2978 = vmatprep.mubr.f32.mxu0 %v623
        %2979 = vmatmul.mubr.f32.gmra.mxu0 %v622
        %v2980 = vpop.f32.mrf.mxu0
        %v2981 = vadd.f32 %v2724, %v2980
        %v2982 = vpop.f32.mrf.mxu0
        %v2983 = vadd.f32 %v2726, %v2982
        %2984 = vmatprep.mubr.f32.mxu0 %v631
        %2985 = vmatmul.mubr.f32.gmra.mxu0 %v630
        %v2986 = vpop.f32.mrf.mxu0
        %v2987 = vadd.f32 %v2730, %v2986
        %v2988 = vpop.f32.mrf.mxu0
        %v2989 = vadd.f32 %v2732, %v2988
        %2990 = vmatprep.mubr.f32.mxu0 %v639
        %2991 = vmatmul.mubr.f32.gmra.mxu0 %v638
        %v2992 = vpop.f32.mrf.mxu0
        %v2993 = vadd.f32 %v2736, %v2992
        %v2994 = vpop.f32.mrf.mxu0
        %v2995 = vadd.f32 %v2738, %v2994
        %2996 = vmatprep.mubr.f32.mxu0 %v647
        %2997 = vmatmul.mubr.f32.gmra.mxu0 %v646
        %v2998 = vpop.f32.mrf.mxu0
        %v2999 = vadd.f32 %v2742, %v2998
        %v3000 = vpop.f32.mrf.mxu0
        %v3001 = vadd.f32 %v2744, %v3000
        %3002 = vmatprep.mubr.f32.mxu0 %v655
        %3003 = vmatmul.mubr.f32.gmra.mxu0 %v654
        %v3004 = vpop.f32.mrf.mxu0
        %v3005 = vadd.f32 %v2748, %v3004
        %v3006 = vpop.f32.mrf.mxu0
        %v3007 = vadd.f32 %v2750, %v3006
        %3008 = vmatprep.mubr.f32.mxu0 %v663
        %3009 = vmatmul.mubr.f32.gmra.mxu0 %v662
        %v3010 = vpop.f32.mrf.mxu0
        %v3011 = vadd.f32 %v2754, %v3010
        %v3012 = vpop.f32.mrf.mxu0
        %v3013 = vadd.f32 %v2756, %v3012
        %3014 = vmatprep.mubr.f32.mxu0 %v671
        %3015 = vmatmul.mubr.f32.gmra.mxu0 %v670
        %v3016 = vpop.f32.mrf.mxu0
        %v3017 = vadd.f32 %v2760, %v3016
        %v3018 = vpop.f32.mrf.mxu0
        %v3019 = vadd.f32 %v2762, %v3018
        %3020 = vmatprep.mubr.f32.mxu0 %v679
        %3021 = vmatmul.mubr.f32.gmra.mxu0 %v678
        %v3022 = vpop.f32.mrf.mxu0
        %v3023 = vadd.f32 %v2766, %v3022
        %v3024 = vpop.f32.mrf.mxu0
        %v3025 = vadd.f32 %v2768, %v3024
        %3026 = vmatprep.mubr.f32.mxu0 %v687
        %3027 = vmatmul.mubr.f32.gmra.mxu0 %v686
        %v3028 = vpop.f32.mrf.mxu0
        %v3029 = vadd.f32 %v2772, %v3028
        %v3030 = vpop.f32.mrf.mxu0
        %v3031 = vadd.f32 %v2774, %v3030
        %3032 = vmatprep.mubr.f32.mxu0 %v695
        %3033 = vmatmul.mubr.f32.gmra.mxu0 %v694
        %v3034 = vpop.f32.mrf.mxu0
        %v3035 = vadd.f32 %v2778, %v3034
        %v3036 = vpop.f32.mrf.mxu0
        %v3037 = vadd.f32 %v2780, %v3036
        %3038 = vmatprep.mubr.f32.mxu0 %v703
        %3039 = vmatmul.mubr.f32.gmra.mxu0 %v702
        %v3040 = vpop.f32.mrf.mxu0
        %v3041 = vadd.f32 %v2784, %v3040
        %v3042 = vpop.f32.mrf.mxu0
        %v3043 = vadd.f32 %v2786, %v3042
        %3044 = vmatprep.mubr.f32.mxu0 %v711
        %3045 = vmatmul.mubr.f32.gmra.mxu0 %v710
        %v3046 = vpop.f32.mrf.mxu0
        %v3047 = vadd.f32 %v2790, %v3046
        %v3048 = vpop.f32.mrf.mxu0
        %v3049 = vadd.f32 %v2792, %v3048
        %3050 = vmatprep.mubr.f32.mxu0 %v719
        %3051 = vmatmul.mubr.f32.gmra.mxu0 %v718
        %v3052 = vpop.f32.mrf.mxu0
        %v3053 = vadd.f32 %v2796, %v3052
        %v3054 = vpop.f32.mrf.mxu0
        %v3055 = vadd.f32 %v2798, %v3054
        %3056 = vmatprep.mubr.f32.mxu0 %v727
        %3057 = vmatmul.mubr.f32.gmra.mxu0 %v726
        %v3058 = vpop.f32.mrf.mxu0
        %v3059 = vadd.f32 %v2802, %v3058
        %v3060 = vpop.f32.mrf.mxu0
        %v3061 = vadd.f32 %v2804, %v3060
        %3062 = vmatprep.mubr.f32.mxu0 %v735
        %3063 = vmatmul.mubr.f32.gmra.mxu0 %v734
        %v3064 = vpop.f32.mrf.mxu0
        %v3065 = vadd.f32 %v2808, %v3064
        %v3066 = vpop.f32.mrf.mxu0
        %v3067 = vadd.f32 %v2810, %v3066
        %3068 = vmatprep.mubr.f32.mxu0 %v743
        %3069 = vmatmul.mubr.f32.gmra.mxu0 %v742
        %v3070 = vpop.f32.mrf.mxu0
        %v3071 = vadd.f32 %v2814, %v3070
        %v3072 = vpop.f32.mrf.mxu0
        %v3073 = vadd.f32 %v2816, %v3072
        %3074 = vmatprep.mubr.f32.mxu0 %v751
        %3075 = vmatmul.mubr.f32.gmra.mxu0 %v750
        %v3076 = vpop.f32.mrf.mxu0
        %v3077 = vadd.f32 %v2820, %v3076
        %v3078 = vpop.f32.mrf.mxu0
        %v3079 = vadd.f32 %v2822, %v3078
        %3080 = vmatprep.mubr.f32.mxu0 %v759
        %3081 = vmatmul.mubr.f32.gmra.mxu0 %v758
        %v3082 = vpop.f32.mrf.mxu0
        %v3083 = vadd.f32 %v2826, %v3082
        %v3084 = vpop.f32.mrf.mxu0
        %v3085 = vadd.f32 %v2828, %v3084
        %3086 = vmatprep.mubr.f32.mxu0 %v767
        %3087 = vmatmul.mubr.f32.gmra.mxu0 %v766
        %v3088 = vpop.f32.mrf.mxu0
        %v3089 = vadd.f32 %v2832, %v3088
        %v3090 = vpop.f32.mrf.mxu0
        %v3091 = vadd.f32 %v2834, %v3090
        %3092 = vmatprep.mubr.f32.mxu0 %v775
        %3093 = vmatmul.mubr.f32.gmra.mxu0 %v774
        %v3094 = vpop.f32.mrf.mxu0
        %v3095 = vadd.f32 %v2838, %v3094
        %v3096 = vpop.f32.mrf.mxu0
        %v3097 = vadd.f32 %v2840, %v3096
        %3098 = vmatprep.mubr.f32.mxu0 %v783
        %3099 = vmatmul.mubr.f32.gmra.mxu0 %v782
        %v3100 = vpop.f32.mrf.mxu0
        %v3101 = vadd.f32 %v2844, %v3100
        %v3102 = vpop.f32.mrf.mxu0
        %v3103 = vadd.f32 %v2846, %v3102
        %3104 = vmatprep.mubr.f32.mxu0 %v791
        %3105 = vmatmul.mubr.f32.gmra.mxu0 %v790
        %v3106 = vpop.f32.mrf.mxu0
        %v3107 = vadd.f32 %v2850, %v3106
        %v3108 = vpop.f32.mrf.mxu0
        %v3109 = vadd.f32 %v2852, %v3108
        %3110 = vmatprep.mubr.f32.mxu0 %v799
        %3111 = vmatmul.mubr.f32.gmra.mxu0 %v798
        %v3112 = vpop.f32.mrf.mxu0
        %v3113 = vadd.f32 %v2856, %v3112
        %v3114 = vpop.f32.mrf.mxu0
        %v3115 = vadd.f32 %v2858, %v3114
        %3116 = vmatprep.mubr.f32.mxu0 %v807
        %3117 = vmatmul.mubr.f32.gmra.mxu0 %v806
        %v3118 = vpop.f32.mrf.mxu0
        %v3119 = vadd.f32 %v2862, %v3118
        %v3120 = vpop.f32.mrf.mxu0
        %v3121 = vadd.f32 %v2864, %v3120
        %3122 = vmatprep.mubr.f32.mxu0 %v815
        %3123 = vmatmul.mubr.f32.gmra.mxu0 %v814
        %v3124 = vpop.f32.mrf.mxu0
        %v3125 = vadd.f32 %v2868, %v3124
        %v3126 = vpop.f32.mrf.mxu0
        %v3127 = vadd.f32 %v2870, %v3126
        %3128 = vdwg.mxu0
        %3129 = vmatprep.subr.mxu0 %v1201
        %3130 = vmatpush1.xpose.msra.mxu0 %v1200
        %3131 = vmatprep.subr.mxu0 %v1193
        %3132 = vmatpush1.xpose.msra.mxu0 %v1192
        %3133 = vmatprep.subr.mxu0 %v1185
        %3134 = vmatpush1.xpose.msra.mxu0 %v1184
        %3135 = vmatprep.subr.mxu0 %v1177
        %3136 = vmatpush1.xpose.msra.mxu0 %v1176
        %3137 = vmatprep.subr.mxu0 %v1169
        %3138 = vmatpush1.xpose.msra.mxu0 %v1168
        %3139 = vmatprep.subr.mxu0 %v1161
        %3140 = vmatpush1.xpose.msra.mxu0 %v1160
        %3141 = vmatprep.subr.mxu0 %v1153
        %3142 = vmatpush1.xpose.msra.mxu0 %v1152
        %3143 = vmatprep.subr.mxu0 %v1145
        %3144 = vmatpush1.xpose.msra.mxu0 %v1144
        %3145 = vmatprep.subr.mxu0 %v1137
        %3146 = vmatpush1.xpose.msra.mxu0 %v1136
        %3147 = vmatprep.subr.mxu0 %v1129
        %3148 = vmatpush1.xpose.msra.mxu0 %v1128
        %3149 = vmatprep.subr.mxu0 %v1121
        %3150 = vmatpush1.xpose.msra.mxu0 %v1120
        %3151 = vmatprep.subr.mxu0 %v1113
        %3152 = vmatpush1.xpose.msra.mxu0 %v1112
        %3153 = vmatprep.subr.mxu0 %v1105
        %3154 = vmatpush1.xpose.msra.mxu0 %v1104
        %3155 = vmatprep.subr.mxu0 %v1097
        %3156 = vmatpush1.xpose.msra.mxu0 %v1096
        %3157 = vmatprep.subr.mxu0 %v1089
        %3158 = vmatpush1.xpose.msra.mxu0 %v1088
        %3159 = vmatprep.subr.mxu0 %v1081
        %3160 = vmatpush1.xpose.msra.mxu0 %v1080
        %3161 = vmatprep.subr.mxu0 %v1329
        %3162 = vmatpush2.xpose.msra.mxu0 %v1328
        %3163 = vmatprep.subr.mxu0 %v1321
        %3164 = vmatpush2.xpose.msra.mxu0 %v1320
        %3165 = vmatprep.subr.mxu0 %v1313
        %3166 = vmatpush2.xpose.msra.mxu0 %v1312
        %3167 = vmatprep.subr.mxu0 %v1305
        %3168 = vmatpush2.xpose.msra.mxu0 %v1304
        %3169 = vmatprep.subr.mxu0 %v1297
        %3170 = vmatpush2.xpose.msra.mxu0 %v1296
        %3171 = vmatprep.subr.mxu0 %v1289
        %3172 = vmatpush2.xpose.msra.mxu0 %v1288
        %3173 = vmatprep.subr.mxu0 %v1281
        %3174 = vmatpush2.xpose.msra.mxu0 %v1280
        %3175 = vmatprep.subr.mxu0 %v1273
        %3176 = vmatpush2.xpose.msra.mxu0 %v1272
        %3177 = vmatprep.subr.mxu0 %v1265
        %3178 = vmatpush2.xpose.msra.mxu0 %v1264
        %3179 = vmatprep.subr.mxu0 %v1257
        %3180 = vmatpush2.xpose.msra.mxu0 %v1256
        %3181 = vmatprep.subr.mxu0 %v1249
        %3182 = vmatpush2.xpose.msra.mxu0 %v1248
        %3183 = vmatprep.subr.mxu0 %v1241
        %3184 = vmatpush2.xpose.msra.mxu0 %v1240
        %3185 = vmatprep.subr.mxu0 %v1233
        %3186 = vmatpush2.xpose.msra.mxu0 %v1232
        %3187 = vmatprep.subr.mxu0 %v1225
        %3188 = vmatpush2.xpose.msra.mxu0 %v1224
        %3189 = vmatprep.subr.mxu0 %v1217
        %3190 = vmatpush2.xpose.msra.mxu0 %v1216
        %3191 = vmatprep.subr.mxu0 %v1209
        %3192 = vmatpush2.xpose.msra.mxu0 %v1208
        %3193 = vmatprep.mubr.f32.mxu0 %v569
        %3194 = vmatmul.mubr.f32.gmra.mxu0 %v568
        %v3195 = vpop.f32.mrf.mxu0
        %v3196 = vadd.f32 %v2939, %v3195
        %v3197 = vpop.f32.mrf.mxu0
        %v3198 = vadd.f32 %v2941, %v3197
        %3199 = vmatprep.mubr.f32.mxu0 %v577
        %3200 = vmatmul.mubr.f32.gmra.mxu0 %v576
        %v3201 = vpop.f32.mrf.mxu0
        %v3202 = vadd.f32 %v2945, %v3201
        %v3203 = vpop.f32.mrf.mxu0
        %v3204 = vadd.f32 %v2947, %v3203
        %3205 = vmatprep.mubr.f32.mxu0 %v585
        %3206 = vmatmul.mubr.f32.gmra.mxu0 %v584
        %v3207 = vpop.f32.mrf.mxu0
        %v3208 = vadd.f32 %v2951, %v3207
        %v3209 = vpop.f32.mrf.mxu0
        %v3210 = vadd.f32 %v2953, %v3209
        %3211 = vmatprep.mubr.f32.mxu0 %v593
        %3212 = vmatmul.mubr.f32.gmra.mxu0 %v592
        %v3213 = vpop.f32.mrf.mxu0
        %v3214 = vadd.f32 %v2957, %v3213
        %v3215 = vpop.f32.mrf.mxu0
        %v3216 = vadd.f32 %v2959, %v3215
        %3217 = vmatprep.mubr.f32.mxu0 %v601
        %3218 = vmatmul.mubr.f32.gmra.mxu0 %v600
        %v3219 = vpop.f32.mrf.mxu0
        %v3220 = vadd.f32 %v2963, %v3219
        %v3221 = vpop.f32.mrf.mxu0
        %v3222 = vadd.f32 %v2965, %v3221
        %3223 = vmatprep.mubr.f32.mxu0 %v609
        %3224 = vmatmul.mubr.f32.gmra.mxu0 %v608
        %v3225 = vpop.f32.mrf.mxu0
        %v3226 = vadd.f32 %v2969, %v3225
        %v3227 = vpop.f32.mrf.mxu0
        %v3228 = vadd.f32 %v2971, %v3227
        %3229 = vmatprep.mubr.f32.mxu0 %v617
        %3230 = vmatmul.mubr.f32.gmra.mxu0 %v616
        %v3231 = vpop.f32.mrf.mxu0
        %v3232 = vadd.f32 %v2975, %v3231
        %v3233 = vpop.f32.mrf.mxu0
        %v3234 = vadd.f32 %v2977, %v3233
        %3235 = vmatprep.mubr.f32.mxu0 %v625
        %3236 = vmatmul.mubr.f32.gmra.mxu0 %v624
        %v3237 = vpop.f32.mrf.mxu0
        %v3238 = vadd.f32 %v2981, %v3237
        %v3239 = vpop.f32.mrf.mxu0
        %v3240 = vadd.f32 %v2983, %v3239
        %3241 = vmatprep.mubr.f32.mxu0 %v633
        %3242 = vmatmul.mubr.f32.gmra.mxu0 %v632
        %v3243 = vpop.f32.mrf.mxu0
        %v3244 = vadd.f32 %v2987, %v3243
        %v3245 = vpop.f32.mrf.mxu0
        %v3246 = vadd.f32 %v2989, %v3245
        %3247 = vmatprep.mubr.f32.mxu0 %v641
        %3248 = vmatmul.mubr.f32.gmra.mxu0 %v640
        %v3249 = vpop.f32.mrf.mxu0
        %v3250 = vadd.f32 %v2993, %v3249
        %v3251 = vpop.f32.mrf.mxu0
        %v3252 = vadd.f32 %v2995, %v3251
        %3253 = vmatprep.mubr.f32.mxu0 %v649
        %3254 = vmatmul.mubr.f32.gmra.mxu0 %v648
        %v3255 = vpop.f32.mrf.mxu0
        %v3256 = vadd.f32 %v2999, %v3255
        %v3257 = vpop.f32.mrf.mxu0
        %v3258 = vadd.f32 %v3001, %v3257
        %3259 = vmatprep.mubr.f32.mxu0 %v657
        %3260 = vmatmul.mubr.f32.gmra.mxu0 %v656
        %v3261 = vpop.f32.mrf.mxu0
        %v3262 = vadd.f32 %v3005, %v3261
        %v3263 = vpop.f32.mrf.mxu0
        %v3264 = vadd.f32 %v3007, %v3263
        %3265 = vmatprep.mubr.f32.mxu0 %v665
        %3266 = vmatmul.mubr.f32.gmra.mxu0 %v664
        %v3267 = vpop.f32.mrf.mxu0
        %v3268 = vadd.f32 %v3011, %v3267
        %v3269 = vpop.f32.mrf.mxu0
        %v3270 = vadd.f32 %v3013, %v3269
        %3271 = vmatprep.mubr.f32.mxu0 %v673
        %3272 = vmatmul.mubr.f32.gmra.mxu0 %v672
        %v3273 = vpop.f32.mrf.mxu0
        %v3274 = vadd.f32 %v3017, %v3273
        %v3275 = vpop.f32.mrf.mxu0
        %v3276 = vadd.f32 %v3019, %v3275
        %3277 = vmatprep.mubr.f32.mxu0 %v681
        %3278 = vmatmul.mubr.f32.gmra.mxu0 %v680
        %v3279 = vpop.f32.mrf.mxu0
        %v3280 = vadd.f32 %v3023, %v3279
        %v3281 = vpop.f32.mrf.mxu0
        %v3282 = vadd.f32 %v3025, %v3281
        %3283 = vmatprep.mubr.f32.mxu0 %v689
        %3284 = vmatmul.mubr.f32.gmra.mxu0 %v688
        %v3285 = vpop.f32.mrf.mxu0
        %v3286 = vadd.f32 %v3029, %v3285
        %v3287 = vpop.f32.mrf.mxu0
        %v3288 = vadd.f32 %v3031, %v3287
        %3289 = vmatprep.mubr.f32.mxu0 %v697
        %3290 = vmatmul.mubr.f32.gmra.mxu0 %v696
        %v3291 = vpop.f32.mrf.mxu0
        %v3292 = vadd.f32 %v3035, %v3291
        %v3293 = vpop.f32.mrf.mxu0
        %v3294 = vadd.f32 %v3037, %v3293
        %3295 = vmatprep.mubr.f32.mxu0 %v705
        %3296 = vmatmul.mubr.f32.gmra.mxu0 %v704
        %v3297 = vpop.f32.mrf.mxu0
        %v3298 = vadd.f32 %v3041, %v3297
        %v3299 = vpop.f32.mrf.mxu0
        %v3300 = vadd.f32 %v3043, %v3299
        %3301 = vmatprep.mubr.f32.mxu0 %v713
        %3302 = vmatmul.mubr.f32.gmra.mxu0 %v712
        %v3303 = vpop.f32.mrf.mxu0
        %v3304 = vadd.f32 %v3047, %v3303
        %v3305 = vpop.f32.mrf.mxu0
        %v3306 = vadd.f32 %v3049, %v3305
        %3307 = vmatprep.mubr.f32.mxu0 %v721
        %3308 = vmatmul.mubr.f32.gmra.mxu0 %v720
        %v3309 = vpop.f32.mrf.mxu0
        %v3310 = vadd.f32 %v3053, %v3309
        %v3311 = vpop.f32.mrf.mxu0
        %v3312 = vadd.f32 %v3055, %v3311
        %3313 = vmatprep.mubr.f32.mxu0 %v729
        %3314 = vmatmul.mubr.f32.gmra.mxu0 %v728
        %v3315 = vpop.f32.mrf.mxu0
        %v3316 = vadd.f32 %v3059, %v3315
        %v3317 = vpop.f32.mrf.mxu0
        %v3318 = vadd.f32 %v3061, %v3317
        %3319 = vmatprep.mubr.f32.mxu0 %v737
        %3320 = vmatmul.mubr.f32.gmra.mxu0 %v736
        %v3321 = vpop.f32.mrf.mxu0
        %v3322 = vadd.f32 %v3065, %v3321
        %v3323 = vpop.f32.mrf.mxu0
        %v3324 = vadd.f32 %v3067, %v3323
        %3325 = vmatprep.mubr.f32.mxu0 %v745
        %3326 = vmatmul.mubr.f32.gmra.mxu0 %v744
        %v3327 = vpop.f32.mrf.mxu0
        %v3328 = vadd.f32 %v3071, %v3327
        %v3329 = vpop.f32.mrf.mxu0
        %v3330 = vadd.f32 %v3073, %v3329
        %3331 = vmatprep.mubr.f32.mxu0 %v753
        %3332 = vmatmul.mubr.f32.gmra.mxu0 %v752
        %v3333 = vpop.f32.mrf.mxu0
        %v3334 = vadd.f32 %v3077, %v3333
        %v3335 = vpop.f32.mrf.mxu0
        %v3336 = vadd.f32 %v3079, %v3335
        %3337 = vmatprep.mubr.f32.mxu0 %v761
        %3338 = vmatmul.mubr.f32.gmra.mxu0 %v760
        %v3339 = vpop.f32.mrf.mxu0
        %v3340 = vadd.f32 %v3083, %v3339
        %v3341 = vpop.f32.mrf.mxu0
        %v3342 = vadd.f32 %v3085, %v3341
        %3343 = vmatprep.mubr.f32.mxu0 %v769
        %3344 = vmatmul.mubr.f32.gmra.mxu0 %v768
        %v3345 = vpop.f32.mrf.mxu0
        %v3346 = vadd.f32 %v3089, %v3345
        %v3347 = vpop.f32.mrf.mxu0
        %v3348 = vadd.f32 %v3091, %v3347
        %3349 = vmatprep.mubr.f32.mxu0 %v777
        %3350 = vmatmul.mubr.f32.gmra.mxu0 %v776
        %v3351 = vpop.f32.mrf.mxu0
        %v3352 = vadd.f32 %v3095, %v3351
        %v3353 = vpop.f32.mrf.mxu0
        %v3354 = vadd.f32 %v3097, %v3353
        %3355 = vmatprep.mubr.f32.mxu0 %v785
        %3356 = vmatmul.mubr.f32.gmra.mxu0 %v784
        %v3357 = vpop.f32.mrf.mxu0
        %v3358 = vadd.f32 %v3101, %v3357
        %v3359 = vpop.f32.mrf.mxu0
        %v3360 = vadd.f32 %v3103, %v3359
        %3361 = vmatprep.mubr.f32.mxu0 %v793
        %3362 = vmatmul.mubr.f32.gmra.mxu0 %v792
        %v3363 = vpop.f32.mrf.mxu0
        %v3364 = vadd.f32 %v3107, %v3363
        %v3365 = vpop.f32.mrf.mxu0
        %v3366 = vadd.f32 %v3109, %v3365
        %3367 = vmatprep.mubr.f32.mxu0 %v801
        %3368 = vmatmul.mubr.f32.gmra.mxu0 %v800
        %v3369 = vpop.f32.mrf.mxu0
        %v3370 = vadd.f32 %v3113, %v3369
        %v3371 = vpop.f32.mrf.mxu0
        %v3372 = vadd.f32 %v3115, %v3371
        %3373 = vmatprep.mubr.f32.mxu0 %v809
        %3374 = vmatmul.mubr.f32.gmra.mxu0 %v808
        %v3375 = vpop.f32.mrf.mxu0
        %v3376 = vadd.f32 %v3119, %v3375
        %v3377 = vpop.f32.mrf.mxu0
        %v3378 = vadd.f32 %v3121, %v3377
        %3379 = vmatprep.mubr.f32.mxu0 %v817
        %3380 = vmatmul.mubr.f32.gmra.mxu0 %v816
        %v3381 = vpop.f32.mrf.mxu0
        %v3382 = vadd.f32 %v3125, %v3381
        %v3383 = vpop.f32.mrf.mxu0
        %v3384 = vadd.f32 %v3127, %v3383
        %3385 = vdwg.mxu0
        %v3386 = vadd.f32 %v434, %v2168
        %v3387 = vadd.f32 %v435, %v2170
        %v3388 = vadd.f32 %v436, %v3196
        %v3389 = vadd.f32 %v437, %v3198
        %v3390 = vadd.f32 %v438, %v2174
        %v3391 = vadd.f32 %v439, %v2176
        %v3392 = vadd.f32 %v440, %v3202
        %v3393 = vadd.f32 %v441, %v3204
        %v3394 = vadd.f32 %v442, %v2180
        %v3395 = vadd.f32 %v443, %v2182
        %v3396 = vadd.f32 %v444, %v3208
        %v3397 = vadd.f32 %v445, %v3210
        %v3398 = vadd.f32 %v446, %v2186
        %v3399 = vadd.f32 %v447, %v2188
        %v3400 = vadd.f32 %v448, %v3214
        %v3401 = vadd.f32 %v449, %v3216
        %v3402 = vadd.f32 %v450, %v2192
        %v3403 = vadd.f32 %v451, %v2194
        %v3404 = vadd.f32 %v452, %v3220
        %v3405 = vadd.f32 %v453, %v3222
        %v3406 = vadd.f32 %v454, %v2198
        %v3407 = vadd.f32 %v455, %v2200
        %v3408 = vadd.f32 %v456, %v3226
        %v3409 = vadd.f32 %v457, %v3228
        %v3410 = vadd.f32 %v458, %v2204
        %v3411 = vadd.f32 %v459, %v2206
        %v3412 = vadd.f32 %v460, %v3232
        %v3413 = vadd.f32 %v461, %v3234
        %v3414 = vadd.f32 %v462, %v2210
        %v3415 = vadd.f32 %v463, %v2212
        %v3416 = vadd.f32 %v464, %v3238
        %v3417 = vadd.f32 %v465, %v3240
        %v3418 = vadd.f32 %v466, %v2216
        %v3419 = vadd.f32 %v467, %v2218
        %v3420 = vadd.f32 %v468, %v3244
        %v3421 = vadd.f32 %v469, %v3246
        %v3422 = vadd.f32 %v470, %v2222
        %v3423 = vadd.f32 %v471, %v2224
        %v3424 = vadd.f32 %v472, %v3250
        %v3425 = vadd.f32 %v473, %v3252
        %v3426 = vadd.f32 %v474, %v2228
        %v3427 = vadd.f32 %v475, %v2230
        %v3428 = vadd.f32 %v476, %v3256
        %v3429 = vadd.f32 %v477, %v3258
        %v3430 = vadd.f32 %v478, %v2234
        %v3431 = vadd.f32 %v479, %v2236
        %v3432 = vadd.f32 %v480, %v3262
        %v3433 = vadd.f32 %v481, %v3264
        %v3434 = vadd.f32 %v482, %v2240
        %v3435 = vadd.f32 %v483, %v2242
        %v3436 = vadd.f32 %v484, %v3268
        %v3437 = vadd.f32 %v485, %v3270
        %v3438 = vadd.f32 %v486, %v2246
        %v3439 = vadd.f32 %v487, %v2248
        %v3440 = vadd.f32 %v488, %v3274
        %v3441 = vadd.f32 %v489, %v3276
        %v3442 = vadd.f32 %v490, %v2252
        %v3443 = vadd.f32 %v491, %v2254
        %v3444 = vadd.f32 %v492, %v3280
        %v3445 = vadd.f32 %v493, %v3282
        %v3446 = vadd.f32 %v494, %v2258
        %v3447 = vadd.f32 %v495, %v2260
        %v3448 = vadd.f32 %v496, %v3286
        %v3449 = vadd.f32 %v497, %v3288
        %v3450 = vadd.f32 %v498, %v2264
        %v3451 = vadd.f32 %v499, %v2266
        %v3452 = vadd.f32 %v500, %v3292
        %v3453 = vadd.f32 %v501, %v3294
        %v3454 = vadd.f32 %v502, %v2270
        %v3455 = vadd.f32 %v503, %v2272
        %v3456 = vadd.f32 %v504, %v3298
        %v3457 = vadd.f32 %v505, %v3300
        %v3458 = vadd.f32 %v506, %v2276
        %v3459 = vadd.f32 %v507, %v2278
        %v3460 = vadd.f32 %v508, %v3304
        %v3461 = vadd.f32 %v509, %v3306
        %v3462 = vadd.f32 %v510, %v2282
        %v3463 = vadd.f32 %v511, %v2284
        %v3464 = vadd.f32 %v512, %v3310
        %v3465 = vadd.f32 %v513, %v3312
        %v3466 = vadd.f32 %v514, %v2288
        %v3467 = vadd.f32 %v515, %v2290
        %v3468 = vadd.f32 %v516, %v3316
        %v3469 = vadd.f32 %v517, %v3318
        %v3470 = vadd.f32 %v518, %v2294
        %v3471 = vadd.f32 %v519, %v2296
        %v3472 = vadd.f32 %v520, %v3322
        %v3473 = vadd.f32 %v521, %v3324
        %v3474 = vadd.f32 %v522, %v2300
        %v3475 = vadd.f32 %v523, %v2302
        %v3476 = vadd.f32 %v524, %v3328
        %v3477 = vadd.f32 %v525, %v3330
        %v3478 = vadd.f32 %v526, %v2306
        %v3479 = vadd.f32 %v527, %v2308
        %v3480 = vadd.f32 %v528, %v3334
        %v3481 = vadd.f32 %v529, %v3336
        %v3482 = vadd.f32 %v530, %v2312
        %v3483 = vadd.f32 %v531, %v2314
        %v3484 = vadd.f32 %v532, %v3340
        %v3485 = vadd.f32 %v533, %v3342
        %v3486 = vadd.f32 %v534, %v2318
        %v3487 = vadd.f32 %v535, %v2320
        %v3488 = vadd.f32 %v536, %v3346
        %v3489 = vadd.f32 %v537, %v3348
        %v3490 = vadd.f32 %v538, %v2324
        %v3491 = vadd.f32 %v539, %v2326
        %v3492 = vadd.f32 %v540, %v3352
        %v3493 = vadd.f32 %v541, %v3354
        %v3494 = vadd.f32 %v542, %v2330
        %v3495 = vadd.f32 %v543, %v2332
        %v3496 = vadd.f32 %v544, %v3358
        %v3497 = vadd.f32 %v545, %v3360
        %v3498 = vadd.f32 %v546, %v2336
        %v3499 = vadd.f32 %v547, %v2338
        %v3500 = vadd.f32 %v548, %v3364
        %v3501 = vadd.f32 %v549, %v3366
        %v3502 = vadd.f32 %v550, %v2342
        %v3503 = vadd.f32 %v551, %v2344
        %v3504 = vadd.f32 %v552, %v3370
        %v3505 = vadd.f32 %v553, %v3372
        %v3506 = vadd.f32 %v554, %v2348
        %v3507 = vadd.f32 %v555, %v2350
        %v3508 = vadd.f32 %v556, %v3376
        %v3509 = vadd.f32 %v557, %v3378
        %v3510 = vadd.f32 %v558, %v2354
        %v3511 = vadd.f32 %v559, %v2356
        %v3512 = vadd.f32 %v560, %v3382
        %v3513 = vadd.f32 %v561, %v3384
        %3514 = vst [vmem:[#allocation8] sm:$0xff] %v3386
        %3515 = vst [vmem:[#allocation8 + $0x8] sm:$0xff] %v3387
        %3516 = vst [vmem:[#allocation8 + $0x10] sm:$0xff] %v3388
        %3517 = vst [vmem:[#allocation8 + $0x18] sm:$0xff] %v3389
        %3518 = vst [vmem:[#allocation8 + $0x20] sm:$0xff] %v3390
        %3519 = vst [vmem:[#allocation8 + $0x28] sm:$0xff] %v3391
        %3520 = vst [vmem:[#allocation8 + $0x30] sm:$0xff] %v3392
        %3521 = vst [vmem:[#allocation8 + $0x38] sm:$0xff] %v3393
        %3522 = vst [vmem:[#allocation8 + $0x40] sm:$0xff] %v3394
        %3523 = vst [vmem:[#allocation8 + $0x48] sm:$0xff] %v3395
        %3524 = vst [vmem:[#allocation8 + $0x50] sm:$0xff] %v3396
        %3525 = vst [vmem:[#allocation8 + $0x58] sm:$0xff] %v3397
        %3526 = vst [vmem:[#allocation8 + $0x60] sm:$0xff] %v3398
        %3527 = vst [vmem:[#allocation8 + $0x68] sm:$0xff] %v3399
        %3528 = vst [vmem:[#allocation8 + $0x70] sm:$0xff] %v3400
        %3529 = vst [vmem:[#allocation8 + $0x78] sm:$0xff] %v3401
        %3530 = vst [vmem:[#allocation8 + $0x80] sm:$0xff] %v3402
        %3531 = vst [vmem:[#allocation8 + $0x88] sm:$0xff] %v3403
        %3532 = vst [vmem:[#allocation8 + $0x90] sm:$0xff] %v3404
        %3533 = vst [vmem:[#allocation8 + $0x98] sm:$0xff] %v3405
        %3534 = vst [vmem:[#allocation8 + $0xa0] sm:$0xff] %v3406
        %3535 = vst [vmem:[#allocation8 + $0xa8] sm:$0xff] %v3407
        %3536 = vst [vmem:[#allocation8 + $0xb0] sm:$0xff] %v3408
        %3537 = vst [vmem:[#allocation8 + $0xb8] sm:$0xff] %v3409
        %3538 = vst [vmem:[#allocation8 + $0xc0] sm:$0xff] %v3410
        %3539 = vst [vmem:[#allocation8 + $0xc8] sm:$0xff] %v3411
        %3540 = vst [vmem:[#allocation8 + $0xd0] sm:$0xff] %v3412
        %3541 = vst [vmem:[#allocation8 + $0xd8] sm:$0xff] %v3413
        %3542 = vst [vmem:[#allocation8 + $0xe0] sm:$0xff] %v3414
        %3543 = vst [vmem:[#allocation8 + $0xe8] sm:$0xff] %v3415
        %3544 = vst [vmem:[#allocation8 + $0xf0] sm:$0xff] %v3416
        %3545 = vst [vmem:[#allocation8 + $0xf8] sm:$0xff] %v3417
        %3546 = vst [vmem:[#allocation8 + $0x100] sm:$0xff] %v3418
        %3547 = vst [vmem:[#allocation8 + $0x108] sm:$0xff] %v3419
        %3548 = vst [vmem:[#allocation8 + $0x110] sm:$0xff] %v3420
        %3549 = vst [vmem:[#allocation8 + $0x118] sm:$0xff] %v3421
        %3550 = vst [vmem:[#allocation8 + $0x120] sm:$0xff] %v3422
        %3551 = vst [vmem:[#allocation8 + $0x128] sm:$0xff] %v3423
        %3552 = vst [vmem:[#allocation8 + $0x130] sm:$0xff] %v3424
        %3553 = vst [vmem:[#allocation8 + $0x138] sm:$0xff] %v3425
        %3554 = vst [vmem:[#allocation8 + $0x140] sm:$0xff] %v3426
        %3555 = vst [vmem:[#allocation8 + $0x148] sm:$0xff] %v3427
        %3556 = vst [vmem:[#allocation8 + $0x150] sm:$0xff] %v3428
        %3557 = vst [vmem:[#allocation8 + $0x158] sm:$0xff] %v3429
        %3558 = vst [vmem:[#allocation8 + $0x160] sm:$0xff] %v3430
        %3559 = vst [vmem:[#allocation8 + $0x168] sm:$0xff] %v3431
        %3560 = vst [vmem:[#allocation8 + $0x170] sm:$0xff] %v3432
        %3561 = vst [vmem:[#allocation8 + $0x178] sm:$0xff] %v3433
        %3562 = vst [vmem:[#allocation8 + $0x180] sm:$0xff] %v3434
        %3563 = vst [vmem:[#allocation8 + $0x188] sm:$0xff] %v3435
        %3564 = vst [vmem:[#allocation8 + $0x190] sm:$0xff] %v3436
        %3565 = vst [vmem:[#allocation8 + $0x198] sm:$0xff] %v3437
        %3566 = vst [vmem:[#allocation8 + $0x1a0] sm:$0xff] %v3438
        %3567 = vst [vmem:[#allocation8 + $0x1a8] sm:$0xff] %v3439
        %3568 = vst [vmem:[#allocation8 + $0x1b0] sm:$0xff] %v3440
        %3569 = vst [vmem:[#allocation8 + $0x1b8] sm:$0xff] %v3441
        %3570 = vst [vmem:[#allocation8 + $0x1c0] sm:$0xff] %v3442
        %3571 = vst [vmem:[#allocation8 + $0x1c8] sm:$0xff] %v3443
        %3572 = vst [vmem:[#allocation8 + $0x1d0] sm:$0xff] %v3444
        %3573 = vst [vmem:[#allocation8 + $0x1d8] sm:$0xff] %v3445
        %3574 = vst [vmem:[#allocation8 + $0x1e0] sm:$0xff] %v3446
        %3575 = vst [vmem:[#allocation8 + $0x1e8] sm:$0xff] %v3447
        %3576 = vst [vmem:[#allocation8 + $0x1f0] sm:$0xff] %v3448
        %3577 = vst [vmem:[#allocation8 + $0x1f8] sm:$0xff] %v3449
        %3578 = vst [vmem:[#allocation8 + $0x200] sm:$0xff] %v3450
        %3579 = vst [vmem:[#allocation8 + $0x208] sm:$0xff] %v3451
        %3580 = vst [vmem:[#allocation8 + $0x210] sm:$0xff] %v3452
        %3581 = vst [vmem:[#allocation8 + $0x218] sm:$0xff] %v3453
        %3582 = vst [vmem:[#allocation8 + $0x220] sm:$0xff] %v3454
        %3583 = vst [vmem:[#allocation8 + $0x228] sm:$0xff] %v3455
        %3584 = vst [vmem:[#allocation8 + $0x230] sm:$0xff] %v3456
        %3585 = vst [vmem:[#allocation8 + $0x238] sm:$0xff] %v3457
        %3586 = vst [vmem:[#allocation8 + $0x240] sm:$0xff] %v3458
        %3587 = vst [vmem:[#allocation8 + $0x248] sm:$0xff] %v3459
        %3588 = vst [vmem:[#allocation8 + $0x250] sm:$0xff] %v3460
        %3589 = vst [vmem:[#allocation8 + $0x258] sm:$0xff] %v3461
        %3590 = vst [vmem:[#allocation8 + $0x260] sm:$0xff] %v3462
        %3591 = vst [vmem:[#allocation8 + $0x268] sm:$0xff] %v3463
        %3592 = vst [vmem:[#allocation8 + $0x270] sm:$0xff] %v3464
        %3593 = vst [vmem:[#allocation8 + $0x278] sm:$0xff] %v3465
        %3594 = vst [vmem:[#allocation8 + $0x280] sm:$0xff] %v3466
        %3595 = vst [vmem:[#allocation8 + $0x288] sm:$0xff] %v3467
        %3596 = vst [vmem:[#allocation8 + $0x290] sm:$0xff] %v3468
        %3597 = vst [vmem:[#allocation8 + $0x298] sm:$0xff] %v3469
        %3598 = vst [vmem:[#allocation8 + $0x2a0] sm:$0xff] %v3470
        %3599 = vst [vmem:[#allocation8 + $0x2a8] sm:$0xff] %v3471
        %3600 = vst [vmem:[#allocation8 + $0x2b0] sm:$0xff] %v3472
        %3601 = vst [vmem:[#allocation8 + $0x2b8] sm:$0xff] %v3473
        %3602 = vst [vmem:[#allocation8 + $0x2c0] sm:$0xff] %v3474
        %3603 = vst [vmem:[#allocation8 + $0x2c8] sm:$0xff] %v3475
        %3604 = vst [vmem:[#allocation8 + $0x2d0] sm:$0xff] %v3476
        %3605 = vst [vmem:[#allocation8 + $0x2d8] sm:$0xff] %v3477
        %3606 = vst [vmem:[#allocation8 + $0x2e0] sm:$0xff] %v3478
        %3607 = vst [vmem:[#allocation8 + $0x2e8] sm:$0xff] %v3479
        %3608 = vst [vmem:[#allocation8 + $0x2f0] sm:$0xff] %v3480
        %3609 = vst [vmem:[#allocation8 + $0x2f8] sm:$0xff] %v3481
        %3610 = vst [vmem:[#allocation8 + $0x300] sm:$0xff] %v3482
        %3611 = vst [vmem:[#allocation8 + $0x308] sm:$0xff] %v3483
        %3612 = vst [vmem:[#allocation8 + $0x310] sm:$0xff] %v3484
        %3613 = vst [vmem:[#allocation8 + $0x318] sm:$0xff] %v3485
        %3614 = vst [vmem:[#allocation8 + $0x320] sm:$0xff] %v3486
        %3615 = vst [vmem:[#allocation8 + $0x328] sm:$0xff] %v3487
        %3616 = vst [vmem:[#allocation8 + $0x330] sm:$0xff] %v3488
        %3617 = vst [vmem:[#allocation8 + $0x338] sm:$0xff] %v3489
        %3618 = vst [vmem:[#allocation8 + $0x340] sm:$0xff] %v3490
        %3619 = vst [vmem:[#allocation8 + $0x348] sm:$0xff] %v3491
        %3620 = vst [vmem:[#allocation8 + $0x350] sm:$0xff] %v3492
        %3621 = vst [vmem:[#allocation8 + $0x358] sm:$0xff] %v3493
        %3622 = vst [vmem:[#allocation8 + $0x360] sm:$0xff] %v3494
        %3623 = vst [vmem:[#allocation8 + $0x368] sm:$0xff] %v3495
        %3624 = vst [vmem:[#allocation8 + $0x370] sm:$0xff] %v3496
        %3625 = vst [vmem:[#allocation8 + $0x378] sm:$0xff] %v3497
        %3626 = vst [vmem:[#allocation8 + $0x380] sm:$0xff] %v3498
        %3627 = vst [vmem:[#allocation8 + $0x388] sm:$0xff] %v3499
        %3628 = vst [vmem:[#allocation8 + $0x390] sm:$0xff] %v3500
        %3629 = vst [vmem:[#allocation8 + $0x398] sm:$0xff] %v3501
        %3630 = vst [vmem:[#allocation8 + $0x3a0] sm:$0xff] %v3502
        %3631 = vst [vmem:[#allocation8 + $0x3a8] sm:$0xff] %v3503
        %3632 = vst [vmem:[#allocation8 + $0x3b0] sm:$0xff] %v3504
        %3633 = vst [vmem:[#allocation8 + $0x3b8] sm:$0xff] %v3505
        %3634 = vst [vmem:[#allocation8 + $0x3c0] sm:$0xff] %v3506
        %3635 = vst [vmem:[#allocation8 + $0x3c8] sm:$0xff] %v3507
        %3636 = vst [vmem:[#allocation8 + $0x3d0] sm:$0xff] %v3508
        %3637 = vst [vmem:[#allocation8 + $0x3d8] sm:$0xff] %v3509
        %3638 = vst [vmem:[#allocation8 + $0x3e0] sm:$0xff] %v3510
        %3639 = vst [vmem:[#allocation8 + $0x3e8] sm:$0xff] %v3511
        %3640 = vst [vmem:[#allocation8 + $0x3f0] sm:$0xff] %v3512
        %3641 = vst [vmem:[#allocation8 + $0x3f8] sm:$0xff] %v3513
        // Predicated region
        $region49: #{tpu_custom_call.1} parent=31 // pred_check
          %p3642 = pneg %p142
        $region50: #{tpu_custom_call.1} parent=31 // pred_check_branch
          %3644 = sbr.rel (%p3642) target = $region52
        $region51: #{tpu_custom_call.1} parent=31 // pred_region
          %s3645 = smul.u32 32, %s26
          %s3646 = smul.u32 4, %s27
          %s3648 = ssub.s32 16384, 16384
          %3649 = vsyncadd [#allocation4], %s3648
          %s3650 = smul.addr %s3645, 4
          %s3651 = sadd.s32 %s3646, %s3650
          %s3652 = smul.addr %s3651, 128
          %s3653 = scalar_lea.hbm %s3, %s3652
          %s3654 = sshll.u32 [#allocation8], 4
          %s3655 = int_to_ptr.vmem [resolvable:$true] %s3654
          %3660 = dma.vmem_to_hbm [thread:$0]  %s3655, 16384, %s3653, [#allocation4], 512, 512, 32
        $region52: #{tpu_custom_call.1} parent=31 // pred_fallthru
          _
        // Predicated region
        $region53: #{tpu_custom_call.1} parent=31 // pred_check
          %p3661 = pneg %p142
        $region54: #{tpu_custom_call.1} parent=31 // pred_check_branch
          %3663 = sbr.rel (%p3661) target = $region56
        $region55: #{tpu_custom_call.1} parent=31 // pred_region
          %3664 = dma.done [#allocation4], 16384
        $region56: #{tpu_custom_call.1} parent=31 // pred_fallthru
          _
      $region32: #{tpu_custom_call.1} parent=5 // pred_fallthru
        _
      %p3665 = scmp.le.s32.totalorder 2, %s16
      // Predicated region
      $region57: #{tpu_custom_call.1} parent=5 // pred_check
        %p3666 = pneg %p3665
      $region58: #{tpu_custom_call.1} parent=5 // pred_check_branch
        %3668 = sbr.rel (%p3666) target = $region60
      $region59: #{tpu_custom_call.1} parent=5 // pred_region
        %s3669 = ssub.s32 %s16, 2
      $region60: #{tpu_custom_call.1} parent=5 // pred_fallthru
        _
    $region6: #{tpu_custom_call.1} parent=1 // loop_footer
      %s20 = sadd.s32 1, %s16
    $region7: #{tpu_custom_call.1} parent=1 // loop_footer_branch
      %15 = sbr.rel target = $region3
    $region8: #{tpu_custom_call.1} parent=1 // loop_exit
      _
    %3670 = vsyncpa [#allocation3], 1
    %s3671 = scalar_lea.sflag [#allocation3], 1
    %3672 = vsyncpa %s3671, 1
    %3673 = vsyncpa [#allocation6], 1
    %s3674 = scalar_lea.sflag [#allocation6], 1
    %3675 = vsyncpa %s3674, 1
    %3676 = vsyncpa [#allocation4], 1
    %s3677 = scalar_lea.sflag [#allocation4], 1
    %3678 = vsyncpa %s3677, 1

</llo_original>
